<compile_context>
chip_gen: v7x
topology: tpu7x:2x2x1
jax: 0.10.0
libtpu: 0.0.40
codegen_flags: <defaults>
</compile_context>

<pallas_src>
import functools

import jax
import jax.numpy as jnp
import numpy as np
from jax.experimental import pallas as pl
from jax.experimental.pallas import tpu as pltpu

_CLIP_MIN = 1e-6
_POS_ALPHA = 1e-3


# ----------------------------- helpers ---------------------------------------

def _round_up(x, m):
    return ((x + m - 1) // m) * m


def _pick_tile(n, cap, align):
    """Largest tile <= ~cap (multiple of `align`) that keeps padding small."""
    n_al = _round_up(n, align)
    if n_al <= cap:
        return n_al
    chunks = -(-n // cap)                      # ceil
    return _round_up(-(-n // chunks), align)


def _fused_lane_tile(hw, c_total):
    """Pixel (lane) tile for the fused kernel: big enough to amortize the
    ~0.35us/step grid overhead, small enough that the ~dozen live [C, LT] f32
    intermediates plus the double-buffered bf16 logit block stay well inside
    v7x's 64 MiB VMEM (also fine for v5e/v6e)."""
    cap = max(512, min(8192, ((16 << 20) // max(48 * c_total, 1)) // 128 * 128))
    lt = _pick_tile(hw, cap, 128)
    return lt, _round_up(hw, lt)


def _comb_offsets(n_mid, n_high):
    """Row offsets of the combined-map rows inside the VMEM scratch."""
    o_mcmb = 0
    o_mcmc = _round_up(max(n_mid, 1), 8)
    o_mclb = o_mcmc + _round_up(max(n_high, 1), 8)
    rows = o_mclb + _round_up(max(n_mid, 1), 8)
    return o_mcmb, o_mcmc, o_mclb, rows


# --------------------- fused hierarchy + BCE + CE kernel ----------------------

def _fused_hiera_kernel(logit_ref, lab_ref, out_ref, acc_ref, comb_ref, *,
                        n_fine, n_mid, n_high, fines_in_mid, mids_in_high,
                        highs_in_mid, ignore_index):
    """One pass over the logits: sigmoid, hierarchical combines, 3 BCE levels,
    3 softmax-CE levels.  Classes live on sublanes, pixels on lanes.

    grid = (batch, pixel_tiles); per-batch partial sums are written on the last
    pixel tile so the batch axis can be megacore-parallel.
    Accumulator rows: 0/1/2 = BCE fine/mid/high, 3/4/5 = CE fine/mid/high,
    6 = number of valid pixels, 7 = unused.
    """
    p = pl.program_id(1)

    @pl.when(p == 0)
    def _():
        acc_ref[...] = jnp.zeros_like(acc_ref)

    lt = logit_ref.shape[-1]

    # Per-level logits (bf16 stream, upcast to f32 in-kernel) and sigmoids.
    x_f = logit_ref[0, pl.ds(0, n_fine)].astype(jnp.float32)          # [nF, LT]
    x_m = logit_ref[0, pl.ds(n_fine, n_mid)].astype(jnp.float32)      # [nM, LT]
    x_h = logit_ref[0, pl.ds(n_fine + n_mid, n_high)].astype(jnp.float32)
    mcma = 1.0 / (1.0 + jnp.exp(-x_f))
    mcmb = 1.0 / (1.0 + jnp.exp(-x_m))
    mcmc = 1.0 / (1.0 + jnp.exp(-x_h))

    lab_f = lab_ref[0, pl.ds(0, 1)]                                    # [1, LT]
    lab_m = lab_ref[0, pl.ds(1, 1)]
    lab_h = lab_ref[0, pl.ds(2, 1)]
    valid = (lab_f != ignore_index).astype(jnp.float32)
    valid_m = (lab_m != ignore_index).astype(jnp.float32)
    valid_h = (lab_h != ignore_index).astype(jnp.float32)

    oh_f = lab_f == jax.lax.broadcasted_iota(jnp.int32, (n_fine, lt), 0)
    oh_m = lab_m == jax.lax.broadcasted_iota(jnp.int32, (n_mid, lt), 0)
    oh_h = lab_h == jax.lax.broadcasted_iota(jnp.int32, (n_high, lt), 0)

    # ---- hierarchical max/min combines: a handful of single-row ops, assembled
    # into VMEM scratch and then read back as vectorized [n_level, LT] blocks.
    o_mcmb, o_mcmc, o_mclb, _ = _comb_offsets(n_mid, n_high)

    mcmb_comb_rows = []
    for m in range(n_mid):                              # MCMB_combined (max up)
        r = mcmb[m:m + 1]
        for f in fines_in_mid[m]:
            r = jnp.maximum(r, mcma[f:f + 1])
        mcmb_comb_rows.append(r)
        comb_ref[pl.ds(o_mcmb + m, 1), :] = r
    for j in range(n_high):                             # MCMC_combined (max up)
        r = mcmc[j:j + 1]
        for m in mids_in_high[j]:
            r = jnp.maximum(r, mcmb_comb_rows[m])
        comb_ref[pl.ds(o_mcmc + j, 1), :] = r
    for m in range(n_mid):                              # MCLB_combined (min down)
        r = mcmb[m:m + 1]                               # MCLB = raw MCMB
        for hc in highs_in_mid[m]:
            r = jnp.minimum(r, mcmc[hc:hc + 1])         # MCLC = raw MCMC
        comb_ref[pl.ds(o_mclb + m, 1), :] = r

    mcmb_comb = comb_ref[pl.ds(o_mcmb, n_mid), :]
    mcmc_comb = comb_ref[pl.ds(o_mcmc, n_high), :]
    mclb_comb = comb_ref[pl.ds(o_mclb, n_mid), :]

    # ---- hierarchical BCE (single-log form; identical to the two-log reference
    # because the one-hot is 0/1).  Fine level: MCLA is only needed at the label
    # class, and MCLA[label] = min(MCMA[label], MCMB[fine_to_mid[label]]).
    pick_a = jnp.sum(jnp.where(oh_f, mcma, 0.0), axis=0, keepdims=True)
    pick_b = jnp.sum(jnp.where(oh_m, mcmb, 0.0), axis=0, keepdims=True)
    pos_f = -jnp.log(jnp.minimum(pick_a, pick_b) + _CLIP_MIN)
    neg_f = jnp.sum(jnp.where(oh_f, 0.0, -jnp.log(1.0 - mcma + _CLIP_MIN)),
                    axis=0, keepdims=True)
    term_f = (pos_f + neg_f) * valid
    term_m = jnp.sum(-jnp.log(jnp.where(oh_m, mclb_comb, 1.0 - mcmb_comb)
                              + _CLIP_MIN), axis=0, keepdims=True) * valid_m
    term_h = jnp.sum(-jnp.log(jnp.where(oh_h, mcmc, 1.0 - mcmc_comb)
                              + _CLIP_MIN), axis=0, keepdims=True) * valid_h

    # ---- per-pixel softmax CE, one per hierarchy level.
    def _ce(xs, oh, vld):
        mx = jnp.max(xs, axis=0, keepdims=True)
        lse = mx + jnp.log(jnp.sum(jnp.exp(xs - mx), axis=0, keepdims=True))
        picked = jnp.sum(jnp.where(oh, xs, 0.0), axis=0, keepdims=True)
        return (lse - picked) * vld

    ce_f = _ce(x_f, oh_f, valid)
    ce_m = _ce(x_m, oh_m, valid_m)
    ce_h = _ce(x_h, oh_h, valid_h)

    def _acc(i, v):
        acc_ref[pl.ds(i, 1), :] = acc_ref[pl.ds(i, 1), :] + v

    _acc(0, term_f)
    _acc(1, term_m)
    _acc(2, term_h)
    _acc(3, ce_f)
    _acc(4, ce_m)
    _acc(5, ce_h)
    _acc(6, valid)      # valid counts are identical for all three levels

    @pl.when(p == pl.num_programs(1) - 1)
    def _():
        sums = jnp.sum(acc_ref[...], axis=1, keepdims=True)   # (8, 1)
        out_ref[0] = jnp.broadcast_to(sums, (8, 128))


# ------------------------------ RMI Gram kernel -------------------------------

def _gram_kernel(x_ref, out_ref):
    """Packed X @ X^T over the tiled spatial axis, accumulated in the resident
    output block (its block index is constant over the K axis)."""
    k = pl.program_id(1)

    @pl.when(k == 0)
    def _():
        out_ref[...] = jnp.zeros_like(out_ref)

    xg = x_ref[0]                                        # [M, TN] bf16
    dn = (((1,), (1,)), ((), ()))                        # contract spatial axis
    out_ref[0] += jax.lax.dot_general(xg, xg, dn,
                                      preferred_element_type=jnp.float32)


def _gram_pallas(x, gtile=8, dpad=32, tn_cap=4096):
    """x: [G, D, N] -> per-group Gram [G, D, D] (= x @ x^T), f32 accumulation.

    gtile groups x dpad padded rows are packed into one (gtile*dpad)=256-row
    matmul per spatial tile (one native MXU tile on v6e/v7x); the per-group
    Grams are the diagonal dpad x dpad blocks of the packed result.
    """
    g, d, n = x.shape
    assert d <= dpad
    m = gtile * dpad
    gpad = _round_up(g, gtile)
    tn = _pick_tile(n, tn_cap, 128)
    npad = _round_up(n, tn)
    n_kt = npad // tn

    xp = jnp.pad(x.astype(jnp.bfloat16),
                 ((0, gpad - g), (0, dpad - d), (0, npad - n)))
    ngb = gpad // gtile
    xp = xp.reshape(ngb, m, npad)                        # contiguous reshape

    in_spec = pl.BlockSpec(
        (1, m, tn), lambda gi, ki: (gi, 0, ki),
        pipeline_mode=pl.Buffered(3) if n_kt >= 3 else None)

    gram_big = pl.pallas_call(
        _gram_kernel,
        out_shape=jax.ShapeDtypeStruct((ngb, m, m), jnp.float32),
        grid=(ngb, n_kt),
        in_specs=[in_spec],
        out_specs=pl.BlockSpec((1, m, m), lambda gi, ki: (gi, 0, 0)),
        compiler_params=pltpu.CompilerParams(
            dimension_semantics=("parallel", "arbitrary"),
            vmem_limit_bytes=48 * 1024 * 1024),
    )(xp)

    big5 = gram_big.reshape(ngb, gtile, dpad, gtile, dpad)
    diag = jnp.diagonal(big5, axis1=1, axis2=3)          # [ngb, dpad, dpad, gtile]
    diag = jnp.moveaxis(diag, -1, 1).reshape(gpad, dpad, dpad)
    return diag[:g, :d, :d]


# ------------------------------- JAX glue --------------------------------------

def _build_pair_stack(labels_4d, probs_4d, radius):
    """[B,C,H,W] x2 -> combined X [B*C, 2*radius^2, nh*nw] (la rows then pr rows).

    TODO(synk): this 3x3 neighborhood stack is still materialized in HBM (9x
    blow-up, halved by bf16); folding the shifts + one-hot into the Gram kernel
    is the remaining structural optimization.
    """
    b, c, h, w = labels_4d.shape
    nh, nw = h - (radius - 1), w - (radius - 1)
    slabs = []
    for y in range(radius):
        for x in range(radius):
            slabs.append(labels_4d[:, :, y:y + nh, x:x + nw])
    for y in range(radius):
        for x in range(radius):
            slabs.append(probs_4d[:, :, y:y + nh, x:x + nw])
    xs = jnp.stack(slabs, axis=2)                        # [B, C, 2*r*r, nh, nw]
    return xs.reshape(b * c, 2 * radius * radius, nh * nw)


def make_rmi_hiera_triplet_loss(n_fine, n_mid, n_high, fine_to_mid, fine_to_high,
                                rmi_radius=3, rmi_pool_size=3, rmi_pool_stride=3,
                                loss_weight_lambda=0.5, loss_weight=1.0,
                                ignore_index=255):
    # rmi_pool_size/stride are asserted (as in the reference) but the reference
    # forward never applies pooling, so none is applied here either.
    assert rmi_pool_size == rmi_pool_stride
    f2m_np = np.asarray(fine_to_mid, np.int64)
    f2h_np = np.asarray(fine_to_high, np.int64)
    f2m = jnp.asarray(f2m_np, jnp.int32)
    f2h = jnp.asarray(f2h_np, jnp.int32)
    half_d = rmi_radius * rmi_radius
    n_total = n_fine + n_mid + n_high

    # Static hierarchy index sets (trace-time; mirrors the reference Python loops).
    fines_in_mid = tuple(tuple(int(f) for f in np.nonzero(f2m_np == m)[0])
                         for m in range(n_mid))
    mids_in_high = tuple(tuple(sorted({int(f2m_np[f])
                                       for f in np.nonzero(f2h_np == j)[0]}))
                         for j in range(n_high))
    highs_in_mid = tuple(tuple(sorted({int(f2h_np[f]) for f in fines_in_mid[m]}))
                         for m in range(n_mid))
    _, _, _, comb_rows = _comb_offsets(n_mid, n_high)

    def forward(step, embedding, cls_score_before, cls_score, label):
        del step, embedding, cls_score_before   # only used by the (omitted) triplet branch
        b, h, w = label.shape
        hw = h * w

        valid = label != ignore_index
        safe = jnp.where(valid, label, 0)
        t_fine = label.astype(jnp.int32)
        t_mid = jnp.where(valid, f2m[safe], ignore_index).astype(jnp.int32)
        t_high = jnp.where(valid, f2h[safe], ignore_index).astype(jnp.int32)

        # ---------------- fused sigmoid + hierarchy + BCE + CE ----------------
        lt, hwpad = _fused_lane_tile(hw, n_total)
        n_pt = hwpad // lt

        # bf16 logit stream (upcast to f32 inside the kernel) halves HBM traffic
        # of the dominant stream; ~3-digit precision loss vs an f32 stream.
        logits = cls_score.astype(jnp.bfloat16).reshape(b, n_total, hw)
        labels3 = jnp.stack([t_fine, t_mid, t_high], axis=1).reshape(b, 3, hw)
        if hwpad != hw:
            logits = jnp.pad(logits, ((0, 0), (0, 0), (0, hwpad - hw)))
            labels3 = jnp.pad(labels3, ((0, 0), (0, 0), (0, hwpad - hw)),
                              constant_values=ignore_index)

        # TODO(synk): on v7x (2 TCs), if B is 1/odd the 'parallel' batch axis
        # leaves a core idle; an extra parallel split of the pixel axis with
        # per-core partials would restore balance.
        partials = pl.pallas_call(
            functools.partial(_fused_hiera_kernel,
                              n_fine=n_fine, n_mid=n_mid, n_high=n_high,
                              fines_in_mid=fines_in_mid,
                              mids_in_high=mids_in_high,
                              highs_in_mid=highs_in_mid,
                              ignore_index=ignore_index),
            out_shape=jax.ShapeDtypeStruct((b, 8, 128), jnp.float32),
            grid=(b, n_pt),
            in_specs=[pl.BlockSpec((1, n_total, lt), lambda bi, pi: (bi, 0, pi)),
                      pl.BlockSpec((1, 3, lt), lambda bi, pi: (bi, 0, pi))],
            out_specs=pl.BlockSpec((1, 8, 128), lambda bi, pi: (bi, 0, 0)),
            scratch_shapes=[pltpu.VMEM((8, lt), jnp.float32),
                            pltpu.VMEM((comb_rows, lt), jnp.float32)],
            compiler_params=pltpu.CompilerParams(
                dimension_semantics=("parallel", "arbitrary"),
                vmem_limit_bytes=48 * 1024 * 1024),
        )(logits, labels3)

        sums = jnp.sum(partials[:, :, 0], axis=0)        # (8,)
        nv = jnp.maximum(sums[6], 1.0)
        loss_f = sums[0] / (nv * n_fine)
        loss_m = sums[1] / (nv * n_mid)
        loss_h = sums[2] / (nv * n_high)
        hiera_loss = 5.0 * (loss_f + loss_m + loss_h)
        # TODO(synk): reference uses an unspecified `CrossEntropyLoss()`; standard
        # per-pixel softmax CE with ignore_index=255, mean over valid, is assumed.
        ce_loss = (sums[3] + sums[4] + sums[5]) / nv

        # -------------------------------- RMI ---------------------------------
        probs = jax.nn.sigmoid(cls_score.astype(jnp.float32))
        oh_f = jnp.transpose(jax.nn.one_hot(jnp.where(valid, t_fine, 0), n_fine,
                                            dtype=jnp.bfloat16), (0, 3, 1, 2))
        oh_m = jnp.transpose(jax.nn.one_hot(jnp.where(valid, t_mid, 0), n_mid,
                                            dtype=jnp.bfloat16), (0, 3, 1, 2))
        oh_h = jnp.transpose(jax.nn.one_hot(jnp.where(valid, t_high, 0), n_high,
                                            dtype=jnp.bfloat16), (0, 3, 1, 2))
        onehot_all = jnp.concatenate([oh_f, oh_m, oh_h], axis=1)
        vmask = valid[:, None].astype(jnp.float32)
        probs_masked = (probs * vmask + _CLIP_MIN).astype(jnp.bfloat16)

        x_pairs = _build_pair_stack(onehot_all, probs_masked, rmi_radius)

        # TODO(synk): reference does this block in float64; TPU path uses bf16
        # Grams with f32 accumulation and f32 solve/Cholesky.
        gram = _gram_pallas(x_pairs)                     # [G, 2*half_d, 2*half_d]
        la_cov = gram[:, :half_d, :half_d]
        pr_cov = gram[:, half_d:, half_d:]
        la_pr_cov = gram[:, :half_d, half_d:]

        eye = jnp.eye(half_d, dtype=jnp.float32)
        sol = jnp.linalg.solve(pr_cov + eye * _POS_ALPHA,
                               jnp.swapaxes(la_pr_cov, -1, -2))
        appr = la_cov - la_pr_cov @ sol
        chol = jnp.linalg.cholesky(appr + eye * _POS_ALPHA)
        log_det = 2.0 * jnp.sum(
            jnp.log(jnp.diagonal(chol, axis1=-2, axis2=-1) + 1e-8), axis=-1)
        rmi_per_class = (0.5 * log_det).reshape(b, n_total).mean(axis=0) / float(half_d)
        rmi_loss = jnp.sum(rmi_per_class)

        final_loss = loss_weight_lambda * rmi_loss + 0.5 * hiera_loss + ce_loss

        # TODO(synk): TreeTripletLoss source is not provided in the reference, so
        # the triplet term (cosine step schedule + all_gather gating) is omitted.
        return final_loss * loss_weight

    return forward


# --------------------------------- demo ----------------------------------------

if __name__ == "__main__":
    B, H, W = 2, 16, 16
    n_fine, n_mid, n_high = 7, 3, 2
    D = 32

    fine_to_mid = jnp.array([0, 0, 1, 1, 1, 2, 2], jnp.int32)
    fine_to_high = jnp.array([0, 0, 0, 0, 1, 1, 1], jnp.int32)

    key = jax.random.PRNGKey(0)
    k1, k2, k3, k4, k5 = jax.random.split(key, 5)
    embedding = jax.random.normal(k1, (B, D, H // 8, W // 8), jnp.float32)
    cls_score_before = jax.random.normal(k2, (B, n_fine, H // 8, W // 8), jnp.float32)
    cls_score = jax.random.normal(k3, (B, n_fine + n_mid + n_high, H, W), jnp.float32)
    label = jax.random.randint(k4, (B, H, W), 0, n_fine).astype(jnp.int32)
    label = jnp.where(jax.random.uniform(k5, (B, H, W)) < 0.1, 255, label)
    step = jnp.array(1000, jnp.int32)

    loss_fn = jax.jit(make_rmi_hiera_triplet_loss(
        n_fine, n_mid, n_high, fine_to_mid, fine_to_high,
        rmi_radius=3, rmi_pool_size=3, rmi_pool_stride=3,
        loss_weight_lambda=0.5, loss_weight=1.0, ignore_index=255))

    out = loss_fn(step, embedding, cls_score_before, cls_score, label)
    out = jax.block_until_ready(out)
    _ = float(out)
    print("KERNEL_OK")
</pallas_src>

<mosaic_0001>
module attributes {stable_mosaic.version = 11 : i64} {
  func.func @_fused_hiera_kernel(%arg0: i32, %arg1: i32, %arg2: memref<1x12x256xbf16, #tpu.memory_space<vmem>>, %arg3: memref<1x3x256xi32, #tpu.memory_space<vmem>>, %arg4: memref<1x8x128xf32, #tpu.memory_space<vmem>>, %arg5: memref<8x256xf32, #tpu.memory_space<vmem>>, %arg6: memref<24x256xf32, #tpu.memory_space<vmem>>) attributes {dimension_semantics = [#tpu.dimension_semantics<parallel>, #tpu.dimension_semantics<arbitrary>], iteration_bounds = array<i64: 2, 1>, scalar_prefetch = 0 : i64, scratch_operands = 2 : i64, tpu.core_type = #tpu.core_type<tc>, window_params = [{transform_indices = @transform_0, window_bounds = array<i64: 1, 12, 256>}, {transform_indices = @transform_1, window_bounds = array<i64: 1, 3, 256>}, {transform_indices = @transform_2, window_bounds = array<i64: 1, 8, 128>}]} {
    %c0_i32 = arith.constant 0 : i32
    %0 = arith.cmpi eq, %arg1, %c0_i32 : i32
    %1 = arith.extui %0 : i1 to i32
    %c0_i32_0 = arith.constant 0 : i32
    %2 = arith.cmpi ne, %1, %c0_i32_0 : i32
    scf.if %2 {
      %cst_98 = arith.constant 0.000000e+00 : f32
      %223 = vector.broadcast %cst_98 : f32 to vector<8x256xf32>
      %c0_99 = arith.constant 0 : index
      %c0_100 = arith.constant 0 : index
      %224 = vector.load %arg5[%c0_99, %c0_100] : memref<8x256xf32, #tpu.memory_space<vmem>>, vector<8x256xf32>
      tpu.vector_store %arg5[%c0_99, %c0_100], %223 {strides = array<i32>} : memref<8x256xf32, #tpu.memory_space<vmem>>, vector<8x256xf32>,
    } else {
    }
    %c0 = arith.constant 0 : index
    %c0_1 = arith.constant 0 : index
    %c0_2 = arith.constant 0 : index
    %3 = vector.load %arg2[%c0, %c0_1, %c0_2] : memref<1x12x256xbf16, #tpu.memory_space<vmem>>, vector<1x7x256xbf16>
    %4 = vector.shape_cast %3 : vector<1x7x256xbf16> to vector<7x256xbf16>
    %5 = arith.extf %4 : vector<7x256xbf16> to vector<7x256xf32>
    %c0_3 = arith.constant 0 : index
    %c7 = arith.constant 7 : index
    %c0_4 = arith.constant 0 : index
    %6 = vector.load %arg2[%c0_3, %c7, %c0_4] : memref<1x12x256xbf16, #tpu.memory_space<vmem>>, vector<1x3x256xbf16>
    %7 = vector.shape_cast %6 : vector<1x3x256xbf16> to vector<3x256xbf16>
    %8 = arith.extf %7 : vector<3x256xbf16> to vector<3x256xf32>
    %c0_5 = arith.constant 0 : index
    %c10 = arith.constant 10 : index
    %c0_6 = arith.constant 0 : index
    %9 = vector.load %arg2[%c0_5, %c10, %c0_6] : memref<1x12x256xbf16, #tpu.memory_space<vmem>>, vector<1x2x256xbf16>
    %10 = vector.shape_cast %9 : vector<1x2x256xbf16> to vector<2x256xbf16>
    %11 = arith.extf %10 : vector<2x256xbf16> to vector<2x256xf32>
    %cst = arith.constant 0.000000e+00 : f32
    %12 = vector.broadcast %cst : f32 to vector<7x256xf32>
    %13 = arith.subf %12, %5 : vector<7x256xf32>
    %14 = math.exp %13 : vector<7x256xf32>
    %cst_7 = arith.constant 1.000000e+00 : f32
    %15 = vector.broadcast %cst_7 : f32 to vector<7x256xf32>
    %16 = arith.addf %15, %14 : vector<7x256xf32>
    %cst_8 = arith.constant 1.000000e+00 : f32
    %17 = vector.broadcast %cst_8 : f32 to vector<7x256xf32>
    %18 = arith.divf %17, %16 : vector<7x256xf32>
    %cst_9 = arith.constant 0.000000e+00 : f32
    %19 = vector.broadcast %cst_9 : f32 to vector<3x256xf32>
    %20 = arith.subf %19, %8 : vector<3x256xf32>
    %21 = math.exp %20 : vector<3x256xf32>
    %cst_10 = arith.constant 1.000000e+00 : f32
    %22 = vector.broadcast %cst_10 : f32 to vector<3x256xf32>
    %23 = arith.addf %22, %21 : vector<3x256xf32>
    %cst_11 = arith.constant 1.000000e+00 : f32
    %24 = vector.broadcast %cst_11 : f32 to vector<3x256xf32>
    %25 = arith.divf %24, %23 : vector<3x256xf32>
    %cst_12 = arith.constant 0.000000e+00 : f32
    %26 = vector.broadcast %cst_12 : f32 to vector<2x256xf32>
    %27 = arith.subf %26, %11 : vector<2x256xf32>
    %28 = math.exp %27 : vector<2x256xf32>
    %cst_13 = arith.constant 1.000000e+00 : f32
    %29 = vector.broadcast %cst_13 : f32 to vector<2x256xf32>
    %30 = arith.addf %29, %28 : vector<2x256xf32>
    %cst_14 = arith.constant 1.000000e+00 : f32
    %31 = vector.broadcast %cst_14 : f32 to vector<2x256xf32>
    %32 = arith.divf %31, %30 : vector<2x256xf32>
    %c0_15 = arith.constant 0 : index
    %c0_16 = arith.constant 0 : index
    %c0_17 = arith.constant 0 : index
    %33 = vector.load %arg3[%c0_15, %c0_16, %c0_17] : memref<1x3x256xi32, #tpu.memory_space<vmem>>, vector<1x1x256xi32>
    %34 = vector.shape_cast %33 : vector<1x1x256xi32> to vector<1x256xi32>
    %c0_18 = arith.constant 0 : index
    %c1 = arith.constant 1 : index
    %c0_19 = arith.constant 0 : index
    %35 = vector.load %arg3[%c0_18, %c1, %c0_19] : memref<1x3x256xi32, #tpu.memory_space<vmem>>, vector<1x1x256xi32>
    %36 = vector.shape_cast %35 : vector<1x1x256xi32> to vector<1x256xi32>
    %c0_20 = arith.constant 0 : index
    %c2 = arith.constant 2 : index
    %c0_21 = arith.constant 0 : index
    %37 = vector.load %arg3[%c0_20, %c2, %c0_21] : memref<1x3x256xi32, #tpu.memory_space<vmem>>, vector<1x1x256xi32>
    %38 = vector.shape_cast %37 : vector<1x1x256xi32> to vector<1x256xi32>
    %c255_i32 = arith.constant 255 : i32
    %39 = vector.broadcast %c255_i32 : i32 to vector<1x256xi32>
    %40 = arith.cmpi ne, %34, %39 : vector<1x256xi32>
    %41 = arith.extui %40 : vector<1x256xi1> to vector<1x256xi32>
    %42 = arith.sitofp %41 : vector<1x256xi32> to vector<1x256xf32>
    %c255_i32_22 = arith.constant 255 : i32
    %43 = vector.broadcast %c255_i32_22 : i32 to vector<1x256xi32>
    %44 = arith.cmpi ne, %36, %43 : vector<1x256xi32>
    %45 = arith.extui %44 : vector<1x256xi1> to vector<1x256xi32>
    %46 = arith.sitofp %45 : vector<1x256xi32> to vector<1x256xf32>
    %c255_i32_23 = arith.constant 255 : i32
    %47 = vector.broadcast %c255_i32_23 : i32 to vector<1x256xi32>
    %48 = arith.cmpi ne, %38, %47 : vector<1x256xi32>
    %49 = arith.extui %48 : vector<1x256xi1> to vector<1x256xi32>
    %50 = arith.sitofp %49 : vector<1x256xi32> to vector<1x256xf32>
    %51 = tpu.iota {dimensions = array<i32: 0>} : vector<7x256xi32>
    %52 = vector.broadcast %34 : vector<1x256xi32> to vector<7x256xi32>
    %53 = arith.cmpi eq, %52, %51 : vector<7x256xi32>
    %54 = tpu.iota {dimensions = array<i32: 0>} : vector<3x256xi32>
    %55 = vector.broadcast %36 : vector<1x256xi32> to vector<3x256xi32>
    %56 = arith.cmpi eq, %55, %54 : vector<3x256xi32>
    %57 = tpu.iota {dimensions = array<i32: 0>} : vector<2x256xi32>
    %58 = vector.broadcast %38 : vector<1x256xi32> to vector<2x256xi32>
    %59 = arith.cmpi eq, %58, %57 : vector<2x256xi32>
    %60 = vector.extract_strided_slice %25 {offsets = [0, 0], sizes = [1, 256], strides = [1, 1]} : vector<3x256xf32> to vector<1x256xf32>
    %61 = vector.extract_strided_slice %18 {offsets = [0, 0], sizes = [1, 256], strides = [1, 1]} : vector<7x256xf32> to vector<1x256xf32>
    %62 = arith.maximumf %60, %61 : vector<1x256xf32>
    %63 = vector.extract_strided_slice %18 {offsets = [1, 0], sizes = [1, 256], strides = [1, 1]} : vector<7x256xf32> to vector<1x256xf32>
    %64 = arith.maximumf %62, %63 : vector<1x256xf32>
    %c0_24 = arith.constant 0 : index
    %c0_25 = arith.constant 0 : index
    %65 = vector.load %arg6[%c0_24, %c0_25] : memref<24x256xf32, #tpu.memory_space<vmem>>, vector<1x256xf32>
    tpu.vector_store %arg6[%c0_24, %c0_25], %64 {strides = array<i32>} : memref<24x256xf32, #tpu.memory_space<vmem>>, vector<1x256xf32>,
    %66 = vector.extract_strided_slice %25 {offsets = [1, 0], sizes = [1, 256], strides = [1, 1]} : vector<3x256xf32> to vector<1x256xf32>
    %67 = vector.extract_strided_slice %18 {offsets = [2, 0], sizes = [1, 256], strides = [1, 1]} : vector<7x256xf32> to vector<1x256xf32>
    %68 = arith.maximumf %66, %67 : vector<1x256xf32>
    %69 = vector.extract_strided_slice %18 {offsets = [3, 0], sizes = [1, 256], strides = [1, 1]} : vector<7x256xf32> to vector<1x256xf32>
    %70 = arith.maximumf %68, %69 : vector<1x256xf32>
    %71 = vector.extract_strided_slice %18 {offsets = [4, 0], sizes = [1, 256], strides = [1, 1]} : vector<7x256xf32> to vector<1x256xf32>
    %72 = arith.maximumf %70, %71 : vector<1x256xf32>
    %c1_26 = arith.constant 1 : index
    %c0_27 = arith.constant 0 : index
    %73 = vector.load %arg6[%c1_26, %c0_27] : memref<24x256xf32, #tpu.memory_space<vmem>>, vector<1x256xf32>
    tpu.vector_store %arg6[%c1_26, %c0_27], %72 {strides = array<i32>} : memref<24x256xf32, #tpu.memory_space<vmem>>, vector<1x256xf32>,
    %74 = vector.extract_strided_slice %25 {offsets = [2, 0], sizes = [1, 256], strides = [1, 1]} : vector<3x256xf32> to vector<1x256xf32>
    %75 = vector.extract_strided_slice %18 {offsets = [5, 0], sizes = [1, 256], strides = [1, 1]} : vector<7x256xf32> to vector<1x256xf32>
    %76 = arith.maximumf %74, %75 : vector<1x256xf32>
    %77 = vector.extract_strided_slice %18 {offsets = [6, 0], sizes = [1, 256], strides = [1, 1]} : vector<7x256xf32> to vector<1x256xf32>
    %78 = arith.maximumf %76, %77 : vector<1x256xf32>
    %c2_28 = arith.constant 2 : index
    %c0_29 = arith.constant 0 : index
    %79 = vector.load %arg6[%c2_28, %c0_29] : memref<24x256xf32, #tpu.memory_space<vmem>>, vector<1x256xf32>
    tpu.vector_store %arg6[%c2_28, %c0_29], %78 {strides = array<i32>} : memref<24x256xf32, #tpu.memory_space<vmem>>, vector<1x256xf32>,
    %80 = vector.extract_strided_slice %32 {offsets = [0, 0], sizes = [1, 256], strides = [1, 1]} : vector<2x256xf32> to vector<1x256xf32>
    %81 = arith.maximumf %80, %64 : vector<1x256xf32>
    %82 = arith.maximumf %81, %72 : vector<1x256xf32>
    %c8 = arith.constant 8 : index
    %c0_30 = arith.constant 0 : index
    %83 = vector.load %arg6[%c8, %c0_30] : memref<24x256xf32, #tpu.memory_space<vmem>>, vector<1x256xf32>
    tpu.vector_store %arg6[%c8, %c0_30], %82 {strides = array<i32>} : memref<24x256xf32, #tpu.memory_space<vmem>>, vector<1x256xf32>,
    %84 = vector.extract_strided_slice %32 {offsets = [1, 0], sizes = [1, 256], strides = [1, 1]} : vector<2x256xf32> to vector<1x256xf32>
    %85 = arith.maximumf %84, %72 : vector<1x256xf32>
    %86 = arith.maximumf %85, %78 : vector<1x256xf32>
    %c9 = arith.constant 9 : index
    %c0_31 = arith.constant 0 : index
    %87 = vector.load %arg6[%c9, %c0_31] : memref<24x256xf32, #tpu.memory_space<vmem>>, vector<1x256xf32>
    tpu.vector_store %arg6[%c9, %c0_31], %86 {strides = array<i32>} : memref<24x256xf32, #tpu.memory_space<vmem>>, vector<1x256xf32>,
    %88 = vector.extract_strided_slice %25 {offsets = [0, 0], sizes = [1, 256], strides = [1, 1]} : vector<3x256xf32> to vector<1x256xf32>
    %89 = vector.extract_strided_slice %32 {offsets = [0, 0], sizes = [1, 256], strides = [1, 1]} : vector<2x256xf32> to vector<1x256xf32>
    %90 = arith.minimumf %88, %89 : vector<1x256xf32>
    %c16 = arith.constant 16 : index
    %c0_32 = arith.constant 0 : index
    %91 = vector.load %arg6[%c16, %c0_32] : memref<24x256xf32, #tpu.memory_space<vmem>>, vector<1x256xf32>
    tpu.vector_store %arg6[%c16, %c0_32], %90 {strides = array<i32>} : memref<24x256xf32, #tpu.memory_space<vmem>>, vector<1x256xf32>,
    %92 = vector.extract_strided_slice %25 {offsets = [1, 0], sizes = [1, 256], strides = [1, 1]} : vector<3x256xf32> to vector<1x256xf32>
    %93 = vector.extract_strided_slice %32 {offsets = [0, 0], sizes = [1, 256], strides = [1, 1]} : vector<2x256xf32> to vector<1x256xf32>
    %94 = arith.minimumf %92, %93 : vector<1x256xf32>
    %95 = vector.extract_strided_slice %32 {offsets = [1, 0], sizes = [1, 256], strides = [1, 1]} : vector<2x256xf32> to vector<1x256xf32>
    %96 = arith.minimumf %94, %95 : vector<1x256xf32>
    %c17 = arith.constant 17 : index
    %c0_33 = arith.constant 0 : index
    %97 = vector.load %arg6[%c17, %c0_33] : memref<24x256xf32, #tpu.memory_space<vmem>>, vector<1x256xf32>
    tpu.vector_store %arg6[%c17, %c0_33], %96 {strides = array<i32>} : memref<24x256xf32, #tpu.memory_space<vmem>>, vector<1x256xf32>,
    %98 = vector.extract_strided_slice %25 {offsets = [2, 0], sizes = [1, 256], strides = [1, 1]} : vector<3x256xf32> to vector<1x256xf32>
    %99 = vector.extract_strided_slice %32 {offsets = [1, 0], sizes = [1, 256], strides = [1, 1]} : vector<2x256xf32> to vector<1x256xf32>
    %100 = arith.minimumf %98, %99 : vector<1x256xf32>
    %c18 = arith.constant 18 : index
    %c0_34 = arith.constant 0 : index
    %101 = vector.load %arg6[%c18, %c0_34] : memref<24x256xf32, #tpu.memory_space<vmem>>, vector<1x256xf32>
    tpu.vector_store %arg6[%c18, %c0_34], %100 {strides = array<i32>} : memref<24x256xf32, #tpu.memory_space<vmem>>, vector<1x256xf32>,
    %c0_35 = arith.constant 0 : index
    %c0_36 = arith.constant 0 : index
    %102 = vector.load %arg6[%c0_35, %c0_36] : memref<24x256xf32, #tpu.memory_space<vmem>>, vector<3x256xf32>
    %c8_37 = arith.constant 8 : index
    %c0_38 = arith.constant 0 : index
    %103 = vector.load %arg6[%c8_37, %c0_38] : memref<24x256xf32, #tpu.memory_space<vmem>>, vector<2x256xf32>
    %c16_39 = arith.constant 16 : index
    %c0_40 = arith.constant 0 : index
    %104 = vector.load %arg6[%c16_39, %c0_40] : memref<24x256xf32, #tpu.memory_space<vmem>>, vector<3x256xf32>
    %cst_41 = arith.constant 0.000000e+00 : f32
    %105 = vector.broadcast %cst_41 : f32 to vector<7x256xf32>
    %106 = arith.select %53, %18, %105 : vector<7x256xi1>, vector<7x256xf32>
    %cst_42 = arith.constant dense<0.000000e+00> : vector<256xf32>
    %107 = vector.multi_reduction <add>, %106, %cst_42 [0] : vector<7x256xf32> to vector<256xf32>
    %108 = vector.shape_cast %107 : vector<256xf32> to vector<1x256xf32>
    %cst_43 = arith.constant 0.000000e+00 : f32
    %109 = vector.broadcast %cst_43 : f32 to vector<3x256xf32>
    %110 = arith.select %56, %25, %109 : vector<3x256xi1>, vector<3x256xf32>
    %cst_44 = arith.constant dense<0.000000e+00> : vector<256xf32>
    %111 = vector.multi_reduction <add>, %110, %cst_44 [0] : vector<3x256xf32> to vector<256xf32>
    %112 = vector.shape_cast %111 : vector<256xf32> to vector<1x256xf32>
    %113 = arith.minimumf %108, %112 : vector<1x256xf32>
    %cst_45 = arith.constant 9.99999997E-7 : f32
    %114 = vector.broadcast %cst_45 : f32 to vector<1x256xf32>
    %115 = arith.addf %113, %114 : vector<1x256xf32>
    %116 = math.log %115 : vector<1x256xf32>
    %cst_46 = arith.constant 0.000000e+00 : f32
    %117 = vector.broadcast %cst_46 : f32 to vector<1x256xf32>
    %118 = arith.subf %117, %116 : vector<1x256xf32>
    %cst_47 = arith.constant 1.000000e+00 : f32
    %119 = vector.broadcast %cst_47 : f32 to vector<7x256xf32>
    %120 = arith.subf %119, %18 : vector<7x256xf32>
    %cst_48 = arith.constant 9.99999997E-7 : f32
    %121 = vector.broadcast %cst_48 : f32 to vector<7x256xf32>
    %122 = arith.addf %120, %121 : vector<7x256xf32>
    %123 = math.log %122 : vector<7x256xf32>
    %cst_49 = arith.constant 0.000000e+00 : f32
    %124 = vector.broadcast %cst_49 : f32 to vector<7x256xf32>
    %125 = arith.subf %124, %123 : vector<7x256xf32>
    %cst_50 = arith.constant 0.000000e+00 : f32
    %126 = vector.broadcast %cst_50 : f32 to vector<7x256xf32>
    %127 = arith.select %53, %126, %125 : vector<7x256xi1>, vector<7x256xf32>
    %cst_51 = arith.constant dense<0.000000e+00> : vector<256xf32>
    %128 = vector.multi_reduction <add>, %127, %cst_51 [0] : vector<7x256xf32> to vector<256xf32>
    %129 = vector.shape_cast %128 : vector<256xf32> to vector<1x256xf32>
    %130 = arith.addf %118, %129 : vector<1x256xf32>
    %131 = arith.mulf %130, %42 : vector<1x256xf32>
    %cst_52 = arith.constant 1.000000e+00 : f32
    %132 = vector.broadcast %cst_52 : f32 to vector<3x256xf32>
    %133 = arith.subf %132, %102 : vector<3x256xf32>
    %134 = arith.select %56, %104, %133 : vector<3x256xi1>, vector<3x256xf32>
    %cst_53 = arith.constant 9.99999997E-7 : f32
    %135 = vector.broadcast %cst_53 : f32 to vector<3x256xf32>
    %136 = arith.addf %134, %135 : vector<3x256xf32>
    %137 = math.log %136 : vector<3x256xf32>
    %cst_54 = arith.constant 0.000000e+00 : f32
    %138 = vector.broadcast %cst_54 : f32 to vector<3x256xf32>
    %139 = arith.subf %138, %137 : vector<3x256xf32>
    %cst_55 = arith.constant dense<0.000000e+00> : vector<256xf32>
    %140 = vector.multi_reduction <add>, %139, %cst_55 [0] : vector<3x256xf32> to vector<256xf32>
    %141 = vector.shape_cast %140 : vector<256xf32> to vector<1x256xf32>
    %142 = arith.mulf %141, %46 : vector<1x256xf32>
    %cst_56 = arith.constant 1.000000e+00 : f32
    %143 = vector.broadcast %cst_56 : f32 to vector<2x256xf32>
    %144 = arith.subf %143, %103 : vector<2x256xf32>
    %145 = arith.select %59, %32, %144 : vector<2x256xi1>, vector<2x256xf32>
    %cst_57 = arith.constant 9.99999997E-7 : f32
    %146 = vector.broadcast %cst_57 : f32 to vector<2x256xf32>
    %147 = arith.addf %145, %146 : vector<2x256xf32>
    %148 = math.log %147 : vector<2x256xf32>
    %cst_58 = arith.constant 0.000000e+00 : f32
    %149 = vector.broadcast %cst_58 : f32 to vector<2x256xf32>
    %150 = arith.subf %149, %148 : vector<2x256xf32>
    %cst_59 = arith.constant dense<0.000000e+00> : vector<256xf32>
    %151 = vector.multi_reduction <add>, %150, %cst_59 [0] : vector<2x256xf32> to vector<256xf32>
    %152 = vector.shape_cast %151 : vector<256xf32> to vector<1x256xf32>
    %153 = arith.mulf %152, %50 : vector<1x256xf32>
    %cst_60 = arith.constant dense<0xFF800000> : vector<256xf32>
    %154 = vector.multi_reduction <maximumf>, %5, %cst_60 [0] : vector<7x256xf32> to vector<256xf32>
    %155 = vector.shape_cast %154 : vector<256xf32> to vector<1x256xf32>
    %156 = vector.broadcast %155 : vector<1x256xf32> to vector<7x256xf32>
    %157 = arith.subf %5, %156 : vector<7x256xf32>
    %158 = math.exp %157 : vector<7x256xf32>
    %cst_61 = arith.constant dense<0.000000e+00> : vector<256xf32>
    %159 = vector.multi_reduction <add>, %158, %cst_61 [0] : vector<7x256xf32> to vector<256xf32>
    %160 = vector.shape_cast %159 : vector<256xf32> to vector<1x256xf32>
    %161 = math.log %160 : vector<1x256xf32>
    %162 = arith.addf %155, %161 : vector<1x256xf32>
    %cst_62 = arith.constant 0.000000e+00 : f32
    %163 = vector.broadcast %cst_62 : f32 to vector<7x256xf32>
    %164 = arith.select %53, %5, %163 : vector<7x256xi1>, vector<7x256xf32>
    %cst_63 = arith.constant dense<0.000000e+00> : vector<256xf32>
    %165 = vector.multi_reduction <add>, %164, %cst_63 [0] : vector<7x256xf32> to vector<256xf32>
    %166 = vector.shape_cast %165 : vector<256xf32> to vector<1x256xf32>
    %167 = arith.subf %162, %166 : vector<1x256xf32>
    %168 = arith.mulf %167, %42 : vector<1x256xf32>
    %cst_64 = arith.constant dense<0xFF800000> : vector<256xf32>
    %169 = vector.multi_reduction <maximumf>, %8, %cst_64 [0] : vector<3x256xf32> to vector<256xf32>
    %170 = vector.shape_cast %169 : vector<256xf32> to vector<1x256xf32>
    %171 = vector.broadcast %170 : vector<1x256xf32> to vector<3x256xf32>
    %172 = arith.subf %8, %171 : vector<3x256xf32>
    %173 = math.exp %172 : vector<3x256xf32>
    %cst_65 = arith.constant dense<0.000000e+00> : vector<256xf32>
    %174 = vector.multi_reduction <add>, %173, %cst_65 [0] : vector<3x256xf32> to vector<256xf32>
    %175 = vector.shape_cast %174 : vector<256xf32> to vector<1x256xf32>
    %176 = math.log %175 : vector<1x256xf32>
    %177 = arith.addf %170, %176 : vector<1x256xf32>
    %cst_66 = arith.constant 0.000000e+00 : f32
    %178 = vector.broadcast %cst_66 : f32 to vector<3x256xf32>
    %179 = arith.select %56, %8, %178 : vector<3x256xi1>, vector<3x256xf32>
    %cst_67 = arith.constant dense<0.000000e+00> : vector<256xf32>
    %180 = vector.multi_reduction <add>, %179, %cst_67 [0] : vector<3x256xf32> to vector<256xf32>
    %181 = vector.shape_cast %180 : vector<256xf32> to vector<1x256xf32>
    %182 = arith.subf %177, %181 : vector<1x256xf32>
    %183 = arith.mulf %182, %46 : vector<1x256xf32>
    %cst_68 = arith.constant dense<0xFF800000> : vector<256xf32>
    %184 = vector.multi_reduction <maximumf>, %11, %cst_68 [0] : vector<2x256xf32> to vector<256xf32>
    %185 = vector.shape_cast %184 : vector<256xf32> to vector<1x256xf32>
    %186 = vector.broadcast %185 : vector<1x256xf32> to vector<2x256xf32>
    %187 = arith.subf %11, %186 : vector<2x256xf32>
    %188 = math.exp %187 : vector<2x256xf32>
    %cst_69 = arith.constant dense<0.000000e+00> : vector<256xf32>
    %189 = vector.multi_reduction <add>, %188, %cst_69 [0] : vector<2x256xf32> to vector<256xf32>
    %190 = vector.shape_cast %189 : vector<256xf32> to vector<1x256xf32>
    %191 = math.log %190 : vector<1x256xf32>
    %192 = arith.addf %185, %191 : vector<1x256xf32>
    %cst_70 = arith.constant 0.000000e+00 : f32
    %193 = vector.broadcast %cst_70 : f32 to vector<2x256xf32>
    %194 = arith.select %59, %11, %193 : vector<2x256xi1>, vector<2x256xf32>
    %cst_71 = arith.constant dense<0.000000e+00> : vector<256xf32>
    %195 = vector.multi_reduction <add>, %194, %cst_71 [0] : vector<2x256xf32> to vector<256xf32>
    %196 = vector.shape_cast %195 : vector<256xf32> to vector<1x256xf32>
    %197 = arith.subf %192, %196 : vector<1x256xf32>
    %198 = arith.mulf %197, %50 : vector<1x256xf32>
    %c0_72 = arith.constant 0 : index
    %c0_73 = arith.constant 0 : index
    %199 = vector.load %arg5[%c0_72, %c0_73] : memref<8x256xf32, #tpu.memory_space<vmem>>, vector<1x256xf32>
    %200 = arith.addf %199, %131 : vector<1x256xf32>
    %c0_74 = arith.constant 0 : index
    %c0_75 = arith.constant 0 : index
    %201 = vector.load %arg5[%c0_74, %c0_75] : memref<8x256xf32, #tpu.memory_space<vmem>>, vector<1x256xf32>
    tpu.vector_store %arg5[%c0_74, %c0_75], %200 {strides = array<i32>} : memref<8x256xf32, #tpu.memory_space<vmem>>, vector<1x256xf32>,
    %c1_76 = arith.constant 1 : index
    %c0_77 = arith.constant 0 : index
    %202 = vector.load %arg5[%c1_76, %c0_77] : memref<8x256xf32, #tpu.memory_space<vmem>>, vector<1x256xf32>
    %203 = arith.addf %202, %142 : vector<1x256xf32>
    %c1_78 = arith.constant 1 : index
    %c0_79 = arith.constant 0 : index
    %204 = vector.load %arg5[%c1_78, %c0_79] : memref<8x256xf32, #tpu.memory_space<vmem>>, vector<1x256xf32>
    tpu.vector_store %arg5[%c1_78, %c0_79], %203 {strides = array<i32>} : memref<8x256xf32, #tpu.memory_space<vmem>>, vector<1x256xf32>,
    %c2_80 = arith.constant 2 : index
    %c0_81 = arith.constant 0 : index
    %205 = vector.load %arg5[%c2_80, %c0_81] : memref<8x256xf32, #tpu.memory_space<vmem>>, vector<1x256xf32>
    %206 = arith.addf %205, %153 : vector<1x256xf32>
    %c2_82 = arith.constant 2 : index
    %c0_83 = arith.constant 0 : index
    %207 = vector.load %arg5[%c2_82, %c0_83] : memref<8x256xf32, #tpu.memory_space<vmem>>, vector<1x256xf32>
    tpu.vector_store %arg5[%c2_82, %c0_83], %206 {strides = array<i32>} : memref<8x256xf32, #tpu.memory_space<vmem>>, vector<1x256xf32>,
    %c3 = arith.constant 3 : index
    %c0_84 = arith.constant 0 : index
    %208 = vector.load %arg5[%c3, %c0_84] : memref<8x256xf32, #tpu.memory_space<vmem>>, vector<1x256xf32>
    %209 = arith.addf %208, %168 : vector<1x256xf32>
    %c3_85 = arith.constant 3 : index
    %c0_86 = arith.constant 0 : index
    %210 = vector.load %arg5[%c3_85, %c0_86] : memref<8x256xf32, #tpu.memory_space<vmem>>, vector<1x256xf32>
    tpu.vector_store %arg5[%c3_85, %c0_86], %209 {strides = array<i32>} : memref<8x256xf32, #tpu.memory_space<vmem>>, vector<1x256xf32>,
    %c4 = arith.constant 4 : index
    %c0_87 = arith.constant 0 : index
    %211 = vector.load %arg5[%c4, %c0_87] : memref<8x256xf32, #tpu.memory_space<vmem>>, vector<1x256xf32>
    %212 = arith.addf %211, %183 : vector<1x256xf32>
    %c4_88 = arith.constant 4 : index
    %c0_89 = arith.constant 0 : index
    %213 = vector.load %arg5[%c4_88, %c0_89] : memref<8x256xf32, #tpu.memory_space<vmem>>, vector<1x256xf32>
    tpu.vector_store %arg5[%c4_88, %c0_89], %212 {strides = array<i32>} : memref<8x256xf32, #tpu.memory_space<vmem>>, vector<1x256xf32>,
    %c5 = arith.constant 5 : index
    %c0_90 = arith.constant 0 : index
    %214 = vector.load %arg5[%c5, %c0_90] : memref<8x256xf32, #tpu.memory_space<vmem>>, vector<1x256xf32>
    %215 = arith.addf %214, %198 : vector<1x256xf32>
    %c5_91 = arith.constant 5 : index
    %c0_92 = arith.constant 0 : index
    %216 = vector.load %arg5[%c5_91, %c0_92] : memref<8x256xf32, #tpu.memory_space<vmem>>, vector<1x256xf32>
    tpu.vector_store %arg5[%c5_91, %c0_92], %215 {strides = array<i32>} : memref<8x256xf32, #tpu.memory_space<vmem>>, vector<1x256xf32>,
    %c6 = arith.constant 6 : index
    %c0_93 = arith.constant 0 : index
    %217 = vector.load %arg5[%c6, %c0_93] : memref<8x256xf32, #tpu.memory_space<vmem>>, vector<1x256xf32>
    %218 = arith.addf %217, %42 : vector<1x256xf32>
    %c6_94 = arith.constant 6 : index
    %c0_95 = arith.constant 0 : index
    %219 = vector.load %arg5[%c6_94, %c0_95] : memref<8x256xf32, #tpu.memory_space<vmem>>, vector<1x256xf32>
    tpu.vector_store %arg5[%c6_94, %c0_95], %218 {strides = array<i32>} : memref<8x256xf32, #tpu.memory_space<vmem>>, vector<1x256xf32>,
    %c0_i32_96 = arith.constant 0 : i32
    %220 = arith.cmpi eq, %arg1, %c0_i32_96 : i32
    %221 = arith.extui %220 : i1 to i32
    %c0_i32_97 = arith.constant 0 : i32
    %222 = arith.cmpi ne, %221, %c0_i32_97 : i32
    scf.if %222 {
      %c0_98 = arith.constant 0 : index
      %c0_99 = arith.constant 0 : index
      %223 = vector.load %arg5[%c0_98, %c0_99] : memref<8x256xf32, #tpu.memory_space<vmem>>, vector<8x256xf32>
      %cst_100 = arith.constant dense<0.000000e+00> : vector<8xf32>
      %224 = vector.multi_reduction <add>, %223, %cst_100 [1] : vector<8x256xf32> to vector<8xf32>
      %225 = vector.shape_cast %224 : vector<8xf32> to vector<8x1xf32>
      %226 = vector.shape_cast %225 : vector<8x1xf32> to vector<8x1xf32>
      %227 = vector.broadcast %226 : vector<8x1xf32> to vector<8x128xf32>
      %c0_101 = arith.constant 0 : index
      %c0_102 = arith.constant 0 : index
      %c0_103 = arith.constant 0 : index
      %228 = vector.load %arg4[%c0_101, %c0_102, %c0_103] : memref<1x8x128xf32, #tpu.memory_space<vmem>>, vector<1x8x128xf32>
      %229 = vector.shape_cast %228 : vector<1x8x128xf32> to vector<8x128xf32>
      %230 = vector.shape_cast %227 : vector<8x128xf32> to vector<1x8x128xf32>
      tpu.vector_store %arg4[%c0_101, %c0_102, %c0_103], %230 {strides = array<i32>} : memref<1x8x128xf32, #tpu.memory_space<vmem>>, vector<1x8x128xf32>,
    } else {
    }
    return
  }
  func.func @transform_0(%arg0: i32, %arg1: i32) -> (i32, i32, i32) {
    %c0_i32 = arith.constant 0 : i32
    %c0_i32_0 = arith.constant 0 : i32
    return %arg0, %c0_i32, %arg1 : i32, i32, i32
  }
  func.func @transform_1(%arg0: i32, %arg1: i32) -> (i32, i32, i32) {
    %c0_i32 = arith.constant 0 : i32
    %c0_i32_0 = arith.constant 0 : i32
    return %arg0, %c0_i32, %arg1 : i32, i32, i32
  }
  func.func @transform_2(%arg0: i32, %arg1: i32) -> (i32, i32, i32) {
    %c0_i32 = arith.constant 0 : i32
    %c0_i32_0 = arith.constant 0 : i32
    %c0_i32_1 = arith.constant 0 : i32
    return %arg0, %c0_i32, %c0_i32_0 : i32, i32, i32
  }
}

module attributes {stable_mosaic.version = 11 : i64} {
  func.func @_gram_kernel(%arg0: i32, %arg1: i32, %arg2: memref<1x256x256xbf16, #tpu.memory_space<vmem>>, %arg3: memref<1x256x256xf32, #tpu.memory_space<vmem>>) attributes {dimension_semantics = [#tpu.dimension_semantics<parallel>, #tpu.dimension_semantics<arbitrary>], iteration_bounds = array<i64: 3, 1>, scalar_prefetch = 0 : i64, scratch_operands = 0 : i64, tpu.core_type = #tpu.core_type<tc>, window_params = [{transform_indices = @transform_0, window_bounds = array<i64: 1, 256, 256>}, {transform_indices = @transform_1, window_bounds = array<i64: 1, 256, 256>}]} {
    %c0_i32 = arith.constant 0 : i32
    %0 = arith.cmpi eq, %arg1, %c0_i32 : i32
    %1 = arith.extui %0 : i1 to i32
    %c0_i32_0 = arith.constant 0 : i32
    %2 = arith.cmpi ne, %1, %c0_i32_0 : i32
    scf.if %2 {
      %cst_9 = arith.constant 0.000000e+00 : f32
      %12 = vector.broadcast %cst_9 : f32 to vector<1x256x256xf32>
      %c0_10 = arith.constant 0 : index
      %c0_11 = arith.constant 0 : index
      %c0_12 = arith.constant 0 : index
      %13 = vector.load %arg3[%c0_10, %c0_11, %c0_12] : memref<1x256x256xf32, #tpu.memory_space<vmem>>, vector<1x256x256xf32>
      tpu.vector_store %arg3[%c0_10, %c0_11, %c0_12], %12 {strides = array<i32>} : memref<1x256x256xf32, #tpu.memory_space<vmem>>, vector<1x256x256xf32>,
    } else {
    }
    %c0 = arith.constant 0 : index
    %c0_1 = arith.constant 0 : index
    %c0_2 = arith.constant 0 : index
    %3 = vector.load %arg2[%c0, %c0_1, %c0_2] : memref<1x256x256xbf16, #tpu.memory_space<vmem>>, vector<1x256x256xbf16>
    %4 = vector.shape_cast %3 : vector<1x256x256xbf16> to vector<256x256xbf16>
    %c0_3 = arith.constant 0 : index
    %c0_4 = arith.constant 0 : index
    %c0_5 = arith.constant 0 : index
    %5 = vector.load %arg3[%c0_3, %c0_4, %c0_5] : memref<1x256x256xf32, #tpu.memory_space<vmem>>, vector<1x256x256xf32>
    %6 = vector.shape_cast %5 : vector<1x256x256xf32> to vector<256x256xf32>
    %cst = arith.constant dense<0.000000e+00> : vector<256x256xf32>
    %7 = tpu.matmul %4, %4, %cst {dimension_numbers = #tpu.dot_dimension_numbers<[1], [1], [0], [0], [0, 0, 1, 0], [], []>} : vector<256x256xbf16>, vector<256x256xbf16>, vector<256x256xf32> -> vector<256x256xf32>
    %8 = arith.addf %6, %7 : vector<256x256xf32>
    %c0_6 = arith.constant 0 : index
    %c0_7 = arith.constant 0 : index
    %c0_8 = arith.constant 0 : index
    %9 = vector.load %arg3[%c0_6, %c0_7, %c0_8] : memref<1x256x256xf32, #tpu.memory_space<vmem>>, vector<1x256x256xf32>
    %10 = vector.shape_cast %9 : vector<1x256x256xf32> to vector<256x256xf32>
    %11 = vector.shape_cast %8 : vector<256x256xf32> to vector<1x256x256xf32>
    tpu.vector_store %arg3[%c0_6, %c0_7, %c0_8], %11 {strides = array<i32>} : memref<1x256x256xf32, #tpu.memory_space<vmem>>, vector<1x256x256xf32>,
    return
  }
  func.func @transform_0(%arg0: i32, %arg1: i32) -> (i32, i32, i32) {
    %c0_i32 = arith.constant 0 : i32
    %c0_i32_0 = arith.constant 0 : i32
    return %arg0, %c0_i32, %arg1 : i32, i32, i32
  }
  func.func @transform_1(%arg0: i32, %arg1: i32) -> (i32, i32, i32) {
    %c0_i32 = arith.constant 0 : i32
    %c0_i32_0 = arith.constant 0 : i32
    %c0_i32_1 = arith.constant 0 : i32
    return %arg0, %c0_i32, %c0_i32_0 : i32, i32, i32
  }
}

</mosaic_0001>

<llo_original>
// kernel: forward.2
$region0: #{forward.2}
  #allocation0 [shape = 'u32[]', space=smem, size = 0x4, offset = 0x4, fixed_abs, tag = 'smem constant byte address 0x4 - core index']
  #allocation1 [shape = 'u32[144,128]{1,0:T(1,128)}', space=vmem, size = 0x12000, scoped, tag = 'internal scratch']
  #allocation2 [shape = 'f32[8,256]{1,0:T(8,128)}', space=vmem, size = 0x2000, scoped, tag = 'scratch operand']
  #allocation3 [shape = 'f32[24,256]{1,0:T(8,128)}', space=vmem, size = 0x6000, scoped, tag = 'scratch operand']
  %s0 = inlined_call_operand.vmem [shape: bf16[2,12,256], index: 0, kind: input, shape index: {}]
  %s1 = inlined_call_operand.vmem [shape: s32[2,3,256], index: 1, kind: input, shape index: {}]
  %s2 = inlined_call_operand.vmem [shape: f32[2,8,128], index: 2, kind: output, shape index: {}]
  %s3 = sld [smem:[#allocation0]]
  $region49: #{forward.2} parent=0
    _
  %s5 = ssub.s32 1, %s3
  %s6 = scalar_select 0, %s5, %s3
  loop: start=0, step=1, limit=4
  $region2: #{forward.2} parent=0 // loop_pre_header
    _
  $region3: #{forward.2} parent=0 // loop_header
    %s8 = sphi 0, %s12
    %p9 = scmp.ge.s32.totalorder %s8, 4
    %s15 = sphi 0, %s27
    %s16 = sphi 0, %s23
    %s17 = sphi 0, %s15
    %s18 = sphi 0, %s16
    %s19 = sphi 0, %s17
    %s20 = sphi 0, %s18
    %s32 = sphi 0, %s34
    %s35 = sphi 0, %s32
    %s36 = sphi 0, %s35
    %s52 = sphi 0, %s36
    %s60 = sphi 0, %s62
    %s63 = sphi 0, %s60
    %s64 = sphi 0, %s63
    %s80 = sphi 0, %s64
    %s86 = sphi 0, %s88
    %s89 = sphi 0, %s86
    %s90 = sphi 0, %s89
    %s106 = sphi 0, %s90
  $region4: #{forward.2} parent=0 // loop_header_branch
    %11 = sbr.rel (%p9) target = $region8
  $region5: #{forward.2} parent=0 // loop_body
    %s13 = ssub.s32 %s8, 1
    %s14 = ssub.s32 %s8, 2
    %s21 = sadd.s32 1, %s16
    %p22 = scmp.ge.s32.totalorder %s21, 1
    %s23 = scalar_select %p22, 0, %s21
    %s24 = sadd.s32 1, %s15
    %s25 = scalar_select %p22, %s24, %s15
    %p26 = scmp.ge.s32.totalorder %s25, 2
    %s27 = scalar_select %p26, 0, %s25
    %s28 = ssub.s32 %s15, %s27
    %s29 = ssub.s32 %s16, %s23
    %s30 = sor.u32 %s28, %s29
    %p31 = scmp.eq.s32.totalorder %s30, 0
    %s33 = sadd.s32 %s32, 1
    %s34 = scalar_select %p31, %s32, %s33
    %p37 = pneg %p31
    %p38 = scmp.eq.s32.totalorder %s8, 1
    %p39 = por %p37, %p38
    %p40 = scmp.ne.s32.totalorder %s32, %s35
    %p41 = scmp.eq.s32.totalorder %s8, 0
    %p42 = por %p40, %p41
    %p43 = scmp.ne.s32.totalorder %s32, %s35
    %p44 = scmp.eq.s32.totalorder %s13, 1
    %p45 = por %p43, %p44
    %p46 = scmp.ne.s32.totalorder %s35, %s36
    %p47 = scmp.eq.s32.totalorder %s13, 0
    %p48 = por %p46, %p47
    %p49 = scmp.ne.s32.totalorder %s35, %s36
    %p50 = scmp.eq.s32.totalorder %s14, 1
    %p51 = por %p49, %p50
    %p53 = scmp.ne.s32.totalorder %s36, %s52
    %p54 = scmp.eq.s32.totalorder %s14, 0
    %p55 = por %p53, %p54
    %s56 = ssub.s32 %s15, %s27
    %s57 = ssub.s32 %s16, %s23
    %s58 = sor.u32 %s56, %s57
    %p59 = scmp.eq.s32.totalorder %s58, 0
    %s61 = sadd.s32 %s60, 1
    %s62 = scalar_select %p59, %s60, %s61
    %p65 = pneg %p59
    %p66 = scmp.eq.s32.totalorder %s8, 1
    %p67 = por %p65, %p66
    %p68 = scmp.ne.s32.totalorder %s60, %s63
    %p69 = scmp.eq.s32.totalorder %s8, 0
    %p70 = por %p68, %p69
    %p71 = scmp.ne.s32.totalorder %s60, %s63
    %p72 = scmp.eq.s32.totalorder %s13, 1
    %p73 = por %p71, %p72
    %p74 = scmp.ne.s32.totalorder %s63, %s64
    %p75 = scmp.eq.s32.totalorder %s13, 0
    %p76 = por %p74, %p75
    %p77 = scmp.ne.s32.totalorder %s63, %s64
    %p78 = scmp.eq.s32.totalorder %s14, 1
    %p79 = por %p77, %p78
    %p81 = scmp.ne.s32.totalorder %s64, %s80
    %p82 = scmp.eq.s32.totalorder %s14, 0
    %p83 = por %p81, %p82
    %s84 = ssub.s32 %s15, %s27
    %p85 = scmp.eq.s32.totalorder %s84, 0
    %s87 = sadd.s32 %s86, 1
    %s88 = scalar_select %p85, %s86, %s87
    %p91 = pneg %p85
    %p92 = scmp.eq.s32.totalorder %s8, 1
    %p93 = por %p91, %p92
    %p94 = scmp.ne.s32.totalorder %s86, %s89
    %p95 = scmp.eq.s32.totalorder %s8, 0
    %p96 = por %p94, %p95
    %p97 = scmp.ne.s32.totalorder %s86, %s89
    %p98 = scmp.eq.s32.totalorder %s13, 1
    %p99 = por %p97, %p98
    %p100 = scmp.ne.s32.totalorder %s89, %s90
    %p101 = scmp.eq.s32.totalorder %s13, 0
    %p102 = por %p100, %p101
    %p103 = scmp.ne.s32.totalorder %s89, %s90
    %p104 = scmp.eq.s32.totalorder %s14, 1
    %p105 = por %p103, %p104
    %p107 = scmp.ne.s32.totalorder %s90, %s106
    %p108 = scmp.eq.s32.totalorder %s14, 0
    %p109 = por %p107, %p108
    %p110 = scmp.le.s32.totalorder 1, %s8
    %p111 = scmp.lt.s32.totalorder %s8, 3
    %p112 = pnand %p110, %p111
    %p113 = pneg %p112
    // Predicated region
    $region9: #{forward.2} parent=5 // pred_check
      _
    $region10: #{forward.2} parent=5 // pred_check_branch
      %115 = sbr.rel (%p112) target = $region12
    $region11: #{forward.2} parent=5 // pred_region
      %s116 = ssub.s32 %s8, 1
    $region12: #{forward.2} parent=5 // pred_fallthru
      _
    %p117 = scmp.lt.s32.totalorder %s8, 2
    // Predicated region
    $region13: #{forward.2} parent=5 // pred_check
      %p118 = pneg %p117
    $region14: #{forward.2} parent=5 // pred_check_branch
      %120 = sbr.rel (%p118) target = $region16
    $region15: #{forward.2} parent=5 // pred_region
      // Predicated region
      $region17: #{forward.2} parent=15 // pred_check
        %p121 = pneg %p42
      $region18: #{forward.2} parent=15 // pred_check_branch
        %123 = sbr.rel (%p121) target = $region20
      $region19: #{forward.2} parent=15 // pred_region
        %s124 = smul.u32 2, %s16
        %p125 = scmp.lt.s32.totalorder %s15, 1
        %s126 = scalar_select %p125, %s15, 1
        %p127 = scmp.lt.s32.totalorder %s124, 1
        %s128 = scalar_select %p127, %s124, 1
        %s129 = smul.addr %s126, 4
        %s130 = sadd.s32 %s128, %s129
        %s131 = smul.addr %s130, 4
        %s132 = scalar_lea.vmem %s0, %s131
        %s133 = smul.u32 2, %s16
      $region20: #{forward.2} parent=15 // pred_fallthru
        _
      // Predicated region
      $region21: #{forward.2} parent=15 // pred_check
        %p134 = pneg %p70
      $region22: #{forward.2} parent=15 // pred_check_branch
        %136 = sbr.rel (%p134) target = $region24
      $region23: #{forward.2} parent=15 // pred_region
        %s137 = smul.u32 2, %s16
        %p138 = scmp.lt.s32.totalorder %s15, 1
        %s139 = scalar_select %p138, %s15, 1
        %p140 = scmp.lt.s32.totalorder %s137, 1
        %s141 = scalar_select %p140, %s137, 1
        %s142 = smul.addr %s139, 2
        %s143 = sadd.s32 %s141, %s142
        %s144 = smul.addr %s143, 4
        %s145 = scalar_lea.vmem %s1, %s144
        %s146 = smul.u32 2, %s16
      $region24: #{forward.2} parent=15 // pred_fallthru
        _
    $region16: #{forward.2} parent=5 // pred_fallthru
      _
    %p147 = scmp.le.s32.totalorder 1, %s8
    %p148 = scmp.lt.s32.totalorder %s8, 3
    %p149 = pnand %p147, %p148
    %p150 = pneg %p149
    // Predicated region
    $region25: #{forward.2} parent=5 // pred_check
      _
    $region26: #{forward.2} parent=5 // pred_check_branch
      %152 = sbr.rel (%p149) target = $region28
    $region27: #{forward.2} parent=5 // pred_region
      %s153 = ssub.s32 %s8, 1
      %s154 = smul.u32 2, %s18
      %p155 = scmp.lt.s32.totalorder %s17, 1
      %s156 = scalar_select %p155, %s17, 1
      %p157 = scmp.lt.s32.totalorder %s154, 1
      %s158 = scalar_select %p157, %s154, 1
      %s159 = smul.addr %s156, 4
      %s160 = sadd.s32 %s158, %s159
      %s161 = smul.addr %s160, 4
      %s162 = scalar_lea.vmem %s0, %s161
      %p163 = pneg %p48
      %p164 = pneg %p45
      %s165 = smul.u32 2, %s18
      %p166 = scmp.lt.s32.totalorder %s17, 1
      %s167 = scalar_select %p166, %s17, 1
      %p168 = scmp.lt.s32.totalorder %s165, 1
      %s169 = scalar_select %p168, %s165, 1
      %s170 = smul.addr %s167, 2
      %s171 = sadd.s32 %s169, %s170
      %s172 = smul.addr %s171, 4
      %s173 = scalar_lea.vmem %s1, %s172
      %p174 = pneg %p76
      %p175 = pneg %p73
      %p176 = pneg %p102
      %p177 = pneg %p99
      %p178 = scmp.lt.s32.totalorder %s17, 1
      %s179 = scalar_select %p178, %s17, 1
      %s180 = smul.addr %s179, 8
      %s181 = scalar_lea.vmem %s2, %s180
      %s182 = smul.u32 2, %s18
      %p183 = scmp.lt.s32.totalorder %s17, 1
      %s184 = scalar_select %p183, %s17, 1
      %p185 = scmp.lt.s32.totalorder %s182, 1
      %s186 = scalar_select %p185, %s182, 1
      %s187 = smul.addr %s184, 4
      %s188 = sadd.s32 %s186, %s187
      %s189 = smul.addr %s188, 4
      %s190 = scalar_lea.vmem %s0, %s189
      %s191 = smul.u32 2, %s18
      %s192 = smul.u32 2, %s18
      %p193 = scmp.lt.s32.totalorder %s17, 1
      %s194 = scalar_select %p193, %s17, 1
      %p195 = scmp.lt.s32.totalorder %s192, 1
      %s196 = scalar_select %p195, %s192, 1
      %s197 = smul.addr %s194, 2
      %s198 = sadd.s32 %s196, %s197
      %s199 = smul.addr %s198, 4
      %s200 = scalar_lea.vmem %s1, %s199
      %s201 = smul.u32 2, %s18
      %p202 = scmp.lt.s32.totalorder %s17, 1
      %s203 = scalar_select %p202, %s17, 1
      %s204 = smul.addr %s203, 8
      %s205 = scalar_lea.vmem %s2, %s204
      %p206 = scmp.eq.s32.totalorder %s18, 0
      // Predicated region
      $region29: #{forward.2} parent=27 // pred_check
        %p207 = pneg %p206
      $region30: #{forward.2} parent=27 // pred_check_branch
        %209 = sbr.rel (%p207) target = $region32
      $region31: #{forward.2} parent=27 // pred_region
        %210 = vst [vmem:[#allocation2] sm:$0xff] 0.0
        %211 = vst [vmem:[#allocation2 + $0x8] sm:$0xff] 0.0
      $region32: #{forward.2} parent=27 // pred_fallthru
        _
      %v212 = vld [vmem:[%s190] sm:$0xff]
      %v213 = vunpack.c.l.bf16 %v212
      %v214 = vunpack.c.h.bf16 %v212
      %v215 = vld [vmem:[%s190] sm:$0x88]
      %v216 = vld [vmem:[%s190 + $0x8] sm:$0x11]
      %v217 = vunpack.c.l.bf16 %v215
      %v218 = vunpack.c.h.bf16 %v215
      %v219 = vunpack.c.l.bf16 %v216
      %v220 = vunpack.c.h.bf16 %v216
      %v221 = vld [vmem:[%s190 + $0x8] sm:$0x22]
      %v222 = vunpack.c.l.bf16 %v221
      %v223 = vunpack.c.h.bf16 %v221
      %v224 = vsub.f32 0.0, %v213
      %v225 = vsub.f32 0.0, %v214
      %v226 = vmul.f32 %v224, 1.442695
      %v227 = vpow.pop %v226
      %v228 = vmul.f32 %v225, 1.442695
      %v229 = vpow.pop %v228
      %v230 = vadd.f32 %v227, 1.0
      %v231 = vadd.f32 %v229, 1.0
      %v232 = vrcp.pop %v230
      %v233 = vmul.f32 1.0, %v232
      %v234 = vrcp.pop %v231
      %v235 = vmul.f32 1.0, %v234
      %v236 = vsub.f32 0.0, %v217
      %v237 = vsub.f32 0.0, %v218
      %v238 = vsub.f32 0.0, %v219
      %v239 = vsub.f32 0.0, %v220
      %v240 = vmul.f32 %v236, 1.442695
      %v241 = vpow.pop %v240
      %v242 = vmul.f32 %v237, 1.442695
      %v243 = vpow.pop %v242
      %v244 = vmul.f32 %v238, 1.442695
      %v245 = vpow.pop %v244
      %v246 = vmul.f32 %v239, 1.442695
      %v247 = vpow.pop %v246
      %v248 = vadd.f32 %v241, 1.0
      %v249 = vadd.f32 %v243, 1.0
      %v250 = vadd.f32 %v245, 1.0
      %v251 = vadd.f32 %v247, 1.0
      %v252 = vrcp.pop %v248
      %v253 = vmul.f32 1.0, %v252
      %v254 = vrcp.pop %v249
      %v255 = vmul.f32 1.0, %v254
      %v256 = vrcp.pop %v250
      %v257 = vmul.f32 1.0, %v256
      %v258 = vrcp.pop %v251
      %v259 = vmul.f32 1.0, %v258
      %v260 = vsub.f32 0.0, %v222
      %v261 = vsub.f32 0.0, %v223
      %v262 = vmul.f32 %v260, 1.442695
      %v263 = vpow.pop %v262
      %v264 = vmul.f32 %v261, 1.442695
      %v265 = vpow.pop %v264
      %v266 = vadd.f32 %v263, 1.0
      %v267 = vadd.f32 %v265, 1.0
      %v268 = vrcp.pop %v266
      %v269 = vmul.f32 1.0, %v268
      %v270 = vrcp.pop %v267
      %v271 = vmul.f32 1.0, %v270
      %v272 = vld [vmem:[%s200] ss:$4 sm:$0x3]
      %s273 = scalar_lea.vmem %s200, 1
      %v274 = vld [vmem:[%s273] ss:$4 sm:$0x3]
      %s275 = scalar_lea.vmem %s200, 2
      %v276 = vld [vmem:[%s275] ss:$4 sm:$0x3]
      %vm277 = vcmp.ne.s32.totalorder %v272, 255
      %v278 = vsel %vm277, 1, 0
      %v279 = vcvt.s32.f32 %v278
      %vm280 = vcmp.ne.s32.totalorder %v274, 255
      %v281 = vsel %vm280, 1, 0
      %v282 = vcvt.s32.f32 %v281
      %vm283 = vcmp.ne.s32.totalorder %v276, 255
      %v284 = vsel %vm283, 1, 0
      %v285 = vcvt.s32.f32 %v284
      %v286 = vlaneseq
      %v287 = vshrl.u32 %v286, 7
      %v288 = vlaneseq
      %v289 = vshrl.u32 %v288, 7
      %v290 = vsub.s32 0, %v289
      %v291 = vrot.slane %v272, %v290
      %v292 = vlaneseq
      %v293 = vshrl.u32 %v292, 7
      %v294 = vsub.s32 1, %v293
      %v295 = vrot.slane %v272, %v294
      %vm296 = vcmp.eq.s32.totalorder %v291, %v287
      %vm297 = vcmp.eq.s32.totalorder %v295, %v287
      %v298 = vlaneseq
      %v299 = vshrl.u32 %v298, 7
      %v300 = vsub.s32 0, %v299
      %v301 = vrot.slane %v274, %v300
      %v302 = vlaneseq
      %v303 = vshrl.u32 %v302, 7
      %v304 = vsub.s32 1, %v303
      %v305 = vrot.slane %v274, %v304
      %vm306 = vcmp.eq.s32.totalorder %v301, %v287
      %vm307 = vcmp.eq.s32.totalorder %v305, %v287
      %v308 = vlaneseq
      %v309 = vshrl.u32 %v308, 7
      %v310 = vsub.s32 0, %v309
      %v311 = vrot.slane %v276, %v310
      %v312 = vlaneseq
      %v313 = vshrl.u32 %v312, 7
      %v314 = vsub.s32 1, %v313
      %v315 = vrot.slane %v276, %v314
      %vm316 = vcmp.eq.s32.totalorder %v311, %v287
      %vm317 = vcmp.eq.s32.totalorder %v315, %v287
      %v320 = vrot.slane %v233, 1
      %v321 = vrot.slane %v235, 1
      %v324 = vmax.f32 %v253, %v320
      %v325 = vmax.f32 %v255, %v321
      %v326 = vrot.slane %v233, 2
      %v327 = vrot.slane %v235, 2
      %v330 = vmax.f32 %v324, %v326
      %v331 = vmax.f32 %v325, %v327
      %v334 = vcombine.high %v330, %v331
      %v336 = vunpack.c.l.s4 1966171168
      %v337 = vunpack.c.0.s8 %v336
      %v338 = vlaneseq
      %v339 = vshrl.u32 %v338, 7
      %v340 = vsub.s32 %v337, %v339
      %v341 = vrot.slane %v334, %v340
      %v342 = vcombine.high %v341, %v341
      %v344 = vunpack.c.l.s4 1966171168
      %v345 = vunpack.c.0.s8 %v344
      %v346 = vlaneseq
      %v347 = vshrl.u32 %v346, 7
      %v348 = vsub.s32 %v345, %v347
      %v349 = vrot.slane %v342, %v348
      %v350 = vcombine.high %v349, %v349
      %v352 = vlaneseq
      %vm353 = vcmp.ge.s32.totalorder %v352, 0
      %vm354 = vcmp.lt.s32.totalorder %v352, 256
      %vm355 = vmand %vm353, %vm354
      %356 = vst.msk [vmem:[#allocation3] ss:$8 sm:$0x3] %vm355, %v350
      %357 = vst.msk [vmem:[#allocation3] ss:$8 sm:$0x0] %vm355, %v350
      %v358 = vmax.f32 %v257, %v326
      %v359 = vmax.f32 %v259, %v327
      %v360 = vrot.slane %v233, 3
      %v361 = vrot.slane %v235, 3
      %v364 = vmax.f32 %v358, %v360
      %v365 = vmax.f32 %v359, %v361
      %v366 = vrot.slane %v233, 4
      %v367 = vrot.slane %v235, 4
      %v370 = vmax.f32 %v364, %v366
      %v371 = vmax.f32 %v365, %v367
      %v374 = vcombine.low %v370, %v371
      %v376 = vunpack.c.l.s4 1966171168
      %v377 = vunpack.c.0.s8 %v376
      %v378 = vlaneseq
      %v379 = vshrl.u32 %v378, 7
      %v380 = vsub.s32 %v377, %v379
      %v381 = vrot.slane %v374, %v380
      %v383 = vunpack.c.l.s4 1966171168
      %v384 = vunpack.c.0.s8 %v383
      %v385 = vlaneseq
      %v386 = vshrl.u32 %v385, 7
      %v387 = vsub.s32 %v384, %v386
      %v388 = vrot.slane %v381, %v387
      %s390 = scalar_lea.vmem [#allocation3], 1
      %391 = vst.msk [vmem:[%s390] ss:$8 sm:$0x3] %vm355, %v388
      %392 = vst.msk [vmem:[%s390] ss:$8 sm:$0x0] %vm355, %v388
      %v393 = vmax.f32 %v257, %v366
      %v394 = vmax.f32 %v259, %v367
      %v395 = vrot.slane %v233, 5
      %v396 = vrot.slane %v235, 5
      %v399 = vmax.f32 %v393, %v395
      %v400 = vmax.f32 %v394, %v396
      %v403 = vcombine.low %v399, %v400
      %v405 = vunpack.c.l.s4 1966171168
      %v406 = vunpack.c.0.s8 %v405
      %v407 = vlaneseq
      %v408 = vshrl.u32 %v407, 7
      %v409 = vsub.s32 %v406, %v408
      %v410 = vrot.slane %v403, %v409
      %v411 = vcombine.high %v410, %v410
      %v413 = vunpack.c.l.s4 1966171168
      %v414 = vunpack.c.0.s8 %v413
      %v415 = vlaneseq
      %v416 = vshrl.u32 %v415, 7
      %v417 = vsub.s32 %v414, %v416
      %v418 = vrot.slane %v411, %v417
      %s420 = scalar_lea.vmem [#allocation3], 2
      %421 = vst.msk [vmem:[%s420] ss:$8 sm:$0x3] %vm355, %v418
      %422 = vst.msk [vmem:[%s420] ss:$8 sm:$0x0] %vm355, %v418
      %v423 = vrot.slane %v330, 5
      %v424 = vrot.slane %v331, 5
      %v427 = vmax.f32 %v269, %v423
      %v428 = vmax.f32 %v271, %v424
      %v429 = vrot.slane %v370, 6
      %v430 = vrot.slane %v371, 6
      %v433 = vmax.f32 %v427, %v429
      %v434 = vmax.f32 %v428, %v430
      %v437 = vcombine.low %v433, %v434
      %v439 = vunpack.c.l.s4 1966171168
      %v440 = vunpack.c.0.s8 %v439
      %v441 = vlaneseq
      %v442 = vshrl.u32 %v441, 7
      %v443 = vsub.s32 %v440, %v442
      %v444 = vrot.slane %v437, %v443
      %v446 = vunpack.c.l.s4 1966171168
      %v447 = vunpack.c.0.s8 %v446
      %v448 = vlaneseq
      %v449 = vshrl.u32 %v448, 7
      %v450 = vsub.s32 %v447, %v449
      %v451 = vrot.slane %v444, %v450
      %v452 = vcombine.high %v451, %v451
      %s454 = scalar_lea.vmem [#allocation3], 16
      %455 = vst.msk [vmem:[%s454] ss:$8 sm:$0x3] %vm355, %v452
      %456 = vst.msk [vmem:[%s454] ss:$8 sm:$0x0] %vm355, %v452
      %v457 = vrot.slane %v370, 5
      %v458 = vrot.slane %v371, 5
      %v461 = vmax.f32 %v269, %v457
      %v462 = vmax.f32 %v271, %v458
      %v463 = vrot.slane %v399, 6
      %v464 = vrot.slane %v400, 6
      %v467 = vmax.f32 %v461, %v463
      %v468 = vmax.f32 %v462, %v464
      %v471 = vcombine.low %v467, %v468
      %v473 = vunpack.c.l.s4 1966171168
      %v474 = vunpack.c.0.s8 %v473
      %v475 = vlaneseq
      %v476 = vshrl.u32 %v475, 7
      %v477 = vsub.s32 %v474, %v476
      %v478 = vrot.slane %v471, %v477
      %v479 = vcombine.high %v478, %v478
      %v481 = vunpack.c.l.s4 1966171168
      %v482 = vunpack.c.0.s8 %v481
      %v483 = vlaneseq
      %v484 = vshrl.u32 %v483, 7
      %v485 = vsub.s32 %v482, %v484
      %v486 = vrot.slane %v479, %v485
      %v487 = vcombine.high %v486, %v486
      %s489 = scalar_lea.vmem [#allocation3], 17
      %490 = vst.msk [vmem:[%s489] ss:$8 sm:$0x3] %vm355, %v487
      %491 = vst.msk [vmem:[%s489] ss:$8 sm:$0x0] %vm355, %v487
      %v494 = vrot.slane %v269, 3
      %v495 = vrot.slane %v271, 3
      %v498 = vmin.f32 %v253, %v494
      %v499 = vmin.f32 %v255, %v495
      %v502 = vcombine.high %v498, %v499
      %v504 = vunpack.c.l.s4 1966171168
      %v505 = vunpack.c.0.s8 %v504
      %v506 = vlaneseq
      %v507 = vshrl.u32 %v506, 7
      %v508 = vsub.s32 %v505, %v507
      %v509 = vrot.slane %v502, %v508
      %v510 = vcombine.high %v509, %v509
      %v512 = vunpack.c.l.s4 1966171168
      %v513 = vunpack.c.0.s8 %v512
      %v514 = vlaneseq
      %v515 = vshrl.u32 %v514, 7
      %v516 = vsub.s32 %v513, %v515
      %v517 = vrot.slane %v510, %v516
      %v518 = vcombine.high %v517, %v517
      %s520 = scalar_lea.vmem [#allocation3], 32
      %521 = vst.msk [vmem:[%s520] ss:$8 sm:$0x3] %vm355, %v518
      %522 = vst.msk [vmem:[%s520] ss:$8 sm:$0x0] %vm355, %v518
      %v523 = vrot.slane %v269, 2
      %v524 = vrot.slane %v271, 2
      %v527 = vmin.f32 %v257, %v523
      %v528 = vmin.f32 %v259, %v524
      %v529 = vmin.f32 %v527, %v494
      %v530 = vmin.f32 %v528, %v495
      %v533 = vcombine.low %v529, %v530
      %v535 = vunpack.c.l.s4 1966171168
      %v536 = vunpack.c.0.s8 %v535
      %v537 = vlaneseq
      %v538 = vshrl.u32 %v537, 7
      %v539 = vsub.s32 %v536, %v538
      %v540 = vrot.slane %v533, %v539
      %v542 = vunpack.c.l.s4 1966171168
      %v543 = vunpack.c.0.s8 %v542
      %v544 = vlaneseq
      %v545 = vshrl.u32 %v544, 7
      %v546 = vsub.s32 %v543, %v545
      %v547 = vrot.slane %v540, %v546
      %s549 = scalar_lea.vmem [#allocation3], 33
      %550 = vst.msk [vmem:[%s549] ss:$8 sm:$0x3] %vm355, %v547
      %551 = vst.msk [vmem:[%s549] ss:$8 sm:$0x0] %vm355, %v547
      %v554 = vcombine.low %v527, %v528
      %v556 = vunpack.c.l.s4 1966171168
      %v557 = vunpack.c.0.s8 %v556
      %v558 = vlaneseq
      %v559 = vshrl.u32 %v558, 7
      %v560 = vsub.s32 %v557, %v559
      %v561 = vrot.slane %v554, %v560
      %v562 = vcombine.high %v561, %v561
      %v564 = vunpack.c.l.s4 1966171168
      %v565 = vunpack.c.0.s8 %v564
      %v566 = vlaneseq
      %v567 = vshrl.u32 %v566, 7
      %v568 = vsub.s32 %v565, %v567
      %v569 = vrot.slane %v562, %v568
      %s571 = scalar_lea.vmem [#allocation3], 34
      %572 = vst.msk [vmem:[%s571] ss:$8 sm:$0x3] %vm355, %v569
      %573 = vst.msk [vmem:[%s571] ss:$8 sm:$0x0] %vm355, %v569
      %v574 = vld [vmem:[#allocation3] sm:$0x7]
      %v575 = vld [vmem:[#allocation3 + $0x8] sm:$0x7]
      %v576 = vld [vmem:[#allocation3 + $0x10] sm:$0x3]
      %v577 = vld [vmem:[#allocation3 + $0x18] sm:$0x3]
      %v578 = vld [vmem:[#allocation3 + $0x20] sm:$0x7]
      %v579 = vld [vmem:[#allocation3 + $0x28] sm:$0x7]
      %v580 = vsel %vm296, %v233, 0.0
      %v581 = vsel %vm297, %v235, 0.0
      %vm582 = vcmask 1046528
      %v583 = vsel %vm582, %v580, 0.0
      %v584 = vrot.slane %v583, 4
      %v585 = vadd.f32 %v583, %v584
      %v586 = vrot.slane %v585, 2
      %v587 = vadd.f32 %v585, %v586
      %v588 = vrot.slane %v587, 1
      %v589 = vadd.f32 %v587, %v588
      %v590 = vsel %vm582, %v581, 0.0
      %v591 = vrot.slane %v590, 4
      %v592 = vadd.f32 %v590, %v591
      %v593 = vrot.slane %v592, 2
      %v594 = vadd.f32 %v592, %v593
      %v595 = vrot.slane %v594, 1
      %v596 = vadd.f32 %v594, %v595
      %vm601 = vcmask 1040384
      %v602 = vrot.slane %v253, 7
      %v603 = vrot.slane %v257, 7
      %v604 = vsel %vm601, %v602, %v603
      %v605 = vrot.slane %v255, 7
      %v606 = vrot.slane %v259, 7
      %v607 = vsel %vm601, %v605, %v606
      %v610 = vsel %vm306, %v604, 0.0
      %v611 = vsel %vm307, %v607, 0.0
      %vm612 = vcmask 1042432
      %v613 = vsel %vm612, %v610, 0.0
      %v614 = vrot.slane %v613, 4
      %v615 = vadd.f32 %v613, %v614
      %v616 = vrot.slane %v615, 2
      %v617 = vadd.f32 %v615, %v616
      %v618 = vrot.slane %v617, 1
      %v619 = vadd.f32 %v617, %v618
      %v620 = vsel %vm612, %v611, 0.0
      %v621 = vrot.slane %v620, 4
      %v622 = vadd.f32 %v620, %v621
      %v623 = vrot.slane %v622, 2
      %v624 = vadd.f32 %v622, %v623
      %v625 = vrot.slane %v624, 1
      %v626 = vadd.f32 %v624, %v625
      %v627 = vmin.f32 %v589, %v619
      %v628 = vmin.f32 %v596, %v626
      %v629 = vadd.f32 %v627, 1e-06
      %v630 = vadd.f32 %v628, 1e-06
      %v631 = vlog2.pop %v629
      %v632 = vmul.f32 %v631, 0.6931472
      %v633 = vlog2.pop %v630
      %v634 = vmul.f32 %v633, 0.6931472
      %v635 = vsub.f32 0.0, %v632
      %v636 = vsub.f32 0.0, %v634
      %v637 = vsub.f32 1.0, %v233
      %v638 = vsub.f32 1.0, %v235
      %v639 = vadd.f32 %v637, 1e-06
      %v640 = vadd.f32 %v638, 1e-06
      %v641 = vlog2.pop %v639
      %v642 = vmul.f32 %v641, 0.6931472
      %v643 = vlog2.pop %v640
      %v644 = vmul.f32 %v643, 0.6931472
      %v645 = vsub.f32 0.0, %v642
      %v646 = vsub.f32 0.0, %v644
      %v647 = vsel %vm296, 0.0, %v645
      %v648 = vsel %vm297, 0.0, %v646
      %v649 = vsel %vm582, %v647, 0.0
      %v650 = vrot.slane %v649, 4
      %v651 = vadd.f32 %v649, %v650
      %v652 = vrot.slane %v651, 2
      %v653 = vadd.f32 %v651, %v652
      %v654 = vrot.slane %v653, 1
      %v655 = vadd.f32 %v653, %v654
      %v656 = vsel %vm582, %v648, 0.0
      %v657 = vrot.slane %v656, 4
      %v658 = vadd.f32 %v656, %v657
      %v659 = vrot.slane %v658, 2
      %v660 = vadd.f32 %v658, %v659
      %v661 = vrot.slane %v660, 1
      %v662 = vadd.f32 %v660, %v661
      %v663 = vadd.f32 %v635, %v655
      %v664 = vadd.f32 %v636, %v662
      %v666 = vlaneseq
      %v667 = vshrl.u32 %v666, 7
      %v668 = vsub.s32 0, %v667
      %v669 = vrot.slane %v279, %v668
      %v670 = vlaneseq
      %v671 = vshrl.u32 %v670, 7
      %v672 = vsub.s32 1, %v671
      %v673 = vrot.slane %v279, %v672
      %v676 = vmul.f32 %v663, %v669
      %v677 = vmul.f32 %v664, %v673
      %v678 = vsub.f32 1.0, %v574
      %v679 = vsub.f32 1.0, %v575
      %v680 = vsel %vm306, %v578, %v678
      %v681 = vsel %vm307, %v579, %v679
      %v682 = vadd.f32 %v680, 1e-06
      %v683 = vadd.f32 %v681, 1e-06
      %v684 = vlog2.pop %v682
      %v685 = vmul.f32 %v684, 0.6931472
      %v686 = vlog2.pop %v683
      %v687 = vmul.f32 %v686, 0.6931472
      %v688 = vsub.f32 0.0, %v685
      %v689 = vsub.f32 0.0, %v687
      %v690 = vsel %vm612, %v688, 0.0
      %v691 = vrot.slane %v690, 4
      %v692 = vadd.f32 %v690, %v691
      %v693 = vrot.slane %v692, 2
      %v694 = vadd.f32 %v692, %v693
      %v695 = vrot.slane %v694, 1
      %v696 = vadd.f32 %v694, %v695
      %v697 = vsel %vm612, %v689, 0.0
      %v698 = vrot.slane %v697, 4
      %v699 = vadd.f32 %v697, %v698
      %v700 = vrot.slane %v699, 2
      %v701 = vadd.f32 %v699, %v700
      %v702 = vrot.slane %v701, 1
      %v703 = vadd.f32 %v701, %v702
      %v705 = vlaneseq
      %v706 = vshrl.u32 %v705, 7
      %v707 = vsub.s32 0, %v706
      %v708 = vrot.slane %v282, %v707
      %v709 = vlaneseq
      %v710 = vshrl.u32 %v709, 7
      %v711 = vsub.s32 1, %v710
      %v712 = vrot.slane %v282, %v711
      %v715 = vmul.f32 %v696, %v708
      %v716 = vmul.f32 %v703, %v712
      %v717 = vsub.f32 1.0, %v576
      %v718 = vsub.f32 1.0, %v577
      %v719 = vsel %vm316, %v523, %v717
      %v720 = vsel %vm317, %v524, %v718
      %v721 = vadd.f32 %v719, 1e-06
      %v722 = vadd.f32 %v720, 1e-06
      %v723 = vlog2.pop %v721
      %v724 = vmul.f32 %v723, 0.6931472
      %v725 = vlog2.pop %v722
      %v726 = vmul.f32 %v725, 0.6931472
      %v727 = vsub.f32 0.0, %v724
      %v728 = vsub.f32 0.0, %v726
      %vm729 = vcmask 1041408
      %v730 = vsel %vm729, %v727, 0.0
      %v731 = vrot.slane %v730, 4
      %v732 = vadd.f32 %v730, %v731
      %v733 = vrot.slane %v732, 2
      %v734 = vadd.f32 %v732, %v733
      %v735 = vrot.slane %v734, 1
      %v736 = vadd.f32 %v734, %v735
      %v737 = vsel %vm729, %v728, 0.0
      %v738 = vrot.slane %v737, 4
      %v739 = vadd.f32 %v737, %v738
      %v740 = vrot.slane %v739, 2
      %v741 = vadd.f32 %v739, %v740
      %v742 = vrot.slane %v741, 1
      %v743 = vadd.f32 %v741, %v742
      %v745 = vlaneseq
      %v746 = vshrl.u32 %v745, 7
      %v747 = vsub.s32 0, %v746
      %v748 = vrot.slane %v285, %v747
      %v749 = vlaneseq
      %v750 = vshrl.u32 %v749, 7
      %v751 = vsub.s32 1, %v750
      %v752 = vrot.slane %v285, %v751
      %v755 = vmul.f32 %v736, %v748
      %v756 = vmul.f32 %v743, %v752
      %v757 = vsel %vm582, %v213, -inf
      %v758 = vrot.slane %v757, 4
      %v759 = vmax.f32 %v757, %v758
      %v760 = vrot.slane %v759, 2
      %v761 = vmax.f32 %v759, %v760
      %v762 = vrot.slane %v761, 1
      %v763 = vmax.f32 %v761, %v762
      %v764 = vsel %vm582, %v214, -inf
      %v765 = vrot.slane %v764, 4
      %v766 = vmax.f32 %v764, %v765
      %v767 = vrot.slane %v766, 2
      %v768 = vmax.f32 %v766, %v767
      %v769 = vrot.slane %v768, 1
      %v770 = vmax.f32 %v768, %v769
      %v771 = vsub.f32 %v213, %v763
      %v772 = vsub.f32 %v214, %v770
      %v773 = vmul.f32 %v771, 1.442695
      %v774 = vpow.pop %v773
      %v775 = vmul.f32 %v772, 1.442695
      %v776 = vpow.pop %v775
      %v777 = vsel %vm582, %v774, 0.0
      %v778 = vrot.slane %v777, 4
      %v779 = vadd.f32 %v777, %v778
      %v780 = vrot.slane %v779, 2
      %v781 = vadd.f32 %v779, %v780
      %v782 = vrot.slane %v781, 1
      %v783 = vadd.f32 %v781, %v782
      %v784 = vsel %vm582, %v776, 0.0
      %v785 = vrot.slane %v784, 4
      %v786 = vadd.f32 %v784, %v785
      %v787 = vrot.slane %v786, 2
      %v788 = vadd.f32 %v786, %v787
      %v789 = vrot.slane %v788, 1
      %v790 = vadd.f32 %v788, %v789
      %v791 = vlog2.pop %v783
      %v792 = vmul.f32 %v791, 0.6931472
      %v793 = vlog2.pop %v790
      %v794 = vmul.f32 %v793, 0.6931472
      %v795 = vadd.f32 %v763, %v792
      %v796 = vadd.f32 %v770, %v794
      %v797 = vsel %vm296, %v213, 0.0
      %v798 = vsel %vm297, %v214, 0.0
      %v799 = vsel %vm582, %v797, 0.0
      %v800 = vrot.slane %v799, 4
      %v801 = vadd.f32 %v799, %v800
      %v802 = vrot.slane %v801, 2
      %v803 = vadd.f32 %v801, %v802
      %v804 = vrot.slane %v803, 1
      %v805 = vadd.f32 %v803, %v804
      %v806 = vsel %vm582, %v798, 0.0
      %v807 = vrot.slane %v806, 4
      %v808 = vadd.f32 %v806, %v807
      %v809 = vrot.slane %v808, 2
      %v810 = vadd.f32 %v808, %v809
      %v811 = vrot.slane %v810, 1
      %v812 = vadd.f32 %v810, %v811
      %v813 = vsub.f32 %v795, %v805
      %v814 = vsub.f32 %v796, %v812
      %v815 = vmul.f32 %v813, %v669
      %v816 = vmul.f32 %v814, %v673
      %vm817 = vcmask 1047559
      %v818 = vsel %vm817, %v217, -inf
      %v819 = vsel %vm729, %v219, -inf
      %v820 = vmax.f32 %v818, %v819
      %v821 = vrot.slane %v820, 4
      %v822 = vmax.f32 %v820, %v821
      %v823 = vrot.slane %v822, 2
      %v824 = vmax.f32 %v822, %v823
      %v825 = vrot.slane %v824, 1
      %v826 = vmax.f32 %v824, %v825
      %v827 = vsel %vm817, %v218, -inf
      %v828 = vsel %vm729, %v220, -inf
      %v829 = vmax.f32 %v827, %v828
      %v830 = vrot.slane %v829, 4
      %v831 = vmax.f32 %v829, %v830
      %v832 = vrot.slane %v831, 2
      %v833 = vmax.f32 %v831, %v832
      %v834 = vrot.slane %v833, 1
      %v835 = vmax.f32 %v833, %v834
      %v836 = vsub.f32 %v217, %v826
      %v837 = vsub.f32 %v218, %v835
      %v838 = vsub.f32 %v219, %v826
      %v839 = vsub.f32 %v220, %v835
      %v840 = vmul.f32 %v836, 1.442695
      %v841 = vpow.pop %v840
      %v842 = vmul.f32 %v837, 1.442695
      %v843 = vpow.pop %v842
      %v844 = vmul.f32 %v838, 1.442695
      %v845 = vpow.pop %v844
      %v846 = vmul.f32 %v839, 1.442695
      %v847 = vpow.pop %v846
      %v852 = vrot.slane %v841, 7
      %v853 = vrot.slane %v845, 7
      %v854 = vsel %vm601, %v852, %v853
      %v855 = vrot.slane %v843, 7
      %v856 = vrot.slane %v847, 7
      %v857 = vsel %vm601, %v855, %v856
      %v860 = vsel %vm612, %v854, 0.0
      %v861 = vrot.slane %v860, 4
      %v862 = vadd.f32 %v860, %v861
      %v863 = vrot.slane %v862, 2
      %v864 = vadd.f32 %v862, %v863
      %v865 = vrot.slane %v864, 1
      %v866 = vadd.f32 %v864, %v865
      %v867 = vsel %vm612, %v857, 0.0
      %v868 = vrot.slane %v867, 4
      %v869 = vadd.f32 %v867, %v868
      %v870 = vrot.slane %v869, 2
      %v871 = vadd.f32 %v869, %v870
      %v872 = vrot.slane %v871, 1
      %v873 = vadd.f32 %v871, %v872
      %v874 = vlog2.pop %v866
      %v875 = vmul.f32 %v874, 0.6931472
      %v876 = vlog2.pop %v873
      %v877 = vmul.f32 %v876, 0.6931472
      %v878 = vadd.f32 %v826, %v875
      %v879 = vadd.f32 %v835, %v877
      %v884 = vrot.slane %v217, 7
      %v885 = vrot.slane %v219, 7
      %v886 = vsel %vm601, %v884, %v885
      %v887 = vrot.slane %v218, 7
      %v888 = vrot.slane %v220, 7
      %v889 = vsel %vm601, %v887, %v888
      %v892 = vsel %vm306, %v886, 0.0
      %v893 = vsel %vm307, %v889, 0.0
      %v894 = vsel %vm612, %v892, 0.0
      %v895 = vrot.slane %v894, 4
      %v896 = vadd.f32 %v894, %v895
      %v897 = vrot.slane %v896, 2
      %v898 = vadd.f32 %v896, %v897
      %v899 = vrot.slane %v898, 1
      %v900 = vadd.f32 %v898, %v899
      %v901 = vsel %vm612, %v893, 0.0
      %v902 = vrot.slane %v901, 4
      %v903 = vadd.f32 %v901, %v902
      %v904 = vrot.slane %v903, 2
      %v905 = vadd.f32 %v903, %v904
      %v906 = vrot.slane %v905, 1
      %v907 = vadd.f32 %v905, %v906
      %v908 = vsub.f32 %v878, %v900
      %v909 = vsub.f32 %v879, %v907
      %v910 = vmul.f32 %v908, %v708
      %v911 = vmul.f32 %v909, %v712
      %vm912 = vcmask 1043458
      %v913 = vsel %vm912, %v222, -inf
      %v914 = vrot.slane %v913, 4
      %v915 = vmax.f32 %v913, %v914
      %v916 = vrot.slane %v915, 2
      %v917 = vmax.f32 %v915, %v916
      %v918 = vrot.slane %v917, 1
      %v919 = vmax.f32 %v917, %v918
      %v920 = vsel %vm912, %v223, -inf
      %v921 = vrot.slane %v920, 4
      %v922 = vmax.f32 %v920, %v921
      %v923 = vrot.slane %v922, 2
      %v924 = vmax.f32 %v922, %v923
      %v925 = vrot.slane %v924, 1
      %v926 = vmax.f32 %v924, %v925
      %v927 = vsub.f32 %v222, %v919
      %v928 = vsub.f32 %v223, %v926
      %v929 = vmul.f32 %v927, 1.442695
      %v930 = vpow.pop %v929
      %v931 = vmul.f32 %v928, 1.442695
      %v932 = vpow.pop %v931
      %v935 = vrot.slane %v930, 2
      %v936 = vrot.slane %v932, 2
      %v939 = vsel %vm729, %v935, 0.0
      %v940 = vrot.slane %v939, 4
      %v941 = vadd.f32 %v939, %v940
      %v942 = vrot.slane %v941, 2
      %v943 = vadd.f32 %v941, %v942
      %v944 = vrot.slane %v943, 1
      %v945 = vadd.f32 %v943, %v944
      %v946 = vsel %vm729, %v936, 0.0
      %v947 = vrot.slane %v946, 4
      %v948 = vadd.f32 %v946, %v947
      %v949 = vrot.slane %v948, 2
      %v950 = vadd.f32 %v948, %v949
      %v951 = vrot.slane %v950, 1
      %v952 = vadd.f32 %v950, %v951
      %v953 = vlog2.pop %v945
      %v954 = vmul.f32 %v953, 0.6931472
      %v955 = vlog2.pop %v952
      %v956 = vmul.f32 %v955, 0.6931472
      %v957 = vadd.f32 %v919, %v954
      %v958 = vadd.f32 %v926, %v956
      %v961 = vrot.slane %v222, 2
      %v962 = vrot.slane %v223, 2
      %v965 = vsel %vm316, %v961, 0.0
      %v966 = vsel %vm317, %v962, 0.0
      %v967 = vsel %vm729, %v965, 0.0
      %v968 = vrot.slane %v967, 4
      %v969 = vadd.f32 %v967, %v968
      %v970 = vrot.slane %v969, 2
      %v971 = vadd.f32 %v969, %v970
      %v972 = vrot.slane %v971, 1
      %v973 = vadd.f32 %v971, %v972
      %v974 = vsel %vm729, %v966, 0.0
      %v975 = vrot.slane %v974, 4
      %v976 = vadd.f32 %v974, %v975
      %v977 = vrot.slane %v976, 2
      %v978 = vadd.f32 %v976, %v977
      %v979 = vrot.slane %v978, 1
      %v980 = vadd.f32 %v978, %v979
      %v981 = vsub.f32 %v957, %v973
      %v982 = vsub.f32 %v958, %v980
      %v983 = vmul.f32 %v981, %v748
      %v984 = vmul.f32 %v982, %v752
      %v985 = vld [vmem:[#allocation2] ss:$8 sm:$0x3]
      %v988 = vcombine.low %v676, %v677
      %v990 = vunpack.c.l.s4 1966171168
      %v991 = vunpack.c.0.s8 %v990
      %v992 = vlaneseq
      %v993 = vshrl.u32 %v992, 7
      %v994 = vsub.s32 %v991, %v993
      %v995 = vrot.slane %v988, %v994
      %v997 = vunpack.c.l.s4 1966171168
      %v998 = vunpack.c.0.s8 %v997
      %v999 = vlaneseq
      %v1000 = vshrl.u32 %v999, 7
      %v1001 = vsub.s32 %v998, %v1000
      %v1002 = vrot.slane %v995, %v1001
      %v1004 = vadd.f32 %v985, %v1002
      %1005 = vst.msk [vmem:[#allocation2] ss:$8 sm:$0x3] %vm355, %v1004
      %1006 = vst.msk [vmem:[#allocation2] ss:$8 sm:$0x0] %vm355, %v1004
      %s1007 = scalar_lea.vmem [#allocation2], 1
      %v1008 = vld [vmem:[%s1007] ss:$8 sm:$0x3]
      %v1011 = vcombine.low %v715, %v716
      %v1013 = vunpack.c.l.s4 1966171168
      %v1014 = vunpack.c.0.s8 %v1013
      %v1015 = vlaneseq
      %v1016 = vshrl.u32 %v1015, 7
      %v1017 = vsub.s32 %v1014, %v1016
      %v1018 = vrot.slane %v1011, %v1017
      %v1020 = vunpack.c.l.s4 1966171168
      %v1021 = vunpack.c.0.s8 %v1020
      %v1022 = vlaneseq
      %v1023 = vshrl.u32 %v1022, 7
      %v1024 = vsub.s32 %v1021, %v1023
      %v1025 = vrot.slane %v1018, %v1024
      %v1027 = vadd.f32 %v1008, %v1025
      %1028 = vst.msk [vmem:[%s1007] ss:$8 sm:$0x3] %vm355, %v1027
      %1029 = vst.msk [vmem:[%s1007] ss:$8 sm:$0x0] %vm355, %v1027
      %s1030 = scalar_lea.vmem [#allocation2], 2
      %v1031 = vld [vmem:[%s1030] ss:$8 sm:$0x3]
      %v1034 = vcombine.low %v755, %v756
      %v1036 = vunpack.c.l.s4 1966171168
      %v1037 = vunpack.c.0.s8 %v1036
      %v1038 = vlaneseq
      %v1039 = vshrl.u32 %v1038, 7
      %v1040 = vsub.s32 %v1037, %v1039
      %v1041 = vrot.slane %v1034, %v1040
      %v1043 = vunpack.c.l.s4 1966171168
      %v1044 = vunpack.c.0.s8 %v1043
      %v1045 = vlaneseq
      %v1046 = vshrl.u32 %v1045, 7
      %v1047 = vsub.s32 %v1044, %v1046
      %v1048 = vrot.slane %v1041, %v1047
      %v1050 = vadd.f32 %v1031, %v1048
      %1051 = vst.msk [vmem:[%s1030] ss:$8 sm:$0x3] %vm355, %v1050
      %1052 = vst.msk [vmem:[%s1030] ss:$8 sm:$0x0] %vm355, %v1050
      %s1053 = scalar_lea.vmem [#allocation2], 3
      %v1054 = vld [vmem:[%s1053] ss:$8 sm:$0x3]
      %v1057 = vcombine.low %v815, %v816
      %v1059 = vunpack.c.l.s4 1966171168
      %v1060 = vunpack.c.0.s8 %v1059
      %v1061 = vlaneseq
      %v1062 = vshrl.u32 %v1061, 7
      %v1063 = vsub.s32 %v1060, %v1062
      %v1064 = vrot.slane %v1057, %v1063
      %v1066 = vunpack.c.l.s4 1966171168
      %v1067 = vunpack.c.0.s8 %v1066
      %v1068 = vlaneseq
      %v1069 = vshrl.u32 %v1068, 7
      %v1070 = vsub.s32 %v1067, %v1069
      %v1071 = vrot.slane %v1064, %v1070
      %v1073 = vadd.f32 %v1054, %v1071
      %1074 = vst.msk [vmem:[%s1053] ss:$8 sm:$0x3] %vm355, %v1073
      %1075 = vst.msk [vmem:[%s1053] ss:$8 sm:$0x0] %vm355, %v1073
      %s1076 = scalar_lea.vmem [#allocation2], 4
      %v1077 = vld [vmem:[%s1076] ss:$8 sm:$0x3]
      %v1080 = vcombine.low %v910, %v911
      %v1082 = vunpack.c.l.s4 1966171168
      %v1083 = vunpack.c.0.s8 %v1082
      %v1084 = vlaneseq
      %v1085 = vshrl.u32 %v1084, 7
      %v1086 = vsub.s32 %v1083, %v1085
      %v1087 = vrot.slane %v1080, %v1086
      %v1089 = vunpack.c.l.s4 1966171168
      %v1090 = vunpack.c.0.s8 %v1089
      %v1091 = vlaneseq
      %v1092 = vshrl.u32 %v1091, 7
      %v1093 = vsub.s32 %v1090, %v1092
      %v1094 = vrot.slane %v1087, %v1093
      %v1096 = vadd.f32 %v1077, %v1094
      %1097 = vst.msk [vmem:[%s1076] ss:$8 sm:$0x3] %vm355, %v1096
      %1098 = vst.msk [vmem:[%s1076] ss:$8 sm:$0x0] %vm355, %v1096
      %s1099 = scalar_lea.vmem [#allocation2], 5
      %v1100 = vld [vmem:[%s1099] ss:$8 sm:$0x3]
      %v1103 = vcombine.low %v983, %v984
      %v1105 = vunpack.c.l.s4 1966171168
      %v1106 = vunpack.c.0.s8 %v1105
      %v1107 = vlaneseq
      %v1108 = vshrl.u32 %v1107, 7
      %v1109 = vsub.s32 %v1106, %v1108
      %v1110 = vrot.slane %v1103, %v1109
      %v1112 = vunpack.c.l.s4 1966171168
      %v1113 = vunpack.c.0.s8 %v1112
      %v1114 = vlaneseq
      %v1115 = vshrl.u32 %v1114, 7
      %v1116 = vsub.s32 %v1113, %v1115
      %v1117 = vrot.slane %v1110, %v1116
      %v1119 = vadd.f32 %v1100, %v1117
      %1120 = vst.msk [vmem:[%s1099] ss:$8 sm:$0x3] %vm355, %v1119
      %1121 = vst.msk [vmem:[%s1099] ss:$8 sm:$0x0] %vm355, %v1119
      %s1122 = scalar_lea.vmem [#allocation2], 6
      %v1123 = vld [vmem:[%s1122] ss:$8 sm:$0x3]
      %v1124 = vadd.f32 %v1123, %v279
      %1125 = vst.msk [vmem:[%s1122] ss:$8 sm:$0x3] %vm355, %v1124
      %1126 = vst.msk [vmem:[%s1122] ss:$8 sm:$0x0] %vm355, %v1124
      // Predicated region
      $region33: #{forward.2} parent=27 // pred_check
        %p1127 = pneg %p206
      $region34: #{forward.2} parent=27 // pred_check_branch
        %1129 = sbr.rel (%p1127) target = $region36
      $region35: #{forward.2} parent=27 // pred_region
        %v1130 = vld [vmem:[#allocation2] sm:$0xff]
        %v1131 = vld [vmem:[#allocation2 + $0x8] sm:$0xff]
        %v1132 = vadd.f32 %v1130, %v1131
        %1133 = vadd.xlane.f32.xlu0 %v1132
        %v1134 = vpop.xlane.xlu0 %1133
        %1135 = vst [vmem:[%s205] sm:$0xff] %v1134
      $region36: #{forward.2} parent=27 // pred_fallthru
        _
      %p1136 = scmp.lt.s32.totalorder %s17, 1
      %s1137 = scalar_select %p1136, %s17, 1
      %s1138 = smul.addr %s1137, 8
      %s1139 = scalar_lea.vmem %s2, %s1138
      // Predicated region
      $region37: #{forward.2} parent=27 // pred_check
        %p1140 = pneg %p99
      $region38: #{forward.2} parent=27 // pred_check_branch
        %1142 = sbr.rel (%p1140) target = $region40
      $region39: #{forward.2} parent=27 // pred_region
        _
      $region40: #{forward.2} parent=27 // pred_fallthru
        _
    $region28: #{forward.2} parent=5 // pred_fallthru
      _
    %p1143 = scmp.le.s32.totalorder 2, %s8
    // Predicated region
    $region41: #{forward.2} parent=5 // pred_check
      %p1144 = pneg %p1143
    $region42: #{forward.2} parent=5 // pred_check_branch
      %1146 = sbr.rel (%p1144) target = $region44
    $region43: #{forward.2} parent=5 // pred_region
      %s1147 = ssub.s32 %s8, 2
      // Predicated region
      $region45: #{forward.2} parent=43 // pred_check
        %p1148 = pneg %p105
      $region46: #{forward.2} parent=43 // pred_check_branch
        %1150 = sbr.rel (%p1148) target = $region48
      $region47: #{forward.2} parent=43 // pred_region
        %p1151 = scmp.lt.s32.totalorder %s19, 1
        %s1152 = scalar_select %p1151, %s19, 1
        %s1153 = smul.addr %s1152, 8
        %s1154 = scalar_lea.vmem %s2, %s1153
      $region48: #{forward.2} parent=43 // pred_fallthru
        _
    $region44: #{forward.2} parent=5 // pred_fallthru
      _
  $region6: #{forward.2} parent=0 // loop_footer
    %s12 = sadd.s32 1, %s8
  $region7: #{forward.2} parent=0 // loop_footer_branch
    %7 = sbr.rel target = $region3
  $region8: #{forward.2} parent=0 // loop_exit
    _

// kernel: forward.3
$region0: #{forward.3}
  #allocation0 [shape = 'u32[]', space=smem, size = 0x4, offset = 0x4, fixed_abs, tag = 'smem constant byte address 0x4 - core index']
  #allocation1 [shape = 'u32[144,128]{1,0:T(1,128)}', space=vmem, size = 0x12000, scoped, tag = 'internal scratch']
  %s0 = inlined_call_operand.vmem [shape: bf16[3,256,256], index: 0, kind: input, shape index: {}]
  %s1 = inlined_call_operand.vmem [shape: f32[3,256,256], index: 1, kind: output, shape index: {}]
  %s2 = sld [smem:[#allocation0]]
  $region41: #{forward.3} parent=0
    _
  %s4 = ssub.s32 1, %s2
  %s5 = scalar_select 0, %s4, %s2
  loop: start=0, step=1, limit=5
  $region2: #{forward.3} parent=0 // loop_pre_header
    _
  $region3: #{forward.3} parent=0 // loop_header
    %s7 = sphi 0, %s11
    %p8 = scmp.ge.s32.totalorder %s7, 5
    %s14 = sphi 0, %s26
    %s15 = sphi 0, %s22
    %s16 = sphi 0, %s14
    %s17 = sphi 0, %s15
    %s18 = sphi 0, %s16
    %s19 = sphi 0, %s17
    %s31 = sphi 0, %s33
    %s34 = sphi 0, %s31
    %s35 = sphi 0, %s34
    %s51 = sphi 0, %s35
    %s57 = sphi 0, %s59
    %s60 = sphi 0, %s57
    %s61 = sphi 0, %s60
    %s77 = sphi 0, %s61
  $region4: #{forward.3} parent=0 // loop_header_branch
    %10 = sbr.rel (%p8) target = $region8
  $region5: #{forward.3} parent=0 // loop_body
    %s12 = ssub.s32 %s7, 1
    %s13 = ssub.s32 %s7, 2
    %s20 = sadd.s32 1, %s15
    %p21 = scmp.ge.s32.totalorder %s20, 1
    %s22 = scalar_select %p21, 0, %s20
    %s23 = sadd.s32 1, %s14
    %s24 = scalar_select %p21, %s23, %s14
    %p25 = scmp.ge.s32.totalorder %s24, 3
    %s26 = scalar_select %p25, 0, %s24
    %s27 = ssub.s32 %s14, %s26
    %s28 = ssub.s32 %s15, %s22
    %s29 = sor.u32 %s27, %s28
    %p30 = scmp.eq.s32.totalorder %s29, 0
    %s32 = sadd.s32 %s31, 1
    %s33 = scalar_select %p30, %s31, %s32
    %p36 = pneg %p30
    %p37 = scmp.eq.s32.totalorder %s7, 2
    %p38 = por %p36, %p37
    %p39 = scmp.ne.s32.totalorder %s31, %s34
    %p40 = scmp.eq.s32.totalorder %s7, 0
    %p41 = por %p39, %p40
    %p42 = scmp.ne.s32.totalorder %s31, %s34
    %p43 = scmp.eq.s32.totalorder %s12, 2
    %p44 = por %p42, %p43
    %p45 = scmp.ne.s32.totalorder %s34, %s35
    %p46 = scmp.eq.s32.totalorder %s12, 0
    %p47 = por %p45, %p46
    %p48 = scmp.ne.s32.totalorder %s34, %s35
    %p49 = scmp.eq.s32.totalorder %s13, 2
    %p50 = por %p48, %p49
    %p52 = scmp.ne.s32.totalorder %s35, %s51
    %p53 = scmp.eq.s32.totalorder %s13, 0
    %p54 = por %p52, %p53
    %s55 = ssub.s32 %s14, %s26
    %p56 = scmp.eq.s32.totalorder %s55, 0
    %s58 = sadd.s32 %s57, 1
    %s59 = scalar_select %p56, %s57, %s58
    %p62 = pneg %p56
    %p63 = scmp.eq.s32.totalorder %s7, 2
    %p64 = por %p62, %p63
    %p65 = scmp.ne.s32.totalorder %s57, %s60
    %p66 = scmp.eq.s32.totalorder %s7, 0
    %p67 = por %p65, %p66
    %p68 = scmp.ne.s32.totalorder %s57, %s60
    %p69 = scmp.eq.s32.totalorder %s12, 2
    %p70 = por %p68, %p69
    %p71 = scmp.ne.s32.totalorder %s60, %s61
    %p72 = scmp.eq.s32.totalorder %s12, 0
    %p73 = por %p71, %p72
    %p74 = scmp.ne.s32.totalorder %s60, %s61
    %p75 = scmp.eq.s32.totalorder %s13, 2
    %p76 = por %p74, %p75
    %p78 = scmp.ne.s32.totalorder %s61, %s77
    %p79 = scmp.eq.s32.totalorder %s13, 0
    %p80 = por %p78, %p79
    %p81 = scmp.le.s32.totalorder 1, %s7
    %p82 = scmp.lt.s32.totalorder %s7, 4
    %p83 = pnand %p81, %p82
    %p84 = pneg %p83
    // Predicated region
    $region9: #{forward.3} parent=5 // pred_check
      _
    $region10: #{forward.3} parent=5 // pred_check_branch
      %86 = sbr.rel (%p83) target = $region12
    $region11: #{forward.3} parent=5 // pred_region
      %s87 = ssub.s32 %s7, 1
    $region12: #{forward.3} parent=5 // pred_fallthru
      _
    %p88 = scmp.lt.s32.totalorder %s7, 3
    // Predicated region
    $region13: #{forward.3} parent=5 // pred_check
      %p89 = pneg %p88
    $region14: #{forward.3} parent=5 // pred_check_branch
      %91 = sbr.rel (%p89) target = $region16
    $region15: #{forward.3} parent=5 // pred_region
      // Predicated region
      $region17: #{forward.3} parent=15 // pred_check
        %p92 = pneg %p41
      $region18: #{forward.3} parent=15 // pred_check_branch
        %94 = sbr.rel (%p92) target = $region20
      $region19: #{forward.3} parent=15 // pred_region
        %s95 = smul.u32 2, %s15
        %p96 = scmp.lt.s32.totalorder %s14, 2
        %s97 = scalar_select %p96, %s14, 2
        %p98 = scmp.lt.s32.totalorder %s95, 1
        %s99 = scalar_select %p98, %s95, 1
        %s100 = smul.addr %s97, 64
        %s101 = sadd.s32 %s99, %s100
        %s102 = smul.addr %s101, 4
        %s103 = scalar_lea.vmem %s0, %s102
        %s104 = smul.u32 2, %s15
      $region20: #{forward.3} parent=15 // pred_fallthru
        _
    $region16: #{forward.3} parent=5 // pred_fallthru
      _
    %p105 = scmp.le.s32.totalorder 1, %s7
    %p106 = scmp.lt.s32.totalorder %s7, 4
    %p107 = pnand %p105, %p106
    %p108 = pneg %p107
    // Predicated region
    $region21: #{forward.3} parent=5 // pred_check
      _
    $region22: #{forward.3} parent=5 // pred_check_branch
      %110 = sbr.rel (%p107) target = $region24
    $region23: #{forward.3} parent=5 // pred_region
      %s111 = ssub.s32 %s7, 1
      %s112 = smul.u32 2, %s17
      %p113 = scmp.lt.s32.totalorder %s16, 2
      %s114 = scalar_select %p113, %s16, 2
      %p115 = scmp.lt.s32.totalorder %s112, 1
      %s116 = scalar_select %p115, %s112, 1
      %s117 = smul.addr %s114, 64
      %s118 = sadd.s32 %s116, %s117
      %s119 = smul.addr %s118, 4
      %s120 = scalar_lea.vmem %s0, %s119
      %p121 = pneg %p47
      %p122 = pneg %p44
      %p123 = pneg %p73
      %p124 = pneg %p70
      %p125 = scmp.lt.s32.totalorder %s16, 2
      %s126 = scalar_select %p125, %s16, 2
      %s127 = smul.addr %s126, 64
      %s128 = smul.addr %s127, 8
      %s129 = scalar_lea.vmem %s1, %s128
      %s130 = smul.u32 2, %s17
      %p131 = scmp.lt.s32.totalorder %s16, 2
      %s132 = scalar_select %p131, %s16, 2
      %p133 = scmp.lt.s32.totalorder %s130, 1
      %s134 = scalar_select %p133, %s130, 1
      %s135 = smul.addr %s132, 64
      %s136 = sadd.s32 %s134, %s135
      %s137 = smul.addr %s136, 4
      %s138 = scalar_lea.vmem %s0, %s137
      %s139 = smul.u32 2, %s17
      %p140 = scmp.lt.s32.totalorder %s16, 2
      %s141 = scalar_select %p140, %s16, 2
      %s142 = smul.addr %s141, 64
      %s143 = smul.addr %s142, 8
      %s144 = scalar_lea.vmem %s1, %s143
      %p145 = scmp.eq.s32.totalorder %s17, 0
      // Predicated region
      $region25: #{forward.3} parent=23 // pred_check
        %p146 = pneg %p145
      $region26: #{forward.3} parent=23 // pred_check_branch
        %148 = sbr.rel (%p146) target = $region28
      $region27: #{forward.3} parent=23 // pred_region
        %149 = vst [vmem:[%s144] sm:$0xff] 0.0
        %150 = vst [vmem:[%s144 + $0x8] sm:$0xff] 0.0
        %151 = vst [vmem:[%s144 + $0x10] sm:$0xff] 0.0
        %152 = vst [vmem:[%s144 + $0x18] sm:$0xff] 0.0
        %153 = vst [vmem:[%s144 + $0x20] sm:$0xff] 0.0
        %154 = vst [vmem:[%s144 + $0x28] sm:$0xff] 0.0
        %155 = vst [vmem:[%s144 + $0x30] sm:$0xff] 0.0
        %156 = vst [vmem:[%s144 + $0x38] sm:$0xff] 0.0
        %157 = vst [vmem:[%s144 + $0x40] sm:$0xff] 0.0
        %158 = vst [vmem:[%s144 + $0x48] sm:$0xff] 0.0
        %159 = vst [vmem:[%s144 + $0x50] sm:$0xff] 0.0
        %160 = vst [vmem:[%s144 + $0x58] sm:$0xff] 0.0
        %161 = vst [vmem:[%s144 + $0x60] sm:$0xff] 0.0
        %162 = vst [vmem:[%s144 + $0x68] sm:$0xff] 0.0
        %163 = vst [vmem:[%s144 + $0x70] sm:$0xff] 0.0
        %164 = vst [vmem:[%s144 + $0x78] sm:$0xff] 0.0
        %165 = vst [vmem:[%s144 + $0x80] sm:$0xff] 0.0
        %166 = vst [vmem:[%s144 + $0x88] sm:$0xff] 0.0
        %167 = vst [vmem:[%s144 + $0x90] sm:$0xff] 0.0
        %168 = vst [vmem:[%s144 + $0x98] sm:$0xff] 0.0
        %169 = vst [vmem:[%s144 + $0xa0] sm:$0xff] 0.0
        %170 = vst [vmem:[%s144 + $0xa8] sm:$0xff] 0.0
        %171 = vst [vmem:[%s144 + $0xb0] sm:$0xff] 0.0
        %172 = vst [vmem:[%s144 + $0xb8] sm:$0xff] 0.0
        %173 = vst [vmem:[%s144 + $0xc0] sm:$0xff] 0.0
        %174 = vst [vmem:[%s144 + $0xc8] sm:$0xff] 0.0
        %175 = vst [vmem:[%s144 + $0xd0] sm:$0xff] 0.0
        %176 = vst [vmem:[%s144 + $0xd8] sm:$0xff] 0.0
        %177 = vst [vmem:[%s144 + $0xe0] sm:$0xff] 0.0
        %178 = vst [vmem:[%s144 + $0xe8] sm:$0xff] 0.0
        %179 = vst [vmem:[%s144 + $0xf0] sm:$0xff] 0.0
        %180 = vst [vmem:[%s144 + $0xf8] sm:$0xff] 0.0
        %181 = vst [vmem:[%s144 + $0x100] sm:$0xff] 0.0
        %182 = vst [vmem:[%s144 + $0x108] sm:$0xff] 0.0
        %183 = vst [vmem:[%s144 + $0x110] sm:$0xff] 0.0
        %184 = vst [vmem:[%s144 + $0x118] sm:$0xff] 0.0
        %185 = vst [vmem:[%s144 + $0x120] sm:$0xff] 0.0
        %186 = vst [vmem:[%s144 + $0x128] sm:$0xff] 0.0
        %187 = vst [vmem:[%s144 + $0x130] sm:$0xff] 0.0
        %188 = vst [vmem:[%s144 + $0x138] sm:$0xff] 0.0
        %189 = vst [vmem:[%s144 + $0x140] sm:$0xff] 0.0
        %190 = vst [vmem:[%s144 + $0x148] sm:$0xff] 0.0
        %191 = vst [vmem:[%s144 + $0x150] sm:$0xff] 0.0
        %192 = vst [vmem:[%s144 + $0x158] sm:$0xff] 0.0
        %193 = vst [vmem:[%s144 + $0x160] sm:$0xff] 0.0
        %194 = vst [vmem:[%s144 + $0x168] sm:$0xff] 0.0
        %195 = vst [vmem:[%s144 + $0x170] sm:$0xff] 0.0
        %196 = vst [vmem:[%s144 + $0x178] sm:$0xff] 0.0
        %197 = vst [vmem:[%s144 + $0x180] sm:$0xff] 0.0
        %198 = vst [vmem:[%s144 + $0x188] sm:$0xff] 0.0
        %199 = vst [vmem:[%s144 + $0x190] sm:$0xff] 0.0
        %200 = vst [vmem:[%s144 + $0x198] sm:$0xff] 0.0
        %201 = vst [vmem:[%s144 + $0x1a0] sm:$0xff] 0.0
        %202 = vst [vmem:[%s144 + $0x1a8] sm:$0xff] 0.0
        %203 = vst [vmem:[%s144 + $0x1b0] sm:$0xff] 0.0
        %204 = vst [vmem:[%s144 + $0x1b8] sm:$0xff] 0.0
        %205 = vst [vmem:[%s144 + $0x1c0] sm:$0xff] 0.0
        %206 = vst [vmem:[%s144 + $0x1c8] sm:$0xff] 0.0
        %207 = vst [vmem:[%s144 + $0x1d0] sm:$0xff] 0.0
        %208 = vst [vmem:[%s144 + $0x1d8] sm:$0xff] 0.0
        %209 = vst [vmem:[%s144 + $0x1e0] sm:$0xff] 0.0
        %210 = vst [vmem:[%s144 + $0x1e8] sm:$0xff] 0.0
        %211 = vst [vmem:[%s144 + $0x1f0] sm:$0xff] 0.0
        %212 = vst [vmem:[%s144 + $0x1f8] sm:$0xff] 0.0
      $region28: #{forward.3} parent=23 // pred_fallthru
        _
      %v213 = vld [vmem:[%s138] sm:$0xff]
      %v214 = vld [vmem:[%s138 + $0x8] sm:$0xff]
      %v215 = vld [vmem:[%s138 + $0x10] sm:$0xff]
      %v216 = vld [vmem:[%s138 + $0x18] sm:$0xff]
      %v217 = vld [vmem:[%s138 + $0x20] sm:$0xff]
      %v218 = vld [vmem:[%s138 + $0x28] sm:$0xff]
      %v219 = vld [vmem:[%s138 + $0x30] sm:$0xff]
      %v220 = vld [vmem:[%s138 + $0x38] sm:$0xff]
      %v221 = vld [vmem:[%s138 + $0x40] sm:$0xff]
      %v222 = vld [vmem:[%s138 + $0x48] sm:$0xff]
      %v223 = vld [vmem:[%s138 + $0x50] sm:$0xff]
      %v224 = vld [vmem:[%s138 + $0x58] sm:$0xff]
      %v225 = vld [vmem:[%s138 + $0x60] sm:$0xff]
      %v226 = vld [vmem:[%s138 + $0x68] sm:$0xff]
      %v227 = vld [vmem:[%s138 + $0x70] sm:$0xff]
      %v228 = vld [vmem:[%s138 + $0x78] sm:$0xff]
      %v229 = vld [vmem:[%s138 + $0x80] sm:$0xff]
      %v230 = vld [vmem:[%s138 + $0x88] sm:$0xff]
      %v231 = vld [vmem:[%s138 + $0x90] sm:$0xff]
      %v232 = vld [vmem:[%s138 + $0x98] sm:$0xff]
      %v233 = vld [vmem:[%s138 + $0xa0] sm:$0xff]
      %v234 = vld [vmem:[%s138 + $0xa8] sm:$0xff]
      %v235 = vld [vmem:[%s138 + $0xb0] sm:$0xff]
      %v236 = vld [vmem:[%s138 + $0xb8] sm:$0xff]
      %v237 = vld [vmem:[%s138 + $0xc0] sm:$0xff]
      %v238 = vld [vmem:[%s138 + $0xc8] sm:$0xff]
      %v239 = vld [vmem:[%s138 + $0xd0] sm:$0xff]
      %v240 = vld [vmem:[%s138 + $0xd8] sm:$0xff]
      %v241 = vld [vmem:[%s138 + $0xe0] sm:$0xff]
      %v242 = vld [vmem:[%s138 + $0xe8] sm:$0xff]
      %v243 = vld [vmem:[%s138 + $0xf0] sm:$0xff]
      %v244 = vld [vmem:[%s138 + $0xf8] sm:$0xff]
      %v245 = vld [vmem:[%s144] sm:$0xff]
      %v246 = vld [vmem:[%s144 + $0x8] sm:$0xff]
      %v247 = vld [vmem:[%s144 + $0x10] sm:$0xff]
      %v248 = vld [vmem:[%s144 + $0x18] sm:$0xff]
      %v249 = vld [vmem:[%s144 + $0x20] sm:$0xff]
      %v250 = vld [vmem:[%s144 + $0x28] sm:$0xff]
      %v251 = vld [vmem:[%s144 + $0x30] sm:$0xff]
      %v252 = vld [vmem:[%s144 + $0x38] sm:$0xff]
      %v253 = vld [vmem:[%s144 + $0x40] sm:$0xff]
      %v254 = vld [vmem:[%s144 + $0x48] sm:$0xff]
      %v255 = vld [vmem:[%s144 + $0x50] sm:$0xff]
      %v256 = vld [vmem:[%s144 + $0x58] sm:$0xff]
      %v257 = vld [vmem:[%s144 + $0x60] sm:$0xff]
      %v258 = vld [vmem:[%s144 + $0x68] sm:$0xff]
      %v259 = vld [vmem:[%s144 + $0x70] sm:$0xff]
      %v260 = vld [vmem:[%s144 + $0x78] sm:$0xff]
      %v261 = vld [vmem:[%s144 + $0x80] sm:$0xff]
      %v262 = vld [vmem:[%s144 + $0x88] sm:$0xff]
      %v263 = vld [vmem:[%s144 + $0x90] sm:$0xff]
      %v264 = vld [vmem:[%s144 + $0x98] sm:$0xff]
      %v265 = vld [vmem:[%s144 + $0xa0] sm:$0xff]
      %v266 = vld [vmem:[%s144 + $0xa8] sm:$0xff]
      %v267 = vld [vmem:[%s144 + $0xb0] sm:$0xff]
      %v268 = vld [vmem:[%s144 + $0xb8] sm:$0xff]
      %v269 = vld [vmem:[%s144 + $0xc0] sm:$0xff]
      %v270 = vld [vmem:[%s144 + $0xc8] sm:$0xff]
      %v271 = vld [vmem:[%s144 + $0xd0] sm:$0xff]
      %v272 = vld [vmem:[%s144 + $0xd8] sm:$0xff]
      %v273 = vld [vmem:[%s144 + $0xe0] sm:$0xff]
      %v274 = vld [vmem:[%s144 + $0xe8] sm:$0xff]
      %v275 = vld [vmem:[%s144 + $0xf0] sm:$0xff]
      %v276 = vld [vmem:[%s144 + $0xf8] sm:$0xff]
      %v277 = vld [vmem:[%s144 + $0x100] sm:$0xff]
      %v278 = vld [vmem:[%s144 + $0x108] sm:$0xff]
      %v279 = vld [vmem:[%s144 + $0x110] sm:$0xff]
      %v280 = vld [vmem:[%s144 + $0x118] sm:$0xff]
      %v281 = vld [vmem:[%s144 + $0x120] sm:$0xff]
      %v282 = vld [vmem:[%s144 + $0x128] sm:$0xff]
      %v283 = vld [vmem:[%s144 + $0x130] sm:$0xff]
      %v284 = vld [vmem:[%s144 + $0x138] sm:$0xff]
      %v285 = vld [vmem:[%s144 + $0x140] sm:$0xff]
      %v286 = vld [vmem:[%s144 + $0x148] sm:$0xff]
      %v287 = vld [vmem:[%s144 + $0x150] sm:$0xff]
      %v288 = vld [vmem:[%s144 + $0x158] sm:$0xff]
      %v289 = vld [vmem:[%s144 + $0x160] sm:$0xff]
      %v290 = vld [vmem:[%s144 + $0x168] sm:$0xff]
      %v291 = vld [vmem:[%s144 + $0x170] sm:$0xff]
      %v292 = vld [vmem:[%s144 + $0x178] sm:$0xff]
      %v293 = vld [vmem:[%s144 + $0x180] sm:$0xff]
      %v294 = vld [vmem:[%s144 + $0x188] sm:$0xff]
      %v295 = vld [vmem:[%s144 + $0x190] sm:$0xff]
      %v296 = vld [vmem:[%s144 + $0x198] sm:$0xff]
      %v297 = vld [vmem:[%s144 + $0x1a0] sm:$0xff]
      %v298 = vld [vmem:[%s144 + $0x1a8] sm:$0xff]
      %v299 = vld [vmem:[%s144 + $0x1b0] sm:$0xff]
      %v300 = vld [vmem:[%s144 + $0x1b8] sm:$0xff]
      %v301 = vld [vmem:[%s144 + $0x1c0] sm:$0xff]
      %v302 = vld [vmem:[%s144 + $0x1c8] sm:$0xff]
      %v303 = vld [vmem:[%s144 + $0x1d0] sm:$0xff]
      %v304 = vld [vmem:[%s144 + $0x1d8] sm:$0xff]
      %v305 = vld [vmem:[%s144 + $0x1e0] sm:$0xff]
      %v306 = vld [vmem:[%s144 + $0x1e8] sm:$0xff]
      %v307 = vld [vmem:[%s144 + $0x1f0] sm:$0xff]
      %v308 = vld [vmem:[%s144 + $0x1f8] sm:$0xff]
      %v341 = vunpack.c.l.b16 %v213
      %v342 = vunpack.c.h.b16 %v213
      %v343 = vunpack.c.l.b16 %v214
      %v344 = vunpack.c.h.b16 %v214
      %v345 = vunpack.c.l.b16 %v215
      %v346 = vunpack.c.h.b16 %v215
      %v347 = vunpack.c.l.b16 %v216
      %v348 = vunpack.c.h.b16 %v216
      %v349 = vunpack.c.l.b16 %v217
      %v350 = vunpack.c.h.b16 %v217
      %v351 = vunpack.c.l.b16 %v218
      %v352 = vunpack.c.h.b16 %v218
      %v353 = vunpack.c.l.b16 %v219
      %v354 = vunpack.c.h.b16 %v219
      %v355 = vunpack.c.l.b16 %v220
      %v356 = vunpack.c.h.b16 %v220
      %v357 = vunpack.c.l.b16 %v221
      %v358 = vunpack.c.h.b16 %v221
      %v359 = vunpack.c.l.b16 %v222
      %v360 = vunpack.c.h.b16 %v222
      %v361 = vunpack.c.l.b16 %v223
      %v362 = vunpack.c.h.b16 %v223
      %v363 = vunpack.c.l.b16 %v224
      %v364 = vunpack.c.h.b16 %v224
      %v365 = vunpack.c.l.b16 %v225
      %v366 = vunpack.c.h.b16 %v225
      %v367 = vunpack.c.l.b16 %v226
      %v368 = vunpack.c.h.b16 %v226
      %v369 = vunpack.c.l.b16 %v227
      %v370 = vunpack.c.h.b16 %v227
      %v371 = vunpack.c.l.b16 %v228
      %v372 = vunpack.c.h.b16 %v228
      %v373 = vunpack.c.l.b16 %v229
      %v374 = vunpack.c.h.b16 %v229
      %v375 = vunpack.c.l.b16 %v230
      %v376 = vunpack.c.h.b16 %v230
      %v377 = vunpack.c.l.b16 %v231
      %v378 = vunpack.c.h.b16 %v231
      %v379 = vunpack.c.l.b16 %v232
      %v380 = vunpack.c.h.b16 %v232
      %v381 = vunpack.c.l.b16 %v233
      %v382 = vunpack.c.h.b16 %v233
      %v383 = vunpack.c.l.b16 %v234
      %v384 = vunpack.c.h.b16 %v234
      %v385 = vunpack.c.l.b16 %v235
      %v386 = vunpack.c.h.b16 %v235
      %v387 = vunpack.c.l.b16 %v236
      %v388 = vunpack.c.h.b16 %v236
      %v389 = vunpack.c.l.b16 %v237
      %v390 = vunpack.c.h.b16 %v237
      %v391 = vunpack.c.l.b16 %v238
      %v392 = vunpack.c.h.b16 %v238
      %v393 = vunpack.c.l.b16 %v239
      %v394 = vunpack.c.h.b16 %v239
      %v395 = vunpack.c.l.b16 %v240
      %v396 = vunpack.c.h.b16 %v240
      %v397 = vunpack.c.l.b16 %v241
      %v398 = vunpack.c.h.b16 %v241
      %v399 = vunpack.c.l.b16 %v242
      %v400 = vunpack.c.h.b16 %v242
      %v401 = vunpack.c.l.b16 %v243
      %v402 = vunpack.c.h.b16 %v243
      %v403 = vunpack.c.l.b16 %v244
      %v404 = vunpack.c.h.b16 %v244
      %v405 = vpack.c.b16 %v343, %v341
      %v406 = vpack.c.b16 %v344, %v342
      %v407 = vpack.c.b16 %v347, %v345
      %v408 = vpack.c.b16 %v348, %v346
      %v409 = vpack.c.b16 %v351, %v349
      %v410 = vpack.c.b16 %v352, %v350
      %v411 = vpack.c.b16 %v355, %v353
      %v412 = vpack.c.b16 %v356, %v354
      %v413 = vpack.c.b16 %v359, %v357
      %v414 = vpack.c.b16 %v360, %v358
      %v415 = vpack.c.b16 %v363, %v361
      %v416 = vpack.c.b16 %v364, %v362
      %v417 = vpack.c.b16 %v367, %v365
      %v418 = vpack.c.b16 %v368, %v366
      %v419 = vpack.c.b16 %v371, %v369
      %v420 = vpack.c.b16 %v372, %v370
      %v421 = vpack.c.b16 %v375, %v373
      %v422 = vpack.c.b16 %v376, %v374
      %v423 = vpack.c.b16 %v379, %v377
      %v424 = vpack.c.b16 %v380, %v378
      %v425 = vpack.c.b16 %v383, %v381
      %v426 = vpack.c.b16 %v384, %v382
      %v427 = vpack.c.b16 %v387, %v385
      %v428 = vpack.c.b16 %v388, %v386
      %v429 = vpack.c.b16 %v391, %v389
      %v430 = vpack.c.b16 %v392, %v390
      %v431 = vpack.c.b16 %v395, %v393
      %v432 = vpack.c.b16 %v396, %v394
      %v433 = vpack.c.b16 %v399, %v397
      %v434 = vpack.c.b16 %v400, %v398
      %v435 = vpack.c.b16 %v403, %v401
      %v436 = vpack.c.b16 %v404, %v402
      %469 = vmatprep.subr.bf16.mxu0 %v406
      %470 = vmatpush1.bf16.xpose.msra.mxu0 %v405
      %471 = vmatprep.subr.bf16.mxu0 %v408
      %472 = vmatpush1.bf16.xpose.msra.mxu0 %v407
      %473 = vmatprep.subr.bf16.mxu0 %v410
      %474 = vmatpush1.bf16.xpose.msra.mxu0 %v409
      %475 = vmatprep.subr.bf16.mxu0 %v412
      %476 = vmatpush1.bf16.xpose.msra.mxu0 %v411
      %477 = vmatprep.subr.bf16.mxu0 %v414
      %478 = vmatpush1.bf16.xpose.msra.mxu0 %v413
      %479 = vmatprep.subr.bf16.mxu0 %v416
      %480 = vmatpush1.bf16.xpose.msra.mxu0 %v415
      %481 = vmatprep.subr.bf16.mxu0 %v418
      %482 = vmatpush1.bf16.xpose.msra.mxu0 %v417
      %483 = vmatprep.subr.bf16.mxu0 %v420
      %484 = vmatpush1.bf16.xpose.msra.mxu0 %v419
      %485 = vmatprep.subr.bf16.mxu0 %v422
      %486 = vmatpush1.bf16.xpose.msra.mxu0 %v421
      %487 = vmatprep.subr.bf16.mxu0 %v424
      %488 = vmatpush1.bf16.xpose.msra.mxu0 %v423
      %489 = vmatprep.subr.bf16.mxu0 %v426
      %490 = vmatpush1.bf16.xpose.msra.mxu0 %v425
      %491 = vmatprep.subr.bf16.mxu0 %v428
      %492 = vmatpush1.bf16.xpose.msra.mxu0 %v427
      %493 = vmatprep.subr.bf16.mxu0 %v430
      %494 = vmatpush1.bf16.xpose.msra.mxu0 %v429
      %495 = vmatprep.subr.bf16.mxu0 %v432
      %496 = vmatpush1.bf16.xpose.msra.mxu0 %v431
      %497 = vmatprep.subr.bf16.mxu0 %v434
      %498 = vmatpush1.bf16.xpose.msra.mxu0 %v433
      %499 = vmatprep.subr.bf16.mxu0 %v436
      %500 = vmatpush1.bf16.xpose.msra.mxu0 %v435
      %501 = vmatprep.mubr.bf16.mxu0 %v406
      %502 = vmatmul.mubr.bf16.gmra.mrb[0].mxu0 %v405
      %v503 = vpop.f32.mrb[0].mxu0
      %v504 = vadd.f32 0.0, %v503
      %v505 = vpop.f32.mrb[0].mxu0
      %v506 = vadd.f32 0.0, %v505
      %v507 = vpop.f32.mrb[0].mxu0
      %v508 = vadd.f32 0.0, %v507
      %v509 = vpop.f32.mrb[0].mxu0
      %v510 = vadd.f32 0.0, %v509
      %511 = vmatprep.mubr.bf16.mxu0 %v408
      %512 = vmatmul.mubr.bf16.gmra.mrb[0].mxu0 %v407
      %v513 = vpop.f32.mrb[0].mxu0
      %v514 = vadd.f32 0.0, %v513
      %v515 = vpop.f32.mrb[0].mxu0
      %v516 = vadd.f32 0.0, %v515
      %v517 = vpop.f32.mrb[0].mxu0
      %v518 = vadd.f32 0.0, %v517
      %v519 = vpop.f32.mrb[0].mxu0
      %v520 = vadd.f32 0.0, %v519
      %521 = vmatprep.mubr.bf16.mxu0 %v410
      %522 = vmatmul.mubr.bf16.gmra.mrb[0].mxu0 %v409
      %v523 = vpop.f32.mrb[0].mxu0
      %v524 = vadd.f32 0.0, %v523
      %v525 = vpop.f32.mrb[0].mxu0
      %v526 = vadd.f32 0.0, %v525
      %v527 = vpop.f32.mrb[0].mxu0
      %v528 = vadd.f32 0.0, %v527
      %v529 = vpop.f32.mrb[0].mxu0
      %v530 = vadd.f32 0.0, %v529
      %531 = vmatprep.mubr.bf16.mxu0 %v412
      %532 = vmatmul.mubr.bf16.gmra.mrb[0].mxu0 %v411
      %v533 = vpop.f32.mrb[0].mxu0
      %v534 = vadd.f32 0.0, %v533
      %v535 = vpop.f32.mrb[0].mxu0
      %v536 = vadd.f32 0.0, %v535
      %v537 = vpop.f32.mrb[0].mxu0
      %v538 = vadd.f32 0.0, %v537
      %v539 = vpop.f32.mrb[0].mxu0
      %v540 = vadd.f32 0.0, %v539
      %541 = vmatprep.mubr.bf16.mxu0 %v414
      %542 = vmatmul.mubr.bf16.gmra.mrb[0].mxu0 %v413
      %v543 = vpop.f32.mrb[0].mxu0
      %v544 = vadd.f32 0.0, %v543
      %v545 = vpop.f32.mrb[0].mxu0
      %v546 = vadd.f32 0.0, %v545
      %v547 = vpop.f32.mrb[0].mxu0
      %v548 = vadd.f32 0.0, %v547
      %v549 = vpop.f32.mrb[0].mxu0
      %v550 = vadd.f32 0.0, %v549
      %551 = vmatprep.mubr.bf16.mxu0 %v416
      %552 = vmatmul.mubr.bf16.gmra.mrb[0].mxu0 %v415
      %v553 = vpop.f32.mrb[0].mxu0
      %v554 = vadd.f32 0.0, %v553
      %v555 = vpop.f32.mrb[0].mxu0
      %v556 = vadd.f32 0.0, %v555
      %v557 = vpop.f32.mrb[0].mxu0
      %v558 = vadd.f32 0.0, %v557
      %v559 = vpop.f32.mrb[0].mxu0
      %v560 = vadd.f32 0.0, %v559
      %561 = vmatprep.mubr.bf16.mxu0 %v418
      %562 = vmatmul.mubr.bf16.gmra.mrb[0].mxu0 %v417
      %v563 = vpop.f32.mrb[0].mxu0
      %v564 = vadd.f32 0.0, %v563
      %v565 = vpop.f32.mrb[0].mxu0
      %v566 = vadd.f32 0.0, %v565
      %v567 = vpop.f32.mrb[0].mxu0
      %v568 = vadd.f32 0.0, %v567
      %v569 = vpop.f32.mrb[0].mxu0
      %v570 = vadd.f32 0.0, %v569
      %571 = vmatprep.mubr.bf16.mxu0 %v420
      %572 = vmatmul.mubr.bf16.gmra.mrb[0].mxu0 %v419
      %v573 = vpop.f32.mrb[0].mxu0
      %v574 = vadd.f32 0.0, %v573
      %v575 = vpop.f32.mrb[0].mxu0
      %v576 = vadd.f32 0.0, %v575
      %v577 = vpop.f32.mrb[0].mxu0
      %v578 = vadd.f32 0.0, %v577
      %v579 = vpop.f32.mrb[0].mxu0
      %v580 = vadd.f32 0.0, %v579
      %581 = vmatprep.mubr.bf16.mxu0 %v422
      %582 = vmatmul.mubr.bf16.gmra.mrb[0].mxu0 %v421
      %v583 = vpop.f32.mrb[0].mxu0
      %v584 = vadd.f32 0.0, %v583
      %v585 = vpop.f32.mrb[0].mxu0
      %v586 = vadd.f32 0.0, %v585
      %v587 = vpop.f32.mrb[0].mxu0
      %v588 = vadd.f32 0.0, %v587
      %v589 = vpop.f32.mrb[0].mxu0
      %v590 = vadd.f32 0.0, %v589
      %591 = vmatprep.mubr.bf16.mxu0 %v424
      %592 = vmatmul.mubr.bf16.gmra.mrb[0].mxu0 %v423
      %v593 = vpop.f32.mrb[0].mxu0
      %v594 = vadd.f32 0.0, %v593
      %v595 = vpop.f32.mrb[0].mxu0
      %v596 = vadd.f32 0.0, %v595
      %v597 = vpop.f32.mrb[0].mxu0
      %v598 = vadd.f32 0.0, %v597
      %v599 = vpop.f32.mrb[0].mxu0
      %v600 = vadd.f32 0.0, %v599
      %601 = vmatprep.mubr.bf16.mxu0 %v426
      %602 = vmatmul.mubr.bf16.gmra.mrb[0].mxu0 %v425
      %v603 = vpop.f32.mrb[0].mxu0
      %v604 = vadd.f32 0.0, %v603
      %v605 = vpop.f32.mrb[0].mxu0
      %v606 = vadd.f32 0.0, %v605
      %v607 = vpop.f32.mrb[0].mxu0
      %v608 = vadd.f32 0.0, %v607
      %v609 = vpop.f32.mrb[0].mxu0
      %v610 = vadd.f32 0.0, %v609
      %611 = vmatprep.mubr.bf16.mxu0 %v428
      %612 = vmatmul.mubr.bf16.gmra.mrb[0].mxu0 %v427
      %v613 = vpop.f32.mrb[0].mxu0
      %v614 = vadd.f32 0.0, %v613
      %v615 = vpop.f32.mrb[0].mxu0
      %v616 = vadd.f32 0.0, %v615
      %v617 = vpop.f32.mrb[0].mxu0
      %v618 = vadd.f32 0.0, %v617
      %v619 = vpop.f32.mrb[0].mxu0
      %v620 = vadd.f32 0.0, %v619
      %621 = vmatprep.mubr.bf16.mxu0 %v430
      %622 = vmatmul.mubr.bf16.gmra.mrb[0].mxu0 %v429
      %v623 = vpop.f32.mrb[0].mxu0
      %v624 = vadd.f32 0.0, %v623
      %v625 = vpop.f32.mrb[0].mxu0
      %v626 = vadd.f32 0.0, %v625
      %v627 = vpop.f32.mrb[0].mxu0
      %v628 = vadd.f32 0.0, %v627
      %v629 = vpop.f32.mrb[0].mxu0
      %v630 = vadd.f32 0.0, %v629
      %631 = vmatprep.mubr.bf16.mxu0 %v432
      %632 = vmatmul.mubr.bf16.gmra.mrb[0].mxu0 %v431
      %v633 = vpop.f32.mrb[0].mxu0
      %v634 = vadd.f32 0.0, %v633
      %v635 = vpop.f32.mrb[0].mxu0
      %v636 = vadd.f32 0.0, %v635
      %v637 = vpop.f32.mrb[0].mxu0
      %v638 = vadd.f32 0.0, %v637
      %v639 = vpop.f32.mrb[0].mxu0
      %v640 = vadd.f32 0.0, %v639
      %641 = vmatprep.mubr.bf16.mxu0 %v434
      %642 = vmatmul.mubr.bf16.gmra.mrb[0].mxu0 %v433
      %v643 = vpop.f32.mrb[0].mxu0
      %v644 = vadd.f32 0.0, %v643
      %v645 = vpop.f32.mrb[0].mxu0
      %v646 = vadd.f32 0.0, %v645
      %v647 = vpop.f32.mrb[0].mxu0
      %v648 = vadd.f32 0.0, %v647
      %v649 = vpop.f32.mrb[0].mxu0
      %v650 = vadd.f32 0.0, %v649
      %651 = vmatprep.mubr.bf16.mxu0 %v436
      %652 = vmatmul.mubr.bf16.gmra.mrb[0].mxu0 %v435
      %v653 = vpop.f32.mrb[0].mxu0
      %v654 = vadd.f32 0.0, %v653
      %v655 = vpop.f32.mrb[0].mxu0
      %v656 = vadd.f32 0.0, %v655
      %v657 = vpop.f32.mrb[0].mxu0
      %v658 = vadd.f32 0.0, %v657
      %v659 = vpop.f32.mrb[0].mxu0
      %v660 = vadd.f32 0.0, %v659
      %661 = vdwg.mxu0
      %v662 = vadd.f32 %v245, %v504
      %v663 = vadd.f32 %v246, %v506
      %v664 = vadd.f32 %v247, %v508
      %v665 = vadd.f32 %v248, %v510
      %v666 = vadd.f32 %v249, %v514
      %v667 = vadd.f32 %v250, %v516
      %v668 = vadd.f32 %v251, %v518
      %v669 = vadd.f32 %v252, %v520
      %v670 = vadd.f32 %v253, %v524
      %v671 = vadd.f32 %v254, %v526
      %v672 = vadd.f32 %v255, %v528
      %v673 = vadd.f32 %v256, %v530
      %v674 = vadd.f32 %v257, %v534
      %v675 = vadd.f32 %v258, %v536
      %v676 = vadd.f32 %v259, %v538
      %v677 = vadd.f32 %v260, %v540
      %v678 = vadd.f32 %v261, %v544
      %v679 = vadd.f32 %v262, %v546
      %v680 = vadd.f32 %v263, %v548
      %v681 = vadd.f32 %v264, %v550
      %v682 = vadd.f32 %v265, %v554
      %v683 = vadd.f32 %v266, %v556
      %v684 = vadd.f32 %v267, %v558
      %v685 = vadd.f32 %v268, %v560
      %v686 = vadd.f32 %v269, %v564
      %v687 = vadd.f32 %v270, %v566
      %v688 = vadd.f32 %v271, %v568
      %v689 = vadd.f32 %v272, %v570
      %v690 = vadd.f32 %v273, %v574
      %v691 = vadd.f32 %v274, %v576
      %v692 = vadd.f32 %v275, %v578
      %v693 = vadd.f32 %v276, %v580
      %v694 = vadd.f32 %v277, %v584
      %v695 = vadd.f32 %v278, %v586
      %v696 = vadd.f32 %v279, %v588
      %v697 = vadd.f32 %v280, %v590
      %v698 = vadd.f32 %v281, %v594
      %v699 = vadd.f32 %v282, %v596
      %v700 = vadd.f32 %v283, %v598
      %v701 = vadd.f32 %v284, %v600
      %v702 = vadd.f32 %v285, %v604
      %v703 = vadd.f32 %v286, %v606
      %v704 = vadd.f32 %v287, %v608
      %v705 = vadd.f32 %v288, %v610
      %v706 = vadd.f32 %v289, %v614
      %v707 = vadd.f32 %v290, %v616
      %v708 = vadd.f32 %v291, %v618
      %v709 = vadd.f32 %v292, %v620
      %v710 = vadd.f32 %v293, %v624
      %v711 = vadd.f32 %v294, %v626
      %v712 = vadd.f32 %v295, %v628
      %v713 = vadd.f32 %v296, %v630
      %v714 = vadd.f32 %v297, %v634
      %v715 = vadd.f32 %v298, %v636
      %v716 = vadd.f32 %v299, %v638
      %v717 = vadd.f32 %v300, %v640
      %v718 = vadd.f32 %v301, %v644
      %v719 = vadd.f32 %v302, %v646
      %v720 = vadd.f32 %v303, %v648
      %v721 = vadd.f32 %v304, %v650
      %v722 = vadd.f32 %v305, %v654
      %v723 = vadd.f32 %v306, %v656
      %v724 = vadd.f32 %v307, %v658
      %v725 = vadd.f32 %v308, %v660
      %726 = vst [vmem:[%s144] sm:$0xff] %v662
      %727 = vst [vmem:[%s144 + $0x8] sm:$0xff] %v663
      %728 = vst [vmem:[%s144 + $0x10] sm:$0xff] %v664
      %729 = vst [vmem:[%s144 + $0x18] sm:$0xff] %v665
      %730 = vst [vmem:[%s144 + $0x20] sm:$0xff] %v666
      %731 = vst [vmem:[%s144 + $0x28] sm:$0xff] %v667
      %732 = vst [vmem:[%s144 + $0x30] sm:$0xff] %v668
      %733 = vst [vmem:[%s144 + $0x38] sm:$0xff] %v669
      %734 = vst [vmem:[%s144 + $0x40] sm:$0xff] %v670
      %735 = vst [vmem:[%s144 + $0x48] sm:$0xff] %v671
      %736 = vst [vmem:[%s144 + $0x50] sm:$0xff] %v672
      %737 = vst [vmem:[%s144 + $0x58] sm:$0xff] %v673
      %738 = vst [vmem:[%s144 + $0x60] sm:$0xff] %v674
      %739 = vst [vmem:[%s144 + $0x68] sm:$0xff] %v675
      %740 = vst [vmem:[%s144 + $0x70] sm:$0xff] %v676
      %741 = vst [vmem:[%s144 + $0x78] sm:$0xff] %v677
      %742 = vst [vmem:[%s144 + $0x80] sm:$0xff] %v678
      %743 = vst [vmem:[%s144 + $0x88] sm:$0xff] %v679
      %744 = vst [vmem:[%s144 + $0x90] sm:$0xff] %v680
      %745 = vst [vmem:[%s144 + $0x98] sm:$0xff] %v681
      %746 = vst [vmem:[%s144 + $0xa0] sm:$0xff] %v682
      %747 = vst [vmem:[%s144 + $0xa8] sm:$0xff] %v683
      %748 = vst [vmem:[%s144 + $0xb0] sm:$0xff] %v684
      %749 = vst [vmem:[%s144 + $0xb8] sm:$0xff] %v685
      %750 = vst [vmem:[%s144 + $0xc0] sm:$0xff] %v686
      %751 = vst [vmem:[%s144 + $0xc8] sm:$0xff] %v687
      %752 = vst [vmem:[%s144 + $0xd0] sm:$0xff] %v688
      %753 = vst [vmem:[%s144 + $0xd8] sm:$0xff] %v689
      %754 = vst [vmem:[%s144 + $0xe0] sm:$0xff] %v690
      %755 = vst [vmem:[%s144 + $0xe8] sm:$0xff] %v691
      %756 = vst [vmem:[%s144 + $0xf0] sm:$0xff] %v692
      %757 = vst [vmem:[%s144 + $0xf8] sm:$0xff] %v693
      %758 = vst [vmem:[%s144 + $0x100] sm:$0xff] %v694
      %759 = vst [vmem:[%s144 + $0x108] sm:$0xff] %v695
      %760 = vst [vmem:[%s144 + $0x110] sm:$0xff] %v696
      %761 = vst [vmem:[%s144 + $0x118] sm:$0xff] %v697
      %762 = vst [vmem:[%s144 + $0x120] sm:$0xff] %v698
      %763 = vst [vmem:[%s144 + $0x128] sm:$0xff] %v699
      %764 = vst [vmem:[%s144 + $0x130] sm:$0xff] %v700
      %765 = vst [vmem:[%s144 + $0x138] sm:$0xff] %v701
      %766 = vst [vmem:[%s144 + $0x140] sm:$0xff] %v702
      %767 = vst [vmem:[%s144 + $0x148] sm:$0xff] %v703
      %768 = vst [vmem:[%s144 + $0x150] sm:$0xff] %v704
      %769 = vst [vmem:[%s144 + $0x158] sm:$0xff] %v705
      %770 = vst [vmem:[%s144 + $0x160] sm:$0xff] %v706
      %771 = vst [vmem:[%s144 + $0x168] sm:$0xff] %v707
      %772 = vst [vmem:[%s144 + $0x170] sm:$0xff] %v708
      %773 = vst [vmem:[%s144 + $0x178] sm:$0xff] %v709
      %774 = vst [vmem:[%s144 + $0x180] sm:$0xff] %v710
      %775 = vst [vmem:[%s144 + $0x188] sm:$0xff] %v711
      %776 = vst [vmem:[%s144 + $0x190] sm:$0xff] %v712
      %777 = vst [vmem:[%s144 + $0x198] sm:$0xff] %v713
      %778 = vst [vmem:[%s144 + $0x1a0] sm:$0xff] %v714
      %779 = vst [vmem:[%s144 + $0x1a8] sm:$0xff] %v715
      %780 = vst [vmem:[%s144 + $0x1b0] sm:$0xff] %v716
      %781 = vst [vmem:[%s144 + $0x1b8] sm:$0xff] %v717
      %782 = vst [vmem:[%s144 + $0x1c0] sm:$0xff] %v718
      %783 = vst [vmem:[%s144 + $0x1c8] sm:$0xff] %v719
      %784 = vst [vmem:[%s144 + $0x1d0] sm:$0xff] %v720
      %785 = vst [vmem:[%s144 + $0x1d8] sm:$0xff] %v721
      %786 = vst [vmem:[%s144 + $0x1e0] sm:$0xff] %v722
      %787 = vst [vmem:[%s144 + $0x1e8] sm:$0xff] %v723
      %788 = vst [vmem:[%s144 + $0x1f0] sm:$0xff] %v724
      %789 = vst [vmem:[%s144 + $0x1f8] sm:$0xff] %v725
      %p790 = scmp.lt.s32.totalorder %s16, 2
      %s791 = scalar_select %p790, %s16, 2
      %s792 = smul.addr %s791, 64
      %s793 = smul.addr %s792, 8
      %s794 = scalar_lea.vmem %s1, %s793
      // Predicated region
      $region29: #{forward.3} parent=23 // pred_check
        %p795 = pneg %p70
      $region30: #{forward.3} parent=23 // pred_check_branch
        %797 = sbr.rel (%p795) target = $region32
      $region31: #{forward.3} parent=23 // pred_region
        _
      $region32: #{forward.3} parent=23 // pred_fallthru
        _
    $region24: #{forward.3} parent=5 // pred_fallthru
      _
    %p798 = scmp.le.s32.totalorder 2, %s7
    // Predicated region
    $region33: #{forward.3} parent=5 // pred_check
      %p799 = pneg %p798
    $region34: #{forward.3} parent=5 // pred_check_branch
      %801 = sbr.rel (%p799) target = $region36
    $region35: #{forward.3} parent=5 // pred_region
      %s802 = ssub.s32 %s7, 2
      // Predicated region
      $region37: #{forward.3} parent=35 // pred_check
        %p803 = pneg %p76
      $region38: #{forward.3} parent=35 // pred_check_branch
        %805 = sbr.rel (%p803) target = $region40
      $region39: #{forward.3} parent=35 // pred_region
        %p806 = scmp.lt.s32.totalorder %s18, 2
        %s807 = scalar_select %p806, %s18, 2
        %s808 = smul.addr %s807, 64
        %s809 = smul.addr %s808, 8
        %s810 = scalar_lea.vmem %s1, %s809
      $region40: #{forward.3} parent=35 // pred_fallthru
        _
    $region36: #{forward.3} parent=5 // pred_fallthru
      _
  $region6: #{forward.3} parent=0 // loop_footer
    %s11 = sadd.s32 1, %s7
  $region7: #{forward.3} parent=0 // loop_footer_branch
    %6 = sbr.rel target = $region3
  $region8: #{forward.3} parent=0 // loop_exit
    _

// kernel: custom-call.10
$region0: #{custom-call.10}
  %s0 = inlined_call_operand.vmem [shape: f32[24,9,9], index: 0, kind: input, shape index: {}]
  %s1 = inlined_call_operand.vmem [shape: f32[24,9,9], index: 1, kind: output, shape index: {0}]
  %s2 = inlined_call_operand.hbm [shape: s32[24,9], index: 2, kind: output, shape index: {1}]
  %s3 = inlined_call_operand.vmem [shape: s32[24,9], index: 3, kind: output, shape index: {2}]
  %4 = xla_tuple %s1, %s2, %s3
  $region1: #{custom-call.10} parent=0
    #allocation0 [shape = 'u8[16384]{0}', space=vmem, size = 0x4000, scoped, tag = 'operand span for operand 0']
    #allocation1 [shape = 'u8[16384]{0}', space=vmem, size = 0x4000, scoped, tag = 'operand span for operand 1']
    #allocation2 [shape = 'u8[8192]{0}', space=vmem, size = 0x2000, scoped, tag = 'operand span for operand 2']
    #allocation3 [shape = 's32[2]{0}', space=sflag, size = 0x8, scoped, tag = 'scoped memory for custom-call.10']
    #allocation4 [shape = 'u8[8192]{0}', space=vmem, size = 0x2000, scoped, tag = 'operand span for operand 3']
    %5 = vsyncpa [#allocation3], 0
    %s6 = scalar_lea.sflag [#allocation3], 1
    %7 = vsyncpa %s6, 0
    loop: start=0, step=1, limit=26
    $region2: #{custom-call.10} parent=1 // loop_pre_header
      _
    $region3: #{custom-call.10} parent=1 // loop_header
      %s9 = sphi 0, %s13
      %p10 = scmp.ge.s32.totalorder %s9, 26
      %s21 = sphi 0, %s23
      %s24 = sphi 0, %s21
      %s25 = sphi 0, %s24
      %s41 = sphi 0, %s25
      %s49 = sphi 0, %s51
      %s52 = sphi 0, %s49
      %s53 = sphi 0, %s52
      %s69 = sphi 0, %s53
    $region4: #{custom-call.10} parent=1 // loop_header_branch
      %12 = sbr.rel (%p10) target = $region8
    $region5: #{custom-call.10} parent=1 // loop_body
      %s14 = ssub.s32 %s9, 1
      %s15 = ssub.s32 %s9, 2
      %s16 = sadd.s32 %s9, 1
      %s17 = sshrl.u32 %s9, 3
      %s18 = sshrl.u32 %s16, 3
      %s19 = ssub.s32 %s17, %s18
      %p20 = scmp.eq.s32.totalorder %s19, 0
      %s22 = sadd.s32 %s21, 1
      %s23 = scalar_select %p20, %s21, %s22
      %p26 = pneg %p20
      %p27 = scmp.eq.s32.totalorder %s9, 23
      %p28 = por %p26, %p27
      %p29 = scmp.ne.s32.totalorder %s21, %s24
      %p30 = scmp.eq.s32.totalorder %s9, 0
      %p31 = por %p29, %p30
      %p32 = scmp.ne.s32.totalorder %s21, %s24
      %p33 = scmp.eq.s32.totalorder %s14, 23
      %p34 = por %p32, %p33
      %p35 = scmp.ne.s32.totalorder %s24, %s25
      %p36 = scmp.eq.s32.totalorder %s14, 0
      %p37 = por %p35, %p36
      %p38 = scmp.ne.s32.totalorder %s24, %s25
      %p39 = scmp.eq.s32.totalorder %s15, 23
      %p40 = por %p38, %p39
      %p42 = scmp.ne.s32.totalorder %s25, %s41
      %p43 = scmp.eq.s32.totalorder %s15, 0
      %p44 = por %p42, %p43
      %s45 = sshrl.u32 %s9, 3
      %s46 = sshrl.u32 %s16, 3
      %s47 = ssub.s32 %s45, %s46
      %p48 = scmp.eq.s32.totalorder %s47, 0
      %s50 = sadd.s32 %s49, 1
      %s51 = scalar_select %p48, %s49, %s50
      %p54 = pneg %p48
      %p55 = scmp.eq.s32.totalorder %s9, 23
      %p56 = por %p54, %p55
      %p57 = scmp.ne.s32.totalorder %s49, %s52
      %p58 = scmp.eq.s32.totalorder %s9, 0
      %p59 = por %p57, %p58
      %p60 = scmp.ne.s32.totalorder %s49, %s52
      %p61 = scmp.eq.s32.totalorder %s14, 23
      %p62 = por %p60, %p61
      %p63 = scmp.ne.s32.totalorder %s52, %s53
      %p64 = scmp.eq.s32.totalorder %s14, 0
      %p65 = por %p63, %p64
      %p66 = scmp.ne.s32.totalorder %s52, %s53
      %p67 = scmp.eq.s32.totalorder %s15, 23
      %p68 = por %p66, %p67
      %p70 = scmp.ne.s32.totalorder %s53, %s69
      %p71 = scmp.eq.s32.totalorder %s15, 0
      %p72 = por %p70, %p71
      %p73 = scmp.le.s32.totalorder 1, %s9
      %p74 = scmp.lt.s32.totalorder %s9, 25
      %p75 = pnand %p73, %p74
      %p76 = pneg %p75
      // Predicated region
      $region9: #{custom-call.10} parent=5 // pred_check
        _
      $region10: #{custom-call.10} parent=5 // pred_check_branch
        %78 = sbr.rel (%p75) target = $region12
      $region11: #{custom-call.10} parent=5 // pred_region
        %s79 = ssub.s32 %s9, 1
      $region12: #{custom-call.10} parent=5 // pred_fallthru
        _
      %p80 = scmp.lt.s32.totalorder %s9, 24
      // Predicated region
      $region13: #{custom-call.10} parent=5 // pred_check
        %p81 = pneg %p80
      $region14: #{custom-call.10} parent=5 // pred_check_branch
        %83 = sbr.rel (%p81) target = $region16
      $region15: #{custom-call.10} parent=5 // pred_region
        %s84 = sand.u32 %s9, 1
        %s85 = sand.u32 %s9, 1
        %s86 = smul.addr %s85, 16
        %s87 = scalar_lea.vmem [#allocation0], %s86
        %s88 = smul.addr %s9, 16
        %s89 = scalar_lea.vmem %s0, %s88
        // Predicated region
        $region17: #{custom-call.10} parent=15 // pred_check
          _
        $region18: #{custom-call.10} parent=15 // pred_check_branch
          %91 = sbr.rel (0) target = $region20
        $region19: #{custom-call.10} parent=15 // pred_region
          // Predicated region
          $region21: #{custom-call.10} parent=19 // pred_check
            _
          $region22: #{custom-call.10} parent=19 // pred_check_branch
            %93 = sbr.rel (0) target = $region24
          $region23: #{custom-call.10} parent=19 // pred_region
            loop: start=0, step=1, limit=1
            $region25: #{custom-call.10} parent=23 // loop_pre_header
              _
            $region26: #{custom-call.10} parent=23 // loop_header
              %s95 = sphi 0, %s99
              %p96 = scmp.ge.s32.totalorder %s95, 1
              %s100 = sphi %s89, %s89
              %s101 = sphi %s87, %s87
            $region27: #{custom-call.10} parent=23 // loop_header_branch
              %98 = sbr.rel (%p96) target = $region31
            $region28: #{custom-call.10} parent=23 // loop_body
              %v102 = vld [vmem:[%s100] sm:$0xff]
              %103 = vst [vmem:[%s101] sm:$0xff] %v102
              %v104 = vld [vmem:[%s100 + $0x8] sm:$0xff]
              %105 = vst [vmem:[%s101 + $0x8] sm:$0xff] %v104
            $region29: #{custom-call.10} parent=23 // loop_footer
              %s99 = sadd.s32 1, %s95
            $region30: #{custom-call.10} parent=23 // loop_footer_branch
              %94 = sbr.rel target = $region26
            $region31: #{custom-call.10} parent=23 // loop_exit
              _
          $region24: #{custom-call.10} parent=19 // pred_fallthru
            _
          // Predicated region
          $region32: #{custom-call.10} parent=19 // pred_check
            _
          $region33: #{custom-call.10} parent=19 // pred_check_branch
            %107 = sbr.rel target = $region35
          $region34: #{custom-call.10} parent=19 // pred_region
            _
          $region35: #{custom-call.10} parent=19 // pred_fallthru
            _
        $region20: #{custom-call.10} parent=15 // pred_fallthru
          _
        %108 = vnop
      $region16: #{custom-call.10} parent=5 // pred_fallthru
        _
      %p109 = scmp.le.s32.totalorder 1, %s9
      %p110 = scmp.lt.s32.totalorder %s9, 25
      %p111 = pnand %p109, %p110
      %p112 = pneg %p111
      // Predicated region
      $region36: #{custom-call.10} parent=5 // pred_check
        _
      $region37: #{custom-call.10} parent=5 // pred_check_branch
        %114 = sbr.rel (%p111) target = $region39
      $region38: #{custom-call.10} parent=5 // pred_region
        #allocation5 [shape = 's32[9,128]{1,0}', space=vmem, size = 0x2000, scoped, tag = 'scratch for permutations']
        %s115 = ssub.s32 %s9, 1
        %s116 = sand.u32 %s14, 1
        %s117 = sand.u32 %s14, 1
        %s118 = smul.addr %s117, 16
        %s119 = scalar_lea.vmem [#allocation0], %s118
        %s120 = sand.u32 %s14, 1
        %s121 = sand.u32 %s14, 1
        %s122 = smul.addr %s121, 16
        %s123 = scalar_lea.vmem [#allocation0], %s122
        %s124 = sand.u32 %s14, 1
        %s125 = sand.u32 %s14, 1
        %s126 = smul.addr %s125, 16
        %s127 = scalar_lea.vmem [#allocation1], %s126
        %p128 = pneg %p37
        %p129 = pneg %p34
        %s130 = sand.u32 %s24, 1
        %s131 = scalar_lea.sflag [#allocation3], %s130
        %s132 = sand.u32 %s24, 1
        %s133 = smul.addr %s132, 8
        %s134 = scalar_lea.vmem [#allocation2], %s133
        %p135 = pneg %p65
        %p136 = pneg %p62
        %s137 = sand.u32 %s52, 1
        %s138 = sand.u32 %s52, 1
        %s139 = smul.addr %s138, 8
        %s140 = scalar_lea.vmem [#allocation4], %s139
        %s141 = sshrl.u32 %s14, 3
        %s142 = sshrl.u32 %s14, 3
        %v143 = vld [vmem:[%s119] sm:$0xff]
        %144 = vst [vmem:[%s127] sm:$0xff] %v143
        %s145 = scalar_lea.vmem %s127, 8 [#allocation1]
        %s146 = scalar_lea.vmem %s119, 8 [#allocation0]
        %v147 = vld [vmem:[%s146] sm:$0xff]
        %148 = vst [vmem:[%s145] sm:$0xff] %v147
        %s149 = sand.u32 %s14, 7
        %s150 = scalar_lea.vmem %s134, %s149 [#allocation2]
        %s151 = sand.u32 %s14, 7
        %s152 = scalar_lea.vmem %s140, %s151 [#allocation4]
        %153 = vst [vmem:[%s150] sm:$0x1] 0
        %v154 = vlaneseq
        %v155 = vshrl.u32 %v154, 7
        %v156 = vmov %v155
        loop: start=0, step=1, limit=2
        $region40: #{custom-call.10} parent=38 // loop_pre_header
          _
        $region41: #{custom-call.10} parent=38 // loop_header
          %s158 = sphi 0, %s162
          %p159 = scmp.ge.s32.totalorder %s158, 2
        $region42: #{custom-call.10} parent=38 // loop_header_branch
          %161 = sbr.rel (%p159) target = $region46
        $region43: #{custom-call.10} parent=38 // loop_body
          %s163 = smul.addr %s158, 8
          %s164 = scalar_lea.vmem [#allocation5], %s163
          %s165 = smul.u32 %s158, 8
          %v166 = vstv %s165
          %v167 = vadd.s32 %v156, %v166
          %168 = vst [vmem:[%s164] sm:$0xff] %v167
        $region44: #{custom-call.10} parent=38 // loop_footer
          %s162 = sadd.s32 1, %s158
        $region45: #{custom-call.10} parent=38 // loop_footer_branch
          %157 = sbr.rel target = $region41
        $region46: #{custom-call.10} parent=38 // loop_exit
          _
        loop: start=0, step=1, limit=9
        $region47: #{custom-call.10} parent=38 // loop_pre_header
          _
        $region48: #{custom-call.10} parent=38 // loop_header
          %s170 = sphi 0, %s174
          %p171 = scmp.ge.s32.totalorder %s170, 9
        $region49: #{custom-call.10} parent=38 // loop_header_branch
          %173 = sbr.rel (%p171) target = $region53
        $region50: #{custom-call.10} parent=38 // loop_body
          %v175 = vstv %s170
          %v176 = vlaneseq
          %v177 = vshrl.u32 %v176, 7
          %v178 = vmov %v177
          %v179 = vld [vmem:[%s127] sm:$0xff]
          %v180 = vand.u32 2147483647, %v179
          %v182 = vstv %s170
          %vm183 = vcmp.ge.s32.totalorder %v178, %v182
          %vm184 = vcmp.lt.s32.totalorder %v178, 9
          %vm185 = vmand %vm183, %vm184
          %vm186 = vcmp.lt.f32.partialorder -inf, %v180
          %vm187 = vmand %vm185, %vm186
          %v188 = vsel %vm187, %v178, %v175
          %v189 = vsel %vm187, %v180, -inf
          %s190 = scalar_lea.vmem %s127, 8 [#allocation1]
          %v191 = vld [vmem:[%s190] sm:$0xff]
          %v192 = vand.u32 2147483647, %v191
          %v193 = vadd.s32 %v178, 8
          %v194 = vstv %s170
          %vm195 = vcmp.ge.s32.totalorder %v193, %v194
          %vm196 = vcmp.lt.s32.totalorder %v193, 9
          %vm197 = vmand %vm195, %vm196
          %vm198 = vcmp.lt.f32.partialorder %v189, %v192
          %vm199 = vmand %vm197, %vm198
          %v200 = vsel %vm199, %v193, %v188
          %v201 = vsel %vm199, %v192, %v189
          %v202 = vrot.slane %v201, 1
          %v203 = vrot.slane %v200, 1
          %vm204 = vcmp.ge.f32.partialorder %v202, %v201
          %v205 = vsel %vm204, %v202, %v201
          %v206 = vsel %vm204, %v203, %v200
          %v207 = vrot.slane %v202, 1
          %v208 = vrot.slane %v203, 1
          %vm209 = vcmp.ge.f32.partialorder %v207, %v205
          %v210 = vsel %vm209, %v207, %v205
          %v211 = vsel %vm209, %v208, %v206
          %v212 = vrot.slane %v207, 1
          %v213 = vrot.slane %v208, 1
          %vm214 = vcmp.ge.f32.partialorder %v212, %v210
          %v215 = vsel %vm214, %v212, %v210
          %v216 = vsel %vm214, %v213, %v211
          %v217 = vrot.slane %v212, 1
          %v218 = vrot.slane %v213, 1
          %vm219 = vcmp.ge.f32.partialorder %v217, %v215
          %v220 = vsel %vm219, %v217, %v215
          %v221 = vsel %vm219, %v218, %v216
          %v222 = vrot.slane %v217, 1
          %v223 = vrot.slane %v218, 1
          %vm224 = vcmp.ge.f32.partialorder %v222, %v220
          %v225 = vsel %vm224, %v222, %v220
          %v226 = vsel %vm224, %v223, %v221
          %v227 = vrot.slane %v222, 1
          %v228 = vrot.slane %v223, 1
          %vm229 = vcmp.ge.f32.partialorder %v227, %v225
          %v230 = vsel %vm229, %v227, %v225
          %v231 = vsel %vm229, %v228, %v226
          %v232 = vrot.slane %v227, 1
          %v233 = vrot.slane %v228, 1
          %vm234 = vcmp.ge.f32.partialorder %v232, %v230
          %v235 = vsel %vm234, %v232, %v230
          %v236 = vsel %vm234, %v233, %v231
          %s237 = ssub.s32 128, %s170
          %238 = vrot.lane.b32.xlu0 %v236, %s237
          %v239 = vpop.permute.xlu0 %238
          %s240 = vtos %v239
          %v241 = vstv %s170
          %v242 = vlaneseq
          %v243 = vand.u32 %v242, 127
          %vm244 = vcmp.eq.s32.totalorder %v243, %v241
          %v245 = vstv %s240
          %v246 = vld [vmem:[%s150] ss:$0 sm:$0xff]
          %v247 = vsel %vm244, %v245, %v246
          %248 = vst [vmem:[%s150] sm:$0x1] %v247
          %s249 = scalar_lea.vmem %s127, %s170 [#allocation1]
          %s250 = scalar_lea.vmem %s127, %s240 [#allocation1]
          %v251 = vld [vmem:[%s249] ss:$0 sm:$0xff]
          %v252 = vld [vmem:[%s250] ss:$0 sm:$0xff]
          %253 = vst [vmem:[%s250] sm:$0x1] %v251
          %254 = vst [vmem:[%s249] sm:$0x1] %v252
          %s255 = scalar_lea.vmem [#allocation5], %s170
          %s256 = scalar_lea.vmem [#allocation5], %s240
          %v257 = vld [vmem:[%s255] ss:$0 sm:$0xff]
          %v258 = vld [vmem:[%s256] ss:$0 sm:$0xff]
          %259 = vst [vmem:[%s256] sm:$0x1] %v257
          %260 = vst [vmem:[%s255] sm:$0x1] %v258
          %vm261 = vcmp.ne.f32.partialorder %v252, 0.0
          %vm262 = vmand %vm244, %vm261
          %v263 = vsel %vm262, %v252, 1.0
          %v264 = vlaneseq
          %v265 = vand.u32 %v264, 127
          %v266 = vstv %s170
          %vm267 = vcmp.gt.s32.totalorder %v265, %v266
          %v268 = vsel %vm267, %v252, 0.0
          %v269 = vlaneseq
          %v270 = vshrl.u32 %v269, 7
          %v271 = vmov %v270
          %v272 = vld [vmem:[%s127] sm:$0xff]
          %v274 = vstv %s170
          %vm275 = vcmp.gt.s32.totalorder %v271, %v274
          %v276 = vsel %vm275, %v263, 1.0
          %v277 = vrcp.pop %v276
          %v278 = vmul.f32 %v272, %v277
          %vm279 = vmand %vm275, %vm244
          %v280 = vsel %vm279, %v278, 0.0
          %281 = vadd.xlane.f32.xlu0 %v280
          %v282 = vpop.xlane.xlu0 %281
          %v283 = vmul.f32 %v282, %v268
          %v284 = vsub.f32 %v278, %v283
          %285 = vst [vmem:[%s127] sm:$0xff] %v284
          %s286 = scalar_lea.vmem %s127, 8 [#allocation1]
          %v287 = vld [vmem:[%s286] sm:$0xff]
          %v288 = vadd.s32 %v271, 8
          %v289 = vstv %s170
          %vm290 = vcmp.gt.s32.totalorder %v288, %v289
          %v291 = vsel %vm290, %v263, 1.0
          %v292 = vrcp.pop %v291
          %v293 = vmul.f32 %v287, %v292
          %vm294 = vmand %vm290, %vm244
          %v295 = vsel %vm294, %v293, 0.0
          %296 = vadd.xlane.f32.xlu0 %v295
          %v297 = vpop.xlane.xlu0 %296
          %v298 = vmul.f32 %v297, %v268
          %v299 = vsub.f32 %v293, %v298
          %300 = vst [vmem:[%s286] sm:$0xff] %v299
        $region51: #{custom-call.10} parent=38 // loop_footer
          %s174 = sadd.s32 1, %s170
        $region52: #{custom-call.10} parent=38 // loop_footer_branch
          %169 = sbr.rel target = $region48
        $region53: #{custom-call.10} parent=38 // loop_exit
          _
        %v301 = vld [vmem:[#allocation5] sm:$0xff]
        %s302 = scalar_lea.vmem [#allocation5], 8
        %v303 = vld [vmem:[%s302] sm:$0xff]
        %s304 = scalar_lea.vmem [#allocation5], 16
        %s305 = scalar_lea.vmem [#allocation5], 24
        %s306 = scalar_lea.vmem [#allocation5], 32
        %s307 = scalar_lea.vmem [#allocation5], 40
        %s308 = scalar_lea.vmem [#allocation5], 48
        %s309 = scalar_lea.vmem [#allocation5], 56
        %s310 = scalar_lea.vmem [#allocation5], 64
        %s311 = scalar_lea.vmem [#allocation5], 72
        %s312 = scalar_lea.vmem [#allocation5], 80
        %s313 = scalar_lea.vmem [#allocation5], 88
        %s314 = scalar_lea.vmem [#allocation5], 96
        %s315 = scalar_lea.vmem [#allocation5], 104
        %s316 = scalar_lea.vmem [#allocation5], 112
        %s317 = scalar_lea.vmem [#allocation5], 120
        %318 = vxpose.xlu0.b32.start [1/16] %v301, 128
        %319 = vxpose.xlu0.b32.cont [2/16] %v303, 128
        %320 = vxpose.xlu0.b32.cont [3/16] 0, 128
        %321 = vxpose.xlu0.b32.cont [4/16] 0, 128
        %322 = vxpose.xlu0.b32.cont [5/16] 0, 128
        %323 = vxpose.xlu0.b32.cont [6/16] 0, 128
        %324 = vxpose.xlu0.b32.cont [7/16] 0, 128
        %325 = vxpose.xlu0.b32.cont [8/16] 0, 128
        %326 = vxpose.xlu0.b32.cont [9/16] 0, 128
        %327 = vxpose.xlu0.b32.cont [10/16] 0, 128
        %328 = vxpose.xlu0.b32.cont [11/16] 0, 128
        %329 = vxpose.xlu0.b32.cont [12/16] 0, 128
        %330 = vxpose.xlu0.b32.cont [13/16] 0, 128
        %331 = vxpose.xlu0.b32.cont [14/16] 0, 128
        %332 = vxpose.xlu0.b32.cont [15/16] 0, 128
        %333 = vxpose.xlu0.b32.end [16/16] 0, 128
        %v334 = vpop.trf.xlu0
        %v335 = vpop.trf.xlu0
        %v336 = vpop.trf.xlu0
        %v337 = vpop.trf.xlu0
        %v338 = vpop.trf.xlu0
        %v339 = vpop.trf.xlu0
        %v340 = vpop.trf.xlu0
        %v341 = vpop.trf.xlu0
        %v342 = vpop.trf.xlu0
        %v343 = vpop.trf.xlu0
        %v344 = vpop.trf.xlu0
        %v345 = vpop.trf.xlu0
        %v346 = vpop.trf.xlu0
        %v347 = vpop.trf.xlu0
        %v348 = vpop.trf.xlu0
        %v349 = vpop.trf.xlu0
        %350 = vst [vmem:[%s152] sm:$0x1] %v334
        %s351 = sand.u32 %s14, 1
        %s352 = sand.u32 %s14, 1
        %s353 = smul.addr %s352, 16
        %s354 = scalar_lea.vmem [#allocation1], %s353
        %s355 = sand.u32 %s24, 1
        %s356 = scalar_lea.sflag [#allocation3], %s355
        %s357 = sand.u32 %s24, 1
        %s358 = smul.addr %s357, 8
        %s359 = scalar_lea.vmem [#allocation2], %s358
        %s360 = sand.u32 %s52, 1
        %s361 = sand.u32 %s52, 1
        %s362 = smul.addr %s361, 8
        %s363 = scalar_lea.vmem [#allocation4], %s362
        %s364 = smul.addr %s14, 16
        %s365 = scalar_lea.vmem %s1, %s364
        // Predicated region
        $region54: #{custom-call.10} parent=38 // pred_check
          _
        $region55: #{custom-call.10} parent=38 // pred_check_branch
          %367 = sbr.rel (0) target = $region57
        $region56: #{custom-call.10} parent=38 // pred_region
          // Predicated region
          $region58: #{custom-call.10} parent=56 // pred_check
            _
          $region59: #{custom-call.10} parent=56 // pred_check_branch
            %369 = sbr.rel (0) target = $region61
          $region60: #{custom-call.10} parent=56 // pred_region
            loop: start=0, step=1, limit=1
            $region62: #{custom-call.10} parent=60 // loop_pre_header
              _
            $region63: #{custom-call.10} parent=60 // loop_header
              %s371 = sphi 0, %s375
              %p372 = scmp.ge.s32.totalorder %s371, 1
              %s376 = sphi %s354, %s354
              %s377 = sphi %s365, %s365
            $region64: #{custom-call.10} parent=60 // loop_header_branch
              %374 = sbr.rel (%p372) target = $region68
            $region65: #{custom-call.10} parent=60 // loop_body
              %v378 = vld [vmem:[%s376] sm:$0xff]
              %379 = vst [vmem:[%s377] sm:$0xff] %v378
              %v380 = vld [vmem:[%s376 + $0x8] sm:$0xff]
              %381 = vst [vmem:[%s377 + $0x8] sm:$0xff] %v380
            $region66: #{custom-call.10} parent=60 // loop_footer
              %s375 = sadd.s32 1, %s371
            $region67: #{custom-call.10} parent=60 // loop_footer_branch
              %370 = sbr.rel target = $region63
            $region68: #{custom-call.10} parent=60 // loop_exit
              _
          $region61: #{custom-call.10} parent=56 // pred_fallthru
            _
          // Predicated region
          $region69: #{custom-call.10} parent=56 // pred_check
            _
          $region70: #{custom-call.10} parent=56 // pred_check_branch
            %383 = sbr.rel target = $region72
          $region71: #{custom-call.10} parent=56 // pred_region
            _
          $region72: #{custom-call.10} parent=56 // pred_fallthru
            _
        $region57: #{custom-call.10} parent=38 // pred_fallthru
          _
        %384 = vnop
        // Predicated region
        $region73: #{custom-call.10} parent=38 // pred_check
          %p385 = pneg %p34
        $region74: #{custom-call.10} parent=38 // pred_check_branch
          %387 = sbr.rel (%p385) target = $region76
        $region75: #{custom-call.10} parent=38 // pred_region
          %s388 = sshrl.u32 %s14, 3
          %s390 = ssub.s32 128, 128
          %391 = vsyncadd %s356, %s390
          %s392 = smul.addr %s388, 128
          %s393 = scalar_lea.hbm %s2, %s392
          %s395 = sshll.u32 %s359, 4
          %s396 = int_to_ptr.vmem [resolvable:$true] %s395
          %398 = dma.vmem_to_hbm [thread:$0]  %s396, 128, %s393, %s356
        $region76: #{custom-call.10} parent=38 // pred_fallthru
          _
        // Predicated region
        $region77: #{custom-call.10} parent=38 // pred_check
          %p399 = pneg %p62
        $region78: #{custom-call.10} parent=38 // pred_check_branch
          %401 = sbr.rel (%p399) target = $region80
        $region79: #{custom-call.10} parent=38 // pred_region
          %s402 = sshrl.u32 %s14, 3
          %s403 = smul.addr %s402, 8
          %s404 = scalar_lea.vmem %s3, %s403
          // Predicated region
          $region81: #{custom-call.10} parent=79 // pred_check
            _
          $region82: #{custom-call.10} parent=79 // pred_check_branch
            %406 = sbr.rel (0) target = $region84
          $region83: #{custom-call.10} parent=79 // pred_region
            // Predicated region
            $region85: #{custom-call.10} parent=83 // pred_check
              _
            $region86: #{custom-call.10} parent=83 // pred_check_branch
              %408 = sbr.rel (0) target = $region88
            $region87: #{custom-call.10} parent=83 // pred_region
              // Predicated region
              $region100: #{custom-call.10} parent=87 // pred_check
                _
              $region101: #{custom-call.10} parent=87 // pred_check_branch
                %423 = sbr.rel (0) target = $region103
              $region102: #{custom-call.10} parent=87 // pred_region
                loop: start=0, step=1, limit=1
                $region104: #{custom-call.10} parent=102 // loop_pre_header
                  _
                $region105: #{custom-call.10} parent=102 // loop_header
                  %s425 = sphi 0, %s429
                  %p426 = scmp.ge.s32.totalorder %s425, 1
                  %s430 = sphi %s363, %s363
                  %s431 = sphi %s404, %s404
                $region106: #{custom-call.10} parent=102 // loop_header_branch
                  %428 = sbr.rel (%p426) target = $region110
                $region107: #{custom-call.10} parent=102 // loop_body
                  %v432 = vld [vmem:[%s430] sm:$0xff]
                  %433 = vst [vmem:[%s431] sm:$0xff] %v432
                $region108: #{custom-call.10} parent=102 // loop_footer
                  %s429 = sadd.s32 1, %s425
                $region109: #{custom-call.10} parent=102 // loop_footer_branch
                  %424 = sbr.rel target = $region105
                $region110: #{custom-call.10} parent=102 // loop_exit
                  _
              $region103: #{custom-call.10} parent=87 // pred_fallthru
                _
              // Predicated region
              $region111: #{custom-call.10} parent=87 // pred_check
                _
              $region112: #{custom-call.10} parent=87 // pred_check_branch
                %435 = sbr.rel target = $region114
              $region113: #{custom-call.10} parent=87 // pred_region
                _
              $region114: #{custom-call.10} parent=87 // pred_fallthru
                _
            $region88: #{custom-call.10} parent=83 // pred_fallthru
              _
            // Predicated region
            $region89: #{custom-call.10} parent=83 // pred_check
              _
            $region90: #{custom-call.10} parent=83 // pred_check_branch
              %410 = sbr.rel target = $region92
            $region91: #{custom-call.10} parent=83 // pred_region
              loop: start=0, step=1, limit=1
              $region93: #{custom-call.10} parent=91 // loop_pre_header
                _
              $region94: #{custom-call.10} parent=91 // loop_header
                %s413 = sphi 0, %s417
                %p414 = scmp.ge.s32.totalorder %s413, 1
                %s418 = sphi %s363, %s363
                %s419 = sphi %s404, %s404
              $region95: #{custom-call.10} parent=91 // loop_header_branch
                %416 = sbr.rel (%p414) target = $region99
              $region96: #{custom-call.10} parent=91 // loop_body
                %v420 = vld [vmem:[%s418] sm:$0xff]
                %421 = vst [vmem:[%s419] sm:$0xff] %v420
              $region97: #{custom-call.10} parent=91 // loop_footer
                %s417 = sadd.s32 1, %s413
              $region98: #{custom-call.10} parent=91 // loop_footer_branch
                %412 = sbr.rel target = $region94
              $region99: #{custom-call.10} parent=91 // loop_exit
                _
            $region92: #{custom-call.10} parent=83 // pred_fallthru
              _
          $region84: #{custom-call.10} parent=79 // pred_fallthru
            _
          %436 = vnop
        $region80: #{custom-call.10} parent=38 // pred_fallthru
          _
      $region39: #{custom-call.10} parent=5 // pred_fallthru
        _
      %p437 = scmp.le.s32.totalorder 2, %s9
      // Predicated region
      $region115: #{custom-call.10} parent=5 // pred_check
        %p438 = pneg %p437
      $region116: #{custom-call.10} parent=5 // pred_check_branch
        %440 = sbr.rel (%p438) target = $region118
      $region117: #{custom-call.10} parent=5 // pred_region
        %s441 = ssub.s32 %s9, 2
        %s442 = sand.u32 %s15, 1
        %s443 = sand.u32 %s15, 1
        %s444 = smul.addr %s443, 16
        %s445 = scalar_lea.vmem [#allocation1], %s444
        // Predicated region
        $region119: #{custom-call.10} parent=117 // pred_check
          %p446 = pneg %p40
        $region120: #{custom-call.10} parent=117 // pred_check_branch
          %448 = sbr.rel (%p446) target = $region122
        $region121: #{custom-call.10} parent=117 // pred_region
          %s449 = sand.u32 %s25, 1
          %s450 = scalar_lea.sflag [#allocation3], %s449
          %s451 = sand.u32 %s25, 1
          %s452 = smul.addr %s451, 8
          %s453 = scalar_lea.vmem [#allocation2], %s452
          %454 = dma.done %s450, 128
        $region122: #{custom-call.10} parent=117 // pred_fallthru
          _
        // Predicated region
        $region123: #{custom-call.10} parent=117 // pred_check
          %p455 = pneg %p68
        $region124: #{custom-call.10} parent=117 // pred_check_branch
          %457 = sbr.rel (%p455) target = $region126
        $region125: #{custom-call.10} parent=117 // pred_region
          %s458 = sand.u32 %s53, 1
          %s459 = sand.u32 %s53, 1
          %s460 = smul.addr %s459, 8
          %s461 = scalar_lea.vmem [#allocation4], %s460
        $region126: #{custom-call.10} parent=117 // pred_fallthru
          _
      $region118: #{custom-call.10} parent=5 // pred_fallthru
        _
    $region6: #{custom-call.10} parent=1 // loop_footer
      %s13 = sadd.s32 1, %s9
    $region7: #{custom-call.10} parent=1 // loop_footer_branch
      %8 = sbr.rel target = $region3
    $region8: #{custom-call.10} parent=1 // loop_exit
      _
    %462 = vsyncpa [#allocation3], 1
    %s463 = scalar_lea.sflag [#allocation3], 1
    %464 = vsyncpa %s463, 1

// kernel: custom-call.11
$region0: #{custom-call.11}
  %s0 = inlined_call_operand.vmem [shape: f32[24,1,9,9], index: 0, kind: input, shape index: {}]
  %s1 = inlined_call_operand.vmem [shape: f32[24,1,9,9], index: 1, kind: output, shape index: {}]
  $region1: #{custom-call.11} parent=0
    #allocation0 [shape = 'u8[16384]{0}', space=vmem, size = 0x4000, scoped, tag = 'operand span for operand 0']
    #allocation1 [shape = 'u8[16384]{0}', space=vmem, size = 0x4000, scoped, tag = 'operand span for operand 1']
    loop: start=0, step=1, limit=26
    $region2: #{custom-call.11} parent=1 // loop_pre_header
      _
    $region3: #{custom-call.11} parent=1 // loop_header
      %s3 = sphi 0, %s7
      %p4 = scmp.ge.s32.totalorder %s3, 26
      %s10 = sphi 0, %s36
      %s11 = sphi 0, %s32
      %s12 = sphi 0, %s28
      %s13 = sphi 0, %s24
      %s14 = sphi 0, %s10
      %s15 = sphi 0, %s11
      %s16 = sphi 0, %s12
      %s17 = sphi 0, %s13
      %s18 = sphi 0, %s14
      %s19 = sphi 0, %s15
      %s20 = sphi 0, %s16
      %s21 = sphi 0, %s17
    $region4: #{custom-call.11} parent=1 // loop_header_branch
      %6 = sbr.rel (%p4) target = $region8
    $region5: #{custom-call.11} parent=1 // loop_body
      %s8 = ssub.s32 %s3, 1
      %s9 = ssub.s32 %s3, 2
      %s22 = sadd.s32 1, %s13
      %p23 = scmp.ge.s32.totalorder %s22, 1
      %s24 = scalar_select %p23, 0, %s22
      %s25 = sadd.s32 1, %s12
      %s26 = scalar_select %p23, %s25, %s12
      %p27 = scmp.ge.s32.totalorder %s26, 1
      %s28 = scalar_select %p27, 0, %s26
      %s29 = sadd.s32 1, %s11
      %s30 = scalar_select %p27, %s29, %s11
      %p31 = scmp.ge.s32.totalorder %s30, 1
      %s32 = scalar_select %p31, 0, %s30
      %s33 = sadd.s32 1, %s10
      %s34 = scalar_select %p31, %s33, %s10
      %p35 = scmp.ge.s32.totalorder %s34, 24
      %s36 = scalar_select %p35, 0, %s34
      %p37 = scmp.le.s32.totalorder 1, %s3
      %p38 = scmp.lt.s32.totalorder %s3, 25
      %p39 = pnand %p37, %p38
      %p40 = pneg %p39
      // Predicated region
      $region9: #{custom-call.11} parent=5 // pred_check
        _
      $region10: #{custom-call.11} parent=5 // pred_check_branch
        %42 = sbr.rel (%p39) target = $region12
      $region11: #{custom-call.11} parent=5 // pred_region
        %s43 = ssub.s32 %s3, 1
      $region12: #{custom-call.11} parent=5 // pred_fallthru
        _
      %p44 = scmp.lt.s32.totalorder %s3, 24
      // Predicated region
      $region13: #{custom-call.11} parent=5 // pred_check
        %p45 = pneg %p44
      $region14: #{custom-call.11} parent=5 // pred_check_branch
        %47 = sbr.rel (%p45) target = $region16
      $region15: #{custom-call.11} parent=5 // pred_region
        %s48 = sand.u32 %s3, 1
        %s49 = sand.u32 %s3, 1
        %s50 = smul.addr %s49, 16
        %s51 = scalar_lea.vmem [#allocation0], %s50
        %s52 = sadd.s32 %s13, %s12
        %s53 = smul.addr %s11, 2
        %s54 = sadd.s32 %s52, %s53
        %s55 = smul.addr %s10, 2
        %s56 = sadd.s32 %s54, %s55
        %s57 = smul.addr %s56, 8
        %s58 = scalar_lea.vmem %s0, %s57
        // Predicated region
        $region17: #{custom-call.11} parent=15 // pred_check
          _
        $region18: #{custom-call.11} parent=15 // pred_check_branch
          %60 = sbr.rel (0) target = $region20
        $region19: #{custom-call.11} parent=15 // pred_region
          // Predicated region
          $region21: #{custom-call.11} parent=19 // pred_check
            _
          $region22: #{custom-call.11} parent=19 // pred_check_branch
            %62 = sbr.rel (0) target = $region24
          $region23: #{custom-call.11} parent=19 // pred_region
            // Predicated region
            $region36: #{custom-call.11} parent=23 // pred_check
              _
            $region37: #{custom-call.11} parent=23 // pred_check_branch
              %79 = sbr.rel (0) target = $region39
            $region38: #{custom-call.11} parent=23 // pred_region
              loop: start=0, step=1, limit=1
              $region40: #{custom-call.11} parent=38 // loop_pre_header
                _
              $region41: #{custom-call.11} parent=38 // loop_header
                %s81 = sphi 0, %s85
                %p82 = scmp.ge.s32.totalorder %s81, 1
                %s86 = sphi %s58, %s58
                %s87 = sphi %s51, %s51
              $region42: #{custom-call.11} parent=38 // loop_header_branch
                %84 = sbr.rel (%p82) target = $region46
              $region43: #{custom-call.11} parent=38 // loop_body
                %v88 = vld [vmem:[%s86] sm:$0xff]
                %89 = vst [vmem:[%s87] sm:$0xff] %v88
                %v90 = vld [vmem:[%s86 + $0x8] sm:$0xff]
                %91 = vst [vmem:[%s87 + $0x8] sm:$0xff] %v90
              $region44: #{custom-call.11} parent=38 // loop_footer
                %s85 = sadd.s32 1, %s81
              $region45: #{custom-call.11} parent=38 // loop_footer_branch
                %80 = sbr.rel target = $region41
              $region46: #{custom-call.11} parent=38 // loop_exit
                _
            $region39: #{custom-call.11} parent=23 // pred_fallthru
              _
            // Predicated region
            $region47: #{custom-call.11} parent=23 // pred_check
              _
            $region48: #{custom-call.11} parent=23 // pred_check_branch
              %93 = sbr.rel target = $region50
            $region49: #{custom-call.11} parent=23 // pred_region
              _
            $region50: #{custom-call.11} parent=23 // pred_fallthru
              _
          $region24: #{custom-call.11} parent=19 // pred_fallthru
            _
          // Predicated region
          $region25: #{custom-call.11} parent=19 // pred_check
            _
          $region26: #{custom-call.11} parent=19 // pred_check_branch
            %64 = sbr.rel target = $region28
          $region27: #{custom-call.11} parent=19 // pred_region
            loop: start=0, step=1, limit=1
            $region29: #{custom-call.11} parent=27 // loop_pre_header
              _
            $region30: #{custom-call.11} parent=27 // loop_header
              %s67 = sphi 0, %s71
              %p68 = scmp.ge.s32.totalorder %s67, 1
              %s72 = sphi %s58, %s58
              %s73 = sphi %s51, %s51
            $region31: #{custom-call.11} parent=27 // loop_header_branch
              %70 = sbr.rel (%p68) target = $region35
            $region32: #{custom-call.11} parent=27 // loop_body
              %v74 = vld [vmem:[%s72] sm:$0xff]
              %75 = vst [vmem:[%s73] sm:$0xff] %v74
              %v76 = vld [vmem:[%s72 + $0x8] sm:$0xff]
              %77 = vst [vmem:[%s73 + $0x8] sm:$0xff] %v76
            $region33: #{custom-call.11} parent=27 // loop_footer
              %s71 = sadd.s32 1, %s67
            $region34: #{custom-call.11} parent=27 // loop_footer_branch
              %66 = sbr.rel target = $region30
            $region35: #{custom-call.11} parent=27 // loop_exit
              _
          $region28: #{custom-call.11} parent=19 // pred_fallthru
            _
        $region20: #{custom-call.11} parent=15 // pred_fallthru
          _
        %94 = vnop
      $region16: #{custom-call.11} parent=5 // pred_fallthru
        _
      %p95 = scmp.le.s32.totalorder 1, %s3
      %p96 = scmp.lt.s32.totalorder %s3, 25
      %p97 = pnand %p95, %p96
      %p98 = pneg %p97
      // Predicated region
      $region51: #{custom-call.11} parent=5 // pred_check
        _
      $region52: #{custom-call.11} parent=5 // pred_check_branch
        %100 = sbr.rel (%p97) target = $region54
      $region53: #{custom-call.11} parent=5 // pred_region
        #allocation2 [shape = 'f32[9,9]{1,0}', space=vmem, size = 0x2000, scoped, tag = 'rescaled input a']
        %s101 = ssub.s32 %s3, 1
        %s102 = sand.u32 %s8, 1
        %s103 = sand.u32 %s8, 1
        %s104 = smul.addr %s103, 16
        %s105 = scalar_lea.vmem [#allocation0], %s104
        %s106 = sand.u32 %s8, 1
        %s107 = sand.u32 %s8, 1
        %s108 = smul.addr %s107, 16
        %s109 = scalar_lea.vmem [#allocation0], %s108
        %s110 = sand.u32 %s8, 1
        %s111 = sand.u32 %s8, 1
        %s112 = smul.addr %s111, 16
        %s113 = scalar_lea.vmem [#allocation1], %s112
        %v114 = vlaneseq
        %v115 = vand.u32 %v114, 127
        %vm116 = vcmp.lt.s32.totalorder %v115, 9
        %v117 = vlaneseq
        %v118 = vshrl.u32 %v117, 7
        %vm120 = vcmp.eq.s32.totalorder %v118, %v115
        %v121 = vld [vmem:[%s105] sm:$0xff]
        %v122 = vsel %vm120, %v121, 0.0
        %123 = vadd.xlane.f32.xlu0 %v122
        %v124 = vpop.xlane.xlu0 %123
        %vm125 = vcmp.le.s32.totalorder %v118, %v115
        %vm126 = vmand %vm125, %vm116
        %v127 = vsel %vm126, %v121, 0.0
        %v128 = vrcp.pop %v124
        %v129 = vmul.f32 %v127, %v128
        %130 = vst [vmem:[#allocation2] sm:$0xff] %v129
        %s131 = scalar_lea.vmem %s105, 8 [#allocation0]
        %s132 = scalar_lea.vmem [#allocation2], 8
        %v133 = vlaneseq
        %v134 = vshrl.u32 %v133, 7
        %v135 = vadd.s32 %v134, 8
        %vm136 = vcmp.eq.s32.totalorder %v135, %v115
        %v137 = vld [vmem:[%s131] sm:$0xff]
        %v138 = vsel %vm136, %v137, 0.0
        %139 = vadd.xlane.f32.xlu0 %v138
        %v140 = vpop.xlane.xlu0 %139
        %vm141 = vcmp.le.s32.totalorder %v135, %v115
        %vm142 = vmand %vm141, %vm116
        %v143 = vsel %vm142, %v137, 0.0
        %v144 = vrcp.pop %v140
        %v145 = vmul.f32 %v143, %v144
        %146 = vst [vmem:[%s132] sm:$0xff] %v145
        %v147 = vlaneseq
        %v148 = vand.u32 %v147, 127
        %v149 = vlaneseq
        %v150 = vshrl.u32 %v149, 7
        %vm152 = vcmp.eq.s32.totalorder %v148, %v150
        %v153 = vsel %vm152, -1.0, 0.0
        %v154 = vlaneseq
        %v155 = vand.u32 %v154, 127
        %v156 = vlaneseq
        %v157 = vshrl.u32 %v156, 7
        %v158 = vadd.s32 %v157, 8
        %vm159 = vcmp.eq.s32.totalorder %v155, %v158
        %v160 = vlaneseq
        %v161 = vand.u32 %v160, 127
        %vm162 = vcmp.eq.s32.totalorder %v161, 8
        %v163 = vsel %vm162, 1.0, -1.0
        %v164 = vsel %vm159, %v163, 0.0
        %s165 = scalar_lea.vmem [#allocation2], 7
        %v166 = vld [vmem:[%s165] ss:$0 sm:$0xff]
        %v167 = vxor.u32 %v166, 2147483648
        %v168 = vlaneseq
        %v169 = vand.u32 %v168, 127
        %vm170 = vcmp.eq.s32.totalorder %v169, 7
        %v171 = vmul.f32 %v167, %v153
        %172 = vadd.xlane.f32.xlu0 %v171
        %v173 = vpop.xlane.xlu0 %172
        %v174 = vsel %vm170, %v173, %v153
        %v175 = vmul.f32 %v167, %v164
        %176 = vadd.xlane.f32.xlu0 %v175
        %v177 = vpop.xlane.xlu0 %176
        %v178 = vsel %vm170, %v177, %v164
        %s179 = scalar_lea.vmem [#allocation2], 6
        %v180 = vld [vmem:[%s179] ss:$0 sm:$0xff]
        %v181 = vxor.u32 %v180, 2147483648
        %v182 = vlaneseq
        %v183 = vand.u32 %v182, 127
        %vm184 = vcmp.eq.s32.totalorder %v183, 6
        %v185 = vmul.f32 %v181, %v174
        %186 = vadd.xlane.f32.xlu0 %v185
        %v187 = vpop.xlane.xlu0 %186
        %v188 = vsel %vm184, %v187, %v174
        %v189 = vmul.f32 %v181, %v178
        %190 = vadd.xlane.f32.xlu0 %v189
        %v191 = vpop.xlane.xlu0 %190
        %v192 = vsel %vm184, %v191, %v178
        %s193 = scalar_lea.vmem [#allocation2], 5
        %v194 = vld [vmem:[%s193] ss:$0 sm:$0xff]
        %v195 = vxor.u32 %v194, 2147483648
        %v196 = vlaneseq
        %v197 = vand.u32 %v196, 127
        %vm198 = vcmp.eq.s32.totalorder %v197, 5
        %v199 = vmul.f32 %v195, %v188
        %200 = vadd.xlane.f32.xlu0 %v199
        %v201 = vpop.xlane.xlu0 %200
        %v202 = vsel %vm198, %v201, %v188
        %v203 = vmul.f32 %v195, %v192
        %204 = vadd.xlane.f32.xlu0 %v203
        %v205 = vpop.xlane.xlu0 %204
        %v206 = vsel %vm198, %v205, %v192
        %s207 = scalar_lea.vmem [#allocation2], 4
        %v208 = vld [vmem:[%s207] ss:$0 sm:$0xff]
        %v209 = vxor.u32 %v208, 2147483648
        %v210 = vlaneseq
        %v211 = vand.u32 %v210, 127
        %vm212 = vcmp.eq.s32.totalorder %v211, 4
        %v213 = vmul.f32 %v209, %v202
        %214 = vadd.xlane.f32.xlu0 %v213
        %v215 = vpop.xlane.xlu0 %214
        %v216 = vsel %vm212, %v215, %v202
        %v217 = vmul.f32 %v209, %v206
        %218 = vadd.xlane.f32.xlu0 %v217
        %v219 = vpop.xlane.xlu0 %218
        %v220 = vsel %vm212, %v219, %v206
        %s221 = scalar_lea.vmem [#allocation2], 3
        %v222 = vld [vmem:[%s221] ss:$0 sm:$0xff]
        %v223 = vxor.u32 %v222, 2147483648
        %v224 = vlaneseq
        %v225 = vand.u32 %v224, 127
        %vm226 = vcmp.eq.s32.totalorder %v225, 3
        %v227 = vmul.f32 %v223, %v216
        %228 = vadd.xlane.f32.xlu0 %v227
        %v229 = vpop.xlane.xlu0 %228
        %v230 = vsel %vm226, %v229, %v216
        %v231 = vmul.f32 %v223, %v220
        %232 = vadd.xlane.f32.xlu0 %v231
        %v233 = vpop.xlane.xlu0 %232
        %v234 = vsel %vm226, %v233, %v220
        %s235 = scalar_lea.vmem [#allocation2], 2
        %v236 = vld [vmem:[%s235] ss:$0 sm:$0xff]
        %v237 = vxor.u32 %v236, 2147483648
        %v238 = vlaneseq
        %v239 = vand.u32 %v238, 127
        %vm240 = vcmp.eq.s32.totalorder %v239, 2
        %v241 = vmul.f32 %v237, %v230
        %242 = vadd.xlane.f32.xlu0 %v241
        %v243 = vpop.xlane.xlu0 %242
        %v244 = vsel %vm240, %v243, %v230
        %v245 = vmul.f32 %v237, %v234
        %246 = vadd.xlane.f32.xlu0 %v245
        %v247 = vpop.xlane.xlu0 %246
        %v248 = vsel %vm240, %v247, %v234
        %s249 = scalar_lea.vmem [#allocation2], 1
        %v250 = vld [vmem:[%s249] ss:$0 sm:$0xff]
        %v251 = vxor.u32 %v250, 2147483648
        %v252 = vlaneseq
        %v253 = vand.u32 %v252, 127
        %vm254 = vcmp.eq.s32.totalorder %v253, 1
        %v255 = vmul.f32 %v251, %v244
        %256 = vadd.xlane.f32.xlu0 %v255
        %v257 = vpop.xlane.xlu0 %256
        %v258 = vsel %vm254, %v257, %v244
        %v259 = vmul.f32 %v251, %v248
        %260 = vadd.xlane.f32.xlu0 %v259
        %v261 = vpop.xlane.xlu0 %260
        %v262 = vsel %vm254, %v261, %v248
        %v263 = vld [vmem:[#allocation2] ss:$0 sm:$0xff]
        %v264 = vxor.u32 %v263, 2147483648
        %v265 = vlaneseq
        %v266 = vand.u32 %v265, 127
        %vm267 = vcmp.eq.s32.totalorder %v266, 0
        %v268 = vmul.f32 %v264, %v258
        %269 = vadd.xlane.f32.xlu0 %v268
        %v270 = vpop.xlane.xlu0 %269
        %v271 = vsel %vm267, %v270, %v258
        %v272 = vmul.f32 %v264, %v262
        %273 = vadd.xlane.f32.xlu0 %v272
        %v274 = vpop.xlane.xlu0 %273
        %v275 = vsel %vm267, %v274, %v262
        %v276 = vrcp.pop %v124
        %v277 = vmul.f32 %v271, %v276
        %vm278 = vweird.f32 %v124
        %v279 = vsel %vm278, %v271, %v277
        %280 = vst [vmem:[%s113] sm:$0xff] %v279
        %v281 = vrcp.pop %v140
        %v282 = vmul.f32 %v275, %v281
        %vm283 = vweird.f32 %v140
        %v284 = vsel %vm283, %v275, %v282
        %s285 = scalar_lea.vmem %s113, 8 [#allocation1]
        %286 = vst [vmem:[%s285] sm:$0xff] %v284
        %s287 = sand.u32 %s8, 1
        %s288 = sand.u32 %s8, 1
        %s289 = smul.addr %s288, 16
        %s290 = scalar_lea.vmem [#allocation1], %s289
        %s291 = sadd.s32 %s17, %s16
        %s292 = smul.addr %s15, 2
        %s293 = sadd.s32 %s291, %s292
        %s294 = smul.addr %s14, 2
        %s295 = sadd.s32 %s293, %s294
        %s296 = smul.addr %s295, 8
        %s297 = scalar_lea.vmem %s1, %s296
        // Predicated region
        $region55: #{custom-call.11} parent=53 // pred_check
          _
        $region56: #{custom-call.11} parent=53 // pred_check_branch
          %299 = sbr.rel (0) target = $region58
        $region57: #{custom-call.11} parent=53 // pred_region
          // Predicated region
          $region59: #{custom-call.11} parent=57 // pred_check
            _
          $region60: #{custom-call.11} parent=57 // pred_check_branch
            %301 = sbr.rel (0) target = $region62
          $region61: #{custom-call.11} parent=57 // pred_region
            // Predicated region
            $region74: #{custom-call.11} parent=61 // pred_check
              _
            $region75: #{custom-call.11} parent=61 // pred_check_branch
              %318 = sbr.rel (0) target = $region77
            $region76: #{custom-call.11} parent=61 // pred_region
              loop: start=0, step=1, limit=1
              $region78: #{custom-call.11} parent=76 // loop_pre_header
                _
              $region79: #{custom-call.11} parent=76 // loop_header
                %s320 = sphi 0, %s324
                %p321 = scmp.ge.s32.totalorder %s320, 1
                %s325 = sphi %s290, %s290
                %s326 = sphi %s297, %s297
              $region80: #{custom-call.11} parent=76 // loop_header_branch
                %323 = sbr.rel (%p321) target = $region84
              $region81: #{custom-call.11} parent=76 // loop_body
                %v327 = vld [vmem:[%s325] sm:$0xff]
                %328 = vst [vmem:[%s326] sm:$0xff] %v327
                %v329 = vld [vmem:[%s325 + $0x8] sm:$0xff]
                %330 = vst [vmem:[%s326 + $0x8] sm:$0xff] %v329
              $region82: #{custom-call.11} parent=76 // loop_footer
                %s324 = sadd.s32 1, %s320
              $region83: #{custom-call.11} parent=76 // loop_footer_branch
                %319 = sbr.rel target = $region79
              $region84: #{custom-call.11} parent=76 // loop_exit
                _
            $region77: #{custom-call.11} parent=61 // pred_fallthru
              _
            // Predicated region
            $region85: #{custom-call.11} parent=61 // pred_check
              _
            $region86: #{custom-call.11} parent=61 // pred_check_branch
              %332 = sbr.rel target = $region88
            $region87: #{custom-call.11} parent=61 // pred_region
              _
            $region88: #{custom-call.11} parent=61 // pred_fallthru
              _
          $region62: #{custom-call.11} parent=57 // pred_fallthru
            _
          // Predicated region
          $region63: #{custom-call.11} parent=57 // pred_check
            _
          $region64: #{custom-call.11} parent=57 // pred_check_branch
            %303 = sbr.rel target = $region66
          $region65: #{custom-call.11} parent=57 // pred_region
            loop: start=0, step=1, limit=1
            $region67: #{custom-call.11} parent=65 // loop_pre_header
              _
            $region68: #{custom-call.11} parent=65 // loop_header
              %s306 = sphi 0, %s310
              %p307 = scmp.ge.s32.totalorder %s306, 1
              %s311 = sphi %s290, %s290
              %s312 = sphi %s297, %s297
            $region69: #{custom-call.11} parent=65 // loop_header_branch
              %309 = sbr.rel (%p307) target = $region73
            $region70: #{custom-call.11} parent=65 // loop_body
              %v313 = vld [vmem:[%s311] sm:$0xff]
              %314 = vst [vmem:[%s312] sm:$0xff] %v313
              %v315 = vld [vmem:[%s311 + $0x8] sm:$0xff]
              %316 = vst [vmem:[%s312 + $0x8] sm:$0xff] %v315
            $region71: #{custom-call.11} parent=65 // loop_footer
              %s310 = sadd.s32 1, %s306
            $region72: #{custom-call.11} parent=65 // loop_footer_branch
              %305 = sbr.rel target = $region68
            $region73: #{custom-call.11} parent=65 // loop_exit
              _
          $region66: #{custom-call.11} parent=57 // pred_fallthru
            _
        $region58: #{custom-call.11} parent=53 // pred_fallthru
          _
        %333 = vnop
      $region54: #{custom-call.11} parent=5 // pred_fallthru
        _
      %p334 = scmp.le.s32.totalorder 2, %s3
      // Predicated region
      $region89: #{custom-call.11} parent=5 // pred_check
        %p335 = pneg %p334
      $region90: #{custom-call.11} parent=5 // pred_check_branch
        %337 = sbr.rel (%p335) target = $region92
      $region91: #{custom-call.11} parent=5 // pred_region
        %s338 = ssub.s32 %s3, 2
        %s339 = sand.u32 %s9, 1
        %s340 = sand.u32 %s9, 1
        %s341 = smul.addr %s340, 16
        %s342 = scalar_lea.vmem [#allocation1], %s341
      $region92: #{custom-call.11} parent=5 // pred_fallthru
        _
    $region6: #{custom-call.11} parent=1 // loop_footer
      %s7 = sadd.s32 1, %s3
    $region7: #{custom-call.11} parent=1 // loop_footer_branch
      %2 = sbr.rel target = $region3
    $region8: #{custom-call.11} parent=1 // loop_exit
      _

// kernel: custom-call.12
$region0: #{custom-call.12}
  %s0 = inlined_call_operand.vmem [shape: f32[24,1,9,9], index: 0, kind: input, shape index: {}]
  %s1 = inlined_call_operand.vmem [shape: f32[24,1,9,9], index: 1, kind: output, shape index: {}]
  $region1: #{custom-call.12} parent=0
    #allocation0 [shape = 'u8[16384]{0}', space=vmem, size = 0x4000, scoped, tag = 'operand span for operand 0']
    #allocation1 [shape = 'u8[16384]{0}', space=vmem, size = 0x4000, scoped, tag = 'operand span for operand 1']
    loop: start=0, step=1, limit=26
    $region2: #{custom-call.12} parent=1 // loop_pre_header
      _
    $region3: #{custom-call.12} parent=1 // loop_header
      %s3 = sphi 0, %s7
      %p4 = scmp.ge.s32.totalorder %s3, 26
      %s10 = sphi 0, %s36
      %s11 = sphi 0, %s32
      %s12 = sphi 0, %s28
      %s13 = sphi 0, %s24
      %s14 = sphi 0, %s10
      %s15 = sphi 0, %s11
      %s16 = sphi 0, %s12
      %s17 = sphi 0, %s13
      %s18 = sphi 0, %s14
      %s19 = sphi 0, %s15
      %s20 = sphi 0, %s16
      %s21 = sphi 0, %s17
    $region4: #{custom-call.12} parent=1 // loop_header_branch
      %6 = sbr.rel (%p4) target = $region8
    $region5: #{custom-call.12} parent=1 // loop_body
      %s8 = ssub.s32 %s3, 1
      %s9 = ssub.s32 %s3, 2
      %s22 = sadd.s32 1, %s13
      %p23 = scmp.ge.s32.totalorder %s22, 1
      %s24 = scalar_select %p23, 0, %s22
      %s25 = sadd.s32 1, %s12
      %s26 = scalar_select %p23, %s25, %s12
      %p27 = scmp.ge.s32.totalorder %s26, 1
      %s28 = scalar_select %p27, 0, %s26
      %s29 = sadd.s32 1, %s11
      %s30 = scalar_select %p27, %s29, %s11
      %p31 = scmp.ge.s32.totalorder %s30, 1
      %s32 = scalar_select %p31, 0, %s30
      %s33 = sadd.s32 1, %s10
      %s34 = scalar_select %p31, %s33, %s10
      %p35 = scmp.ge.s32.totalorder %s34, 24
      %s36 = scalar_select %p35, 0, %s34
      %p37 = scmp.le.s32.totalorder 1, %s3
      %p38 = scmp.lt.s32.totalorder %s3, 25
      %p39 = pnand %p37, %p38
      %p40 = pneg %p39
      // Predicated region
      $region9: #{custom-call.12} parent=5 // pred_check
        _
      $region10: #{custom-call.12} parent=5 // pred_check_branch
        %42 = sbr.rel (%p39) target = $region12
      $region11: #{custom-call.12} parent=5 // pred_region
        %s43 = ssub.s32 %s3, 1
      $region12: #{custom-call.12} parent=5 // pred_fallthru
        _
      %p44 = scmp.lt.s32.totalorder %s3, 24
      // Predicated region
      $region13: #{custom-call.12} parent=5 // pred_check
        %p45 = pneg %p44
      $region14: #{custom-call.12} parent=5 // pred_check_branch
        %47 = sbr.rel (%p45) target = $region16
      $region15: #{custom-call.12} parent=5 // pred_region
        %s48 = sand.u32 %s3, 1
        %s49 = sand.u32 %s3, 1
        %s50 = smul.addr %s49, 16
        %s51 = scalar_lea.vmem [#allocation0], %s50
        %s52 = sadd.s32 %s13, %s12
        %s53 = smul.addr %s11, 2
        %s54 = sadd.s32 %s52, %s53
        %s55 = smul.addr %s10, 2
        %s56 = sadd.s32 %s54, %s55
        %s57 = smul.addr %s56, 8
        %s58 = scalar_lea.vmem %s0, %s57
        // Predicated region
        $region17: #{custom-call.12} parent=15 // pred_check
          _
        $region18: #{custom-call.12} parent=15 // pred_check_branch
          %60 = sbr.rel (0) target = $region20
        $region19: #{custom-call.12} parent=15 // pred_region
          // Predicated region
          $region21: #{custom-call.12} parent=19 // pred_check
            _
          $region22: #{custom-call.12} parent=19 // pred_check_branch
            %62 = sbr.rel (0) target = $region24
          $region23: #{custom-call.12} parent=19 // pred_region
            // Predicated region
            $region36: #{custom-call.12} parent=23 // pred_check
              _
            $region37: #{custom-call.12} parent=23 // pred_check_branch
              %79 = sbr.rel (0) target = $region39
            $region38: #{custom-call.12} parent=23 // pred_region
              loop: start=0, step=1, limit=1
              $region40: #{custom-call.12} parent=38 // loop_pre_header
                _
              $region41: #{custom-call.12} parent=38 // loop_header
                %s81 = sphi 0, %s85
                %p82 = scmp.ge.s32.totalorder %s81, 1
                %s86 = sphi %s58, %s58
                %s87 = sphi %s51, %s51
              $region42: #{custom-call.12} parent=38 // loop_header_branch
                %84 = sbr.rel (%p82) target = $region46
              $region43: #{custom-call.12} parent=38 // loop_body
                %v88 = vld [vmem:[%s86] sm:$0xff]
                %89 = vst [vmem:[%s87] sm:$0xff] %v88
                %v90 = vld [vmem:[%s86 + $0x8] sm:$0xff]
                %91 = vst [vmem:[%s87 + $0x8] sm:$0xff] %v90
              $region44: #{custom-call.12} parent=38 // loop_footer
                %s85 = sadd.s32 1, %s81
              $region45: #{custom-call.12} parent=38 // loop_footer_branch
                %80 = sbr.rel target = $region41
              $region46: #{custom-call.12} parent=38 // loop_exit
                _
            $region39: #{custom-call.12} parent=23 // pred_fallthru
              _
            // Predicated region
            $region47: #{custom-call.12} parent=23 // pred_check
              _
            $region48: #{custom-call.12} parent=23 // pred_check_branch
              %93 = sbr.rel target = $region50
            $region49: #{custom-call.12} parent=23 // pred_region
              _
            $region50: #{custom-call.12} parent=23 // pred_fallthru
              _
          $region24: #{custom-call.12} parent=19 // pred_fallthru
            _
          // Predicated region
          $region25: #{custom-call.12} parent=19 // pred_check
            _
          $region26: #{custom-call.12} parent=19 // pred_check_branch
            %64 = sbr.rel target = $region28
          $region27: #{custom-call.12} parent=19 // pred_region
            loop: start=0, step=1, limit=1
            $region29: #{custom-call.12} parent=27 // loop_pre_header
              _
            $region30: #{custom-call.12} parent=27 // loop_header
              %s67 = sphi 0, %s71
              %p68 = scmp.ge.s32.totalorder %s67, 1
              %s72 = sphi %s58, %s58
              %s73 = sphi %s51, %s51
            $region31: #{custom-call.12} parent=27 // loop_header_branch
              %70 = sbr.rel (%p68) target = $region35
            $region32: #{custom-call.12} parent=27 // loop_body
              %v74 = vld [vmem:[%s72] sm:$0xff]
              %75 = vst [vmem:[%s73] sm:$0xff] %v74
              %v76 = vld [vmem:[%s72 + $0x8] sm:$0xff]
              %77 = vst [vmem:[%s73 + $0x8] sm:$0xff] %v76
            $region33: #{custom-call.12} parent=27 // loop_footer
              %s71 = sadd.s32 1, %s67
            $region34: #{custom-call.12} parent=27 // loop_footer_branch
              %66 = sbr.rel target = $region30
            $region35: #{custom-call.12} parent=27 // loop_exit
              _
          $region28: #{custom-call.12} parent=19 // pred_fallthru
            _
        $region20: #{custom-call.12} parent=15 // pred_fallthru
          _
        %94 = vnop
      $region16: #{custom-call.12} parent=5 // pred_fallthru
        _
      %p95 = scmp.le.s32.totalorder 1, %s3
      %p96 = scmp.lt.s32.totalorder %s3, 25
      %p97 = pnand %p95, %p96
      %p98 = pneg %p97
      // Predicated region
      $region51: #{custom-call.12} parent=5 // pred_check
        _
      $region52: #{custom-call.12} parent=5 // pred_check_branch
        %100 = sbr.rel (%p97) target = $region54
      $region53: #{custom-call.12} parent=5 // pred_region
        #allocation2 [shape = 'f32[9,9]{1,0}', space=vmem, size = 0x2000, scoped, tag = 'rescaled input a']
        %s101 = ssub.s32 %s3, 1
        %s102 = sand.u32 %s8, 1
        %s103 = sand.u32 %s8, 1
        %s104 = smul.addr %s103, 16
        %s105 = scalar_lea.vmem [#allocation0], %s104
        %s106 = sand.u32 %s8, 1
        %s107 = sand.u32 %s8, 1
        %s108 = smul.addr %s107, 16
        %s109 = scalar_lea.vmem [#allocation0], %s108
        %s110 = sand.u32 %s8, 1
        %s111 = sand.u32 %s8, 1
        %s112 = smul.addr %s111, 16
        %s113 = scalar_lea.vmem [#allocation1], %s112
        %v114 = vlaneseq
        %v115 = vand.u32 %v114, 127
        %vm116 = vcmp.lt.s32.totalorder %v115, 9
        %v117 = vlaneseq
        %v118 = vshrl.u32 %v117, 7
        %vm120 = vcmp.eq.s32.totalorder %v118, %v115
        %v121 = vld [vmem:[%s105] sm:$0xff]
        %v122 = vsel %vm120, %v121, 0.0
        %123 = vadd.xlane.f32.xlu0 %v122
        %v124 = vpop.xlane.xlu0 %123
        %vm125 = vcmp.ge.s32.totalorder %v118, %v115
        %vm126 = vmand %vm125, %vm116
        %v127 = vsel %vm126, %v121, 0.0
        %v128 = vrcp.pop %v124
        %v129 = vmul.f32 %v127, %v128
        %130 = vst [vmem:[#allocation2] sm:$0xff] %v129
        %s131 = scalar_lea.vmem %s105, 8 [#allocation0]
        %s132 = scalar_lea.vmem [#allocation2], 8
        %v133 = vlaneseq
        %v134 = vshrl.u32 %v133, 7
        %v135 = vadd.s32 %v134, 8
        %vm136 = vcmp.eq.s32.totalorder %v135, %v115
        %v137 = vld [vmem:[%s131] sm:$0xff]
        %v138 = vsel %vm136, %v137, 0.0
        %139 = vadd.xlane.f32.xlu0 %v138
        %v140 = vpop.xlane.xlu0 %139
        %vm141 = vcmp.ge.s32.totalorder %v135, %v115
        %vm142 = vmand %vm141, %vm116
        %v143 = vsel %vm142, %v137, 0.0
        %v144 = vrcp.pop %v140
        %v145 = vmul.f32 %v143, %v144
        %146 = vst [vmem:[%s132] sm:$0xff] %v145
        %v147 = vlaneseq
        %v148 = vand.u32 %v147, 127
        %v149 = vlaneseq
        %v150 = vshrl.u32 %v149, 7
        %vm152 = vcmp.eq.s32.totalorder %v148, %v150
        %v153 = vlaneseq
        %v154 = vand.u32 %v153, 127
        %vm155 = vcmp.eq.s32.totalorder %v154, 0
        %v156 = vsel %vm155, 1.0, -1.0
        %v157 = vsel %vm152, %v156, 0.0
        %v158 = vlaneseq
        %v159 = vand.u32 %v158, 127
        %v160 = vlaneseq
        %v161 = vshrl.u32 %v160, 7
        %v162 = vadd.s32 %v161, 8
        %vm163 = vcmp.eq.s32.totalorder %v159, %v162
        %v164 = vsel %vm163, -1.0, 0.0
        %s165 = scalar_lea.vmem [#allocation2], 1
        %v166 = vld [vmem:[%s165] ss:$0 sm:$0xff]
        %v167 = vxor.u32 %v166, 2147483648
        %v168 = vlaneseq
        %v169 = vand.u32 %v168, 127
        %vm170 = vcmp.eq.s32.totalorder %v169, 1
        %v171 = vmul.f32 %v167, %v157
        %172 = vadd.xlane.f32.xlu0 %v171
        %v173 = vpop.xlane.xlu0 %172
        %v174 = vsel %vm170, %v173, %v157
        %s175 = scalar_lea.vmem [#allocation2], 2
        %v176 = vld [vmem:[%s175] ss:$0 sm:$0xff]
        %v177 = vxor.u32 %v176, 2147483648
        %v178 = vlaneseq
        %v179 = vand.u32 %v178, 127
        %vm180 = vcmp.eq.s32.totalorder %v179, 2
        %v181 = vmul.f32 %v177, %v174
        %182 = vadd.xlane.f32.xlu0 %v181
        %v183 = vpop.xlane.xlu0 %182
        %v184 = vsel %vm180, %v183, %v174
        %s185 = scalar_lea.vmem [#allocation2], 3
        %v186 = vld [vmem:[%s185] ss:$0 sm:$0xff]
        %v187 = vxor.u32 %v186, 2147483648
        %v188 = vlaneseq
        %v189 = vand.u32 %v188, 127
        %vm190 = vcmp.eq.s32.totalorder %v189, 3
        %v191 = vmul.f32 %v187, %v184
        %192 = vadd.xlane.f32.xlu0 %v191
        %v193 = vpop.xlane.xlu0 %192
        %v194 = vsel %vm190, %v193, %v184
        %s195 = scalar_lea.vmem [#allocation2], 4
        %v196 = vld [vmem:[%s195] ss:$0 sm:$0xff]
        %v197 = vxor.u32 %v196, 2147483648
        %v198 = vlaneseq
        %v199 = vand.u32 %v198, 127
        %vm200 = vcmp.eq.s32.totalorder %v199, 4
        %v201 = vmul.f32 %v197, %v194
        %202 = vadd.xlane.f32.xlu0 %v201
        %v203 = vpop.xlane.xlu0 %202
        %v204 = vsel %vm200, %v203, %v194
        %s205 = scalar_lea.vmem [#allocation2], 5
        %v206 = vld [vmem:[%s205] ss:$0 sm:$0xff]
        %v207 = vxor.u32 %v206, 2147483648
        %v208 = vlaneseq
        %v209 = vand.u32 %v208, 127
        %vm210 = vcmp.eq.s32.totalorder %v209, 5
        %v211 = vmul.f32 %v207, %v204
        %212 = vadd.xlane.f32.xlu0 %v211
        %v213 = vpop.xlane.xlu0 %212
        %v214 = vsel %vm210, %v213, %v204
        %s215 = scalar_lea.vmem [#allocation2], 6
        %v216 = vld [vmem:[%s215] ss:$0 sm:$0xff]
        %v217 = vxor.u32 %v216, 2147483648
        %v218 = vlaneseq
        %v219 = vand.u32 %v218, 127
        %vm220 = vcmp.eq.s32.totalorder %v219, 6
        %v221 = vmul.f32 %v217, %v214
        %222 = vadd.xlane.f32.xlu0 %v221
        %v223 = vpop.xlane.xlu0 %222
        %v224 = vsel %vm220, %v223, %v214
        %s225 = scalar_lea.vmem [#allocation2], 7
        %v226 = vld [vmem:[%s225] ss:$0 sm:$0xff]
        %v227 = vxor.u32 %v226, 2147483648
        %v228 = vlaneseq
        %v229 = vand.u32 %v228, 127
        %vm230 = vcmp.eq.s32.totalorder %v229, 7
        %v231 = vmul.f32 %v227, %v224
        %232 = vadd.xlane.f32.xlu0 %v231
        %v233 = vpop.xlane.xlu0 %232
        %v234 = vsel %vm230, %v233, %v224
        %s235 = scalar_lea.vmem [#allocation2], 8
        %v236 = vld [vmem:[%s235] ss:$0 sm:$0xff]
        %v237 = vxor.u32 %v236, 2147483648
        %v238 = vlaneseq
        %v239 = vand.u32 %v238, 127
        %vm240 = vcmp.eq.s32.totalorder %v239, 8
        %v241 = vmul.f32 %v237, %v234
        %242 = vadd.xlane.f32.xlu0 %v241
        %v243 = vpop.xlane.xlu0 %242
        %v244 = vsel %vm240, %v243, %v234
        %v245 = vmul.f32 %v237, %v164
        %246 = vadd.xlane.f32.xlu0 %v245
        %v247 = vpop.xlane.xlu0 %246
        %v248 = vsel %vm240, %v247, %v164
        %v249 = vrcp.pop %v124
        %v250 = vmul.f32 %v244, %v249
        %vm251 = vweird.f32 %v124
        %v252 = vsel %vm251, %v244, %v250
        %253 = vst [vmem:[%s113] sm:$0xff] %v252
        %v254 = vrcp.pop %v140
        %v255 = vmul.f32 %v248, %v254
        %vm256 = vweird.f32 %v140
        %v257 = vsel %vm256, %v248, %v255
        %s258 = scalar_lea.vmem %s113, 8 [#allocation1]
        %259 = vst [vmem:[%s258] sm:$0xff] %v257
        %s260 = sand.u32 %s8, 1
        %s261 = sand.u32 %s8, 1
        %s262 = smul.addr %s261, 16
        %s263 = scalar_lea.vmem [#allocation1], %s262
        %s264 = sadd.s32 %s17, %s16
        %s265 = smul.addr %s15, 2
        %s266 = sadd.s32 %s264, %s265
        %s267 = smul.addr %s14, 2
        %s268 = sadd.s32 %s266, %s267
        %s269 = smul.addr %s268, 8
        %s270 = scalar_lea.vmem %s1, %s269
        // Predicated region
        $region55: #{custom-call.12} parent=53 // pred_check
          _
        $region56: #{custom-call.12} parent=53 // pred_check_branch
          %272 = sbr.rel (0) target = $region58
        $region57: #{custom-call.12} parent=53 // pred_region
          // Predicated region
          $region59: #{custom-call.12} parent=57 // pred_check
            _
          $region60: #{custom-call.12} parent=57 // pred_check_branch
            %274 = sbr.rel (0) target = $region62
          $region61: #{custom-call.12} parent=57 // pred_region
            // Predicated region
            $region74: #{custom-call.12} parent=61 // pred_check
              _
            $region75: #{custom-call.12} parent=61 // pred_check_branch
              %291 = sbr.rel (0) target = $region77
            $region76: #{custom-call.12} parent=61 // pred_region
              loop: start=0, step=1, limit=1
              $region78: #{custom-call.12} parent=76 // loop_pre_header
                _
              $region79: #{custom-call.12} parent=76 // loop_header
                %s293 = sphi 0, %s297
                %p294 = scmp.ge.s32.totalorder %s293, 1
                %s298 = sphi %s263, %s263
                %s299 = sphi %s270, %s270
              $region80: #{custom-call.12} parent=76 // loop_header_branch
                %296 = sbr.rel (%p294) target = $region84
              $region81: #{custom-call.12} parent=76 // loop_body
                %v300 = vld [vmem:[%s298] sm:$0xff]
                %301 = vst [vmem:[%s299] sm:$0xff] %v300
                %v302 = vld [vmem:[%s298 + $0x8] sm:$0xff]
                %303 = vst [vmem:[%s299 + $0x8] sm:$0xff] %v302
              $region82: #{custom-call.12} parent=76 // loop_footer
                %s297 = sadd.s32 1, %s293
              $region83: #{custom-call.12} parent=76 // loop_footer_branch
                %292 = sbr.rel target = $region79
              $region84: #{custom-call.12} parent=76 // loop_exit
                _
            $region77: #{custom-call.12} parent=61 // pred_fallthru
              _
            // Predicated region
            $region85: #{custom-call.12} parent=61 // pred_check
              _
            $region86: #{custom-call.12} parent=61 // pred_check_branch
              %305 = sbr.rel target = $region88
            $region87: #{custom-call.12} parent=61 // pred_region
              _
            $region88: #{custom-call.12} parent=61 // pred_fallthru
              _
          $region62: #{custom-call.12} parent=57 // pred_fallthru
            _
          // Predicated region
          $region63: #{custom-call.12} parent=57 // pred_check
            _
          $region64: #{custom-call.12} parent=57 // pred_check_branch
            %276 = sbr.rel target = $region66
          $region65: #{custom-call.12} parent=57 // pred_region
            loop: start=0, step=1, limit=1
            $region67: #{custom-call.12} parent=65 // loop_pre_header
              _
            $region68: #{custom-call.12} parent=65 // loop_header
              %s279 = sphi 0, %s283
              %p280 = scmp.ge.s32.totalorder %s279, 1
              %s284 = sphi %s263, %s263
              %s285 = sphi %s270, %s270
            $region69: #{custom-call.12} parent=65 // loop_header_branch
              %282 = sbr.rel (%p280) target = $region73
            $region70: #{custom-call.12} parent=65 // loop_body
              %v286 = vld [vmem:[%s284] sm:$0xff]
              %287 = vst [vmem:[%s285] sm:$0xff] %v286
              %v288 = vld [vmem:[%s284 + $0x8] sm:$0xff]
              %289 = vst [vmem:[%s285 + $0x8] sm:$0xff] %v288
            $region71: #{custom-call.12} parent=65 // loop_footer
              %s283 = sadd.s32 1, %s279
            $region72: #{custom-call.12} parent=65 // loop_footer_branch
              %278 = sbr.rel target = $region68
            $region73: #{custom-call.12} parent=65 // loop_exit
              _
          $region66: #{custom-call.12} parent=57 // pred_fallthru
            _
        $region58: #{custom-call.12} parent=53 // pred_fallthru
          _
        %306 = vnop
      $region54: #{custom-call.12} parent=5 // pred_fallthru
        _
      %p307 = scmp.le.s32.totalorder 2, %s3
      // Predicated region
      $region89: #{custom-call.12} parent=5 // pred_check
        %p308 = pneg %p307
      $region90: #{custom-call.12} parent=5 // pred_check_branch
        %310 = sbr.rel (%p308) target = $region92
      $region91: #{custom-call.12} parent=5 // pred_region
        %s311 = ssub.s32 %s3, 2
        %s312 = sand.u32 %s9, 1
        %s313 = sand.u32 %s9, 1
        %s314 = smul.addr %s313, 16
        %s315 = scalar_lea.vmem [#allocation1], %s314
      $region92: #{custom-call.12} parent=5 // pred_fallthru
        _
    $region6: #{custom-call.12} parent=1 // loop_footer
      %s7 = sadd.s32 1, %s3
    $region7: #{custom-call.12} parent=1 // loop_footer_branch
      %2 = sbr.rel target = $region3
    $region8: #{custom-call.12} parent=1 // loop_exit
      _

// kernel: custom-call.13
$region0: #{custom-call.13}
  %s0 = inlined_call_operand.vmem [shape: f32[24,9,9], index: 0, kind: input, shape index: {}]
  %s1 = inlined_call_operand.vmem [shape: f32[24,9,9], index: 1, kind: output, shape index: {}]
  $region1: #{custom-call.13} parent=0
    #allocation0 [shape = 'u8[16384]{0}', space=vmem, size = 0x4000, scoped, tag = 'operand span for operand 0']
    #allocation1 [shape = 'u8[16384]{0}', space=vmem, size = 0x4000, scoped, tag = 'operand span for operand 1']
    loop: start=0, step=1, limit=26
    $region2: #{custom-call.13} parent=1 // loop_pre_header
      _
    $region3: #{custom-call.13} parent=1 // loop_header
      %s3 = sphi 0, %s7
      %p4 = scmp.ge.s32.totalorder %s3, 26
      %s10 = sphi 0, %s29
      %s11 = sphi 0, %s25
      %s12 = sphi 0, %s21
      %s13 = sphi 0, %s10
      %s14 = sphi 0, %s11
      %s15 = sphi 0, %s12
      %s16 = sphi 0, %s13
      %s17 = sphi 0, %s14
      %s18 = sphi 0, %s15
    $region4: #{custom-call.13} parent=1 // loop_header_branch
      %6 = sbr.rel (%p4) target = $region8
    $region5: #{custom-call.13} parent=1 // loop_body
      %s8 = ssub.s32 %s3, 1
      %s9 = ssub.s32 %s3, 2
      %s19 = sadd.s32 1, %s12
      %p20 = scmp.ge.s32.totalorder %s19, 1
      %s21 = scalar_select %p20, 0, %s19
      %s22 = sadd.s32 1, %s11
      %s23 = scalar_select %p20, %s22, %s11
      %p24 = scmp.ge.s32.totalorder %s23, 1
      %s25 = scalar_select %p24, 0, %s23
      %s26 = sadd.s32 1, %s10
      %s27 = scalar_select %p24, %s26, %s10
      %p28 = scmp.ge.s32.totalorder %s27, 24
      %s29 = scalar_select %p28, 0, %s27
      %p30 = scmp.le.s32.totalorder 1, %s3
      %p31 = scmp.lt.s32.totalorder %s3, 25
      %p32 = pnand %p30, %p31
      %p33 = pneg %p32
      // Predicated region
      $region9: #{custom-call.13} parent=5 // pred_check
        _
      $region10: #{custom-call.13} parent=5 // pred_check_branch
        %35 = sbr.rel (%p32) target = $region12
      $region11: #{custom-call.13} parent=5 // pred_region
        %s36 = ssub.s32 %s3, 1
      $region12: #{custom-call.13} parent=5 // pred_fallthru
        _
      %p37 = scmp.lt.s32.totalorder %s3, 24
      // Predicated region
      $region13: #{custom-call.13} parent=5 // pred_check
        %p38 = pneg %p37
      $region14: #{custom-call.13} parent=5 // pred_check_branch
        %40 = sbr.rel (%p38) target = $region16
      $region15: #{custom-call.13} parent=5 // pred_region
        %s41 = sand.u32 %s3, 1
        %s42 = sand.u32 %s3, 1
        %s43 = smul.addr %s42, 16
        %s44 = scalar_lea.vmem [#allocation0], %s43
        %s45 = sadd.s32 %s12, %s11
        %s46 = smul.addr %s10, 2
        %s47 = sadd.s32 %s45, %s46
        %s48 = smul.addr %s47, 8
        %s49 = scalar_lea.vmem %s0, %s48
        // Predicated region
        $region17: #{custom-call.13} parent=15 // pred_check
          _
        $region18: #{custom-call.13} parent=15 // pred_check_branch
          %51 = sbr.rel (0) target = $region20
        $region19: #{custom-call.13} parent=15 // pred_region
          // Predicated region
          $region21: #{custom-call.13} parent=19 // pred_check
            _
          $region22: #{custom-call.13} parent=19 // pred_check_branch
            %53 = sbr.rel (0) target = $region24
          $region23: #{custom-call.13} parent=19 // pred_region
            // Predicated region
            $region36: #{custom-call.13} parent=23 // pred_check
              _
            $region37: #{custom-call.13} parent=23 // pred_check_branch
              %70 = sbr.rel (0) target = $region39
            $region38: #{custom-call.13} parent=23 // pred_region
              loop: start=0, step=1, limit=1
              $region40: #{custom-call.13} parent=38 // loop_pre_header
                _
              $region41: #{custom-call.13} parent=38 // loop_header
                %s72 = sphi 0, %s76
                %p73 = scmp.ge.s32.totalorder %s72, 1
                %s77 = sphi %s49, %s49
                %s78 = sphi %s44, %s44
              $region42: #{custom-call.13} parent=38 // loop_header_branch
                %75 = sbr.rel (%p73) target = $region46
              $region43: #{custom-call.13} parent=38 // loop_body
                %v79 = vld [vmem:[%s77] sm:$0xff]
                %80 = vst [vmem:[%s78] sm:$0xff] %v79
                %v81 = vld [vmem:[%s77 + $0x8] sm:$0xff]
                %82 = vst [vmem:[%s78 + $0x8] sm:$0xff] %v81
              $region44: #{custom-call.13} parent=38 // loop_footer
                %s76 = sadd.s32 1, %s72
              $region45: #{custom-call.13} parent=38 // loop_footer_branch
                %71 = sbr.rel target = $region41
              $region46: #{custom-call.13} parent=38 // loop_exit
                _
            $region39: #{custom-call.13} parent=23 // pred_fallthru
              _
            // Predicated region
            $region47: #{custom-call.13} parent=23 // pred_check
              _
            $region48: #{custom-call.13} parent=23 // pred_check_branch
              %84 = sbr.rel target = $region50
            $region49: #{custom-call.13} parent=23 // pred_region
              _
            $region50: #{custom-call.13} parent=23 // pred_fallthru
              _
          $region24: #{custom-call.13} parent=19 // pred_fallthru
            _
          // Predicated region
          $region25: #{custom-call.13} parent=19 // pred_check
            _
          $region26: #{custom-call.13} parent=19 // pred_check_branch
            %55 = sbr.rel target = $region28
          $region27: #{custom-call.13} parent=19 // pred_region
            loop: start=0, step=1, limit=1
            $region29: #{custom-call.13} parent=27 // loop_pre_header
              _
            $region30: #{custom-call.13} parent=27 // loop_header
              %s58 = sphi 0, %s62
              %p59 = scmp.ge.s32.totalorder %s58, 1
              %s63 = sphi %s49, %s49
              %s64 = sphi %s44, %s44
            $region31: #{custom-call.13} parent=27 // loop_header_branch
              %61 = sbr.rel (%p59) target = $region35
            $region32: #{custom-call.13} parent=27 // loop_body
              %v65 = vld [vmem:[%s63] sm:$0xff]
              %66 = vst [vmem:[%s64] sm:$0xff] %v65
              %v67 = vld [vmem:[%s63 + $0x8] sm:$0xff]
              %68 = vst [vmem:[%s64 + $0x8] sm:$0xff] %v67
            $region33: #{custom-call.13} parent=27 // loop_footer
              %s62 = sadd.s32 1, %s58
            $region34: #{custom-call.13} parent=27 // loop_footer_branch
              %57 = sbr.rel target = $region30
            $region35: #{custom-call.13} parent=27 // loop_exit
              _
          $region28: #{custom-call.13} parent=19 // pred_fallthru
            _
        $region20: #{custom-call.13} parent=15 // pred_fallthru
          _
        %85 = vnop
      $region16: #{custom-call.13} parent=5 // pred_fallthru
        _
      %p86 = scmp.le.s32.totalorder 1, %s3
      %p87 = scmp.lt.s32.totalorder %s3, 25
      %p88 = pnand %p86, %p87
      %p89 = pneg %p88
      // Predicated region
      $region51: #{custom-call.13} parent=5 // pred_check
        _
      $region52: #{custom-call.13} parent=5 // pred_check_branch
        %91 = sbr.rel (%p88) target = $region54
      $region53: #{custom-call.13} parent=5 // pred_region
        %s92 = ssub.s32 %s3, 1
        %s93 = sand.u32 %s8, 1
        %s94 = sand.u32 %s8, 1
        %s95 = smul.addr %s94, 16
        %s96 = scalar_lea.vmem [#allocation0], %s95
        %s97 = sand.u32 %s8, 1
        %s98 = sand.u32 %s8, 1
        %s99 = smul.addr %s98, 16
        %s100 = scalar_lea.vmem [#allocation0], %s99
        %s101 = sand.u32 %s8, 1
        %s102 = sand.u32 %s8, 1
        %s103 = smul.addr %s102, 16
        %s104 = scalar_lea.vmem [#allocation1], %s103
        %105 = vst [vmem:[%s104] sm:$0xff] 0.0
        %s106 = scalar_lea.vmem %s104, 8 [#allocation1]
        %107 = vst [vmem:[%s106] sm:$0xff] 0.0
        %vm108 = vcmask 7168
        %v109 = vld [vmem:[%s104] ss:$0 sm:$0xff]
        %v110 = vld [vmem:[%s96] ss:$0 sm:$0xff]
        %v111 = vmul.f32 %v109, %v109
        %112 = vadd.xlane.f32.xlu0 %v111
        %v113 = vpop.xlane.xlu0 %112
        %v114 = vsub.f32 %v110, %v113
        %v115 = vrsqrt.pop %v114
        %v116 = vld [vmem:[%s96] sm:$0xff]
        %v117 = vld [vmem:[%s104] sm:$0xff]
        %v118 = vmul.f32 %v117, %v109
        %119 = vadd.xlane.f32.xlu0 %v118
        %v120 = vpop.xlane.xlu0 %119
        %v121 = vsub.f32 %v116, %v120
        %v122 = vmul.f32 %v121, %v115
        %v123 = vsel %vm108, %v122, 0.0
        %v124 = vadd.f32 %v117, %v123
        %125 = vst [vmem:[%s104] sm:$0xff] %v124
        %s126 = scalar_lea.vmem %s96, 8 [#allocation0]
        %v127 = vld [vmem:[%s126] sm:$0xff]
        %s128 = scalar_lea.vmem %s104, 8 [#allocation1]
        %v129 = vld [vmem:[%s128] sm:$0xff]
        %v130 = vmul.f32 %v129, %v109
        %131 = vadd.xlane.f32.xlu0 %v130
        %v132 = vpop.xlane.xlu0 %131
        %v133 = vsub.f32 %v127, %v132
        %v134 = vmul.f32 %v133, %v115
        %v135 = vsel %vm108, %v134, 0.0
        %v136 = vadd.f32 %v129, %v135
        %s137 = scalar_lea.vmem %s104, 8 [#allocation1]
        %138 = vst [vmem:[%s137] sm:$0xff] %v136
        %vm139 = vcmask 15368
        %s140 = scalar_lea.vmem %s104, 1 [#allocation1]
        %v141 = vld [vmem:[%s140] ss:$0 sm:$0xff]
        %s142 = scalar_lea.vmem %s96, 1 [#allocation0]
        %v143 = vld [vmem:[%s142] ss:$0 sm:$0xff]
        %v144 = vmul.f32 %v141, %v141
        %145 = vadd.xlane.f32.xlu0 %v144
        %v146 = vpop.xlane.xlu0 %145
        %v147 = vsub.f32 %v143, %v146
        %v148 = vrsqrt.pop %v147
        %v149 = vld [vmem:[%s96] sm:$0xff]
        %v150 = vld [vmem:[%s104] sm:$0xff]
        %v151 = vmul.f32 %v150, %v141
        %152 = vadd.xlane.f32.xlu0 %v151
        %v153 = vpop.xlane.xlu0 %152
        %v154 = vsub.f32 %v149, %v153
        %v155 = vmul.f32 %v154, %v148
        %vm156 = vcmask 1047553
        %vm157 = vmand %vm139, %vm156
        %v158 = vsel %vm157, %v155, 0.0
        %v159 = vadd.f32 %v150, %v158
        %160 = vst [vmem:[%s104] sm:$0xff] %v159
        %s161 = scalar_lea.vmem %s96, 8 [#allocation0]
        %v162 = vld [vmem:[%s161] sm:$0xff]
        %s163 = scalar_lea.vmem %s104, 8 [#allocation1]
        %v164 = vld [vmem:[%s163] sm:$0xff]
        %v165 = vmul.f32 %v164, %v141
        %166 = vadd.xlane.f32.xlu0 %v165
        %v167 = vpop.xlane.xlu0 %166
        %v168 = vsub.f32 %v162, %v167
        %v169 = vmul.f32 %v168, %v148
        %v170 = vsel %vm139, %v169, 0.0
        %v171 = vadd.f32 %v164, %v170
        %s172 = scalar_lea.vmem %s104, 8 [#allocation1]
        %173 = vst [vmem:[%s172] sm:$0xff] %v171
        %vm174 = vcmask 23568
        %s175 = scalar_lea.vmem %s104, 2 [#allocation1]
        %v176 = vld [vmem:[%s175] ss:$0 sm:$0xff]
        %s177 = scalar_lea.vmem %s96, 2 [#allocation0]
        %v178 = vld [vmem:[%s177] ss:$0 sm:$0xff]
        %v179 = vmul.f32 %v176, %v176
        %180 = vadd.xlane.f32.xlu0 %v179
        %v181 = vpop.xlane.xlu0 %180
        %v182 = vsub.f32 %v178, %v181
        %v183 = vrsqrt.pop %v182
        %v184 = vld [vmem:[%s96] sm:$0xff]
        %v185 = vld [vmem:[%s104] sm:$0xff]
        %v186 = vmul.f32 %v185, %v176
        %187 = vadd.xlane.f32.xlu0 %v186
        %v188 = vpop.xlane.xlu0 %187
        %v189 = vsub.f32 %v184, %v188
        %v190 = vmul.f32 %v189, %v183
        %vm191 = vcmask 1047554
        %vm192 = vmand %vm174, %vm191
        %v193 = vsel %vm192, %v190, 0.0
        %v194 = vadd.f32 %v185, %v193
        %195 = vst [vmem:[%s104] sm:$0xff] %v194
        %s196 = scalar_lea.vmem %s96, 8 [#allocation0]
        %v197 = vld [vmem:[%s196] sm:$0xff]
        %s198 = scalar_lea.vmem %s104, 8 [#allocation1]
        %v199 = vld [vmem:[%s198] sm:$0xff]
        %v200 = vmul.f32 %v199, %v176
        %201 = vadd.xlane.f32.xlu0 %v200
        %v202 = vpop.xlane.xlu0 %201
        %v203 = vsub.f32 %v197, %v202
        %v204 = vmul.f32 %v203, %v183
        %v205 = vsel %vm174, %v204, 0.0
        %v206 = vadd.f32 %v199, %v205
        %s207 = scalar_lea.vmem %s104, 8 [#allocation1]
        %208 = vst [vmem:[%s207] sm:$0xff] %v206
        %vm209 = vcmask 31768
        %s210 = scalar_lea.vmem %s104, 3 [#allocation1]
        %v211 = vld [vmem:[%s210] ss:$0 sm:$0xff]
        %s212 = scalar_lea.vmem %s96, 3 [#allocation0]
        %v213 = vld [vmem:[%s212] ss:$0 sm:$0xff]
        %v214 = vmul.f32 %v211, %v211
        %215 = vadd.xlane.f32.xlu0 %v214
        %v216 = vpop.xlane.xlu0 %215
        %v217 = vsub.f32 %v213, %v216
        %v218 = vrsqrt.pop %v217
        %v219 = vld [vmem:[%s96] sm:$0xff]
        %v220 = vld [vmem:[%s104] sm:$0xff]
        %v221 = vmul.f32 %v220, %v211
        %222 = vadd.xlane.f32.xlu0 %v221
        %v223 = vpop.xlane.xlu0 %222
        %v224 = vsub.f32 %v219, %v223
        %v225 = vmul.f32 %v224, %v218
        %vm226 = vcmask 1047555
        %vm227 = vmand %vm209, %vm226
        %v228 = vsel %vm227, %v225, 0.0
        %v229 = vadd.f32 %v220, %v228
        %230 = vst [vmem:[%s104] sm:$0xff] %v229
        %s231 = scalar_lea.vmem %s96, 8 [#allocation0]
        %v232 = vld [vmem:[%s231] sm:$0xff]
        %s233 = scalar_lea.vmem %s104, 8 [#allocation1]
        %v234 = vld [vmem:[%s233] sm:$0xff]
        %v235 = vmul.f32 %v234, %v211
        %236 = vadd.xlane.f32.xlu0 %v235
        %v237 = vpop.xlane.xlu0 %236
        %v238 = vsub.f32 %v232, %v237
        %v239 = vmul.f32 %v238, %v218
        %v240 = vsel %vm209, %v239, 0.0
        %v241 = vadd.f32 %v234, %v240
        %s242 = scalar_lea.vmem %s104, 8 [#allocation1]
        %243 = vst [vmem:[%s242] sm:$0xff] %v241
        %vm244 = vcmask 39968
        %s245 = scalar_lea.vmem %s104, 4 [#allocation1]
        %v246 = vld [vmem:[%s245] ss:$0 sm:$0xff]
        %s247 = scalar_lea.vmem %s96, 4 [#allocation0]
        %v248 = vld [vmem:[%s247] ss:$0 sm:$0xff]
        %v249 = vmul.f32 %v246, %v246
        %250 = vadd.xlane.f32.xlu0 %v249
        %v251 = vpop.xlane.xlu0 %250
        %v252 = vsub.f32 %v248, %v251
        %v253 = vrsqrt.pop %v252
        %v254 = vld [vmem:[%s96] sm:$0xff]
        %v255 = vld [vmem:[%s104] sm:$0xff]
        %v256 = vmul.f32 %v255, %v246
        %257 = vadd.xlane.f32.xlu0 %v256
        %v258 = vpop.xlane.xlu0 %257
        %v259 = vsub.f32 %v254, %v258
        %v260 = vmul.f32 %v259, %v253
        %vm261 = vcmask 1047556
        %vm262 = vmand %vm244, %vm261
        %v263 = vsel %vm262, %v260, 0.0
        %v264 = vadd.f32 %v255, %v263
        %265 = vst [vmem:[%s104] sm:$0xff] %v264
        %s266 = scalar_lea.vmem %s96, 8 [#allocation0]
        %v267 = vld [vmem:[%s266] sm:$0xff]
        %s268 = scalar_lea.vmem %s104, 8 [#allocation1]
        %v269 = vld [vmem:[%s268] sm:$0xff]
        %v270 = vmul.f32 %v269, %v246
        %271 = vadd.xlane.f32.xlu0 %v270
        %v272 = vpop.xlane.xlu0 %271
        %v273 = vsub.f32 %v267, %v272
        %v274 = vmul.f32 %v273, %v253
        %v275 = vsel %vm244, %v274, 0.0
        %v276 = vadd.f32 %v269, %v275
        %s277 = scalar_lea.vmem %s104, 8 [#allocation1]
        %278 = vst [vmem:[%s277] sm:$0xff] %v276
        %vm279 = vcmask 48168
        %s280 = scalar_lea.vmem %s104, 5 [#allocation1]
        %v281 = vld [vmem:[%s280] ss:$0 sm:$0xff]
        %s282 = scalar_lea.vmem %s96, 5 [#allocation0]
        %v283 = vld [vmem:[%s282] ss:$0 sm:$0xff]
        %v284 = vmul.f32 %v281, %v281
        %285 = vadd.xlane.f32.xlu0 %v284
        %v286 = vpop.xlane.xlu0 %285
        %v287 = vsub.f32 %v283, %v286
        %v288 = vrsqrt.pop %v287
        %v289 = vld [vmem:[%s96] sm:$0xff]
        %v290 = vld [vmem:[%s104] sm:$0xff]
        %v291 = vmul.f32 %v290, %v281
        %292 = vadd.xlane.f32.xlu0 %v291
        %v293 = vpop.xlane.xlu0 %292
        %v294 = vsub.f32 %v289, %v293
        %v295 = vmul.f32 %v294, %v288
        %vm296 = vcmask 1047557
        %vm297 = vmand %vm279, %vm296
        %v298 = vsel %vm297, %v295, 0.0
        %v299 = vadd.f32 %v290, %v298
        %300 = vst [vmem:[%s104] sm:$0xff] %v299
        %s301 = scalar_lea.vmem %s96, 8 [#allocation0]
        %v302 = vld [vmem:[%s301] sm:$0xff]
        %s303 = scalar_lea.vmem %s104, 8 [#allocation1]
        %v304 = vld [vmem:[%s303] sm:$0xff]
        %v305 = vmul.f32 %v304, %v281
        %306 = vadd.xlane.f32.xlu0 %v305
        %v307 = vpop.xlane.xlu0 %306
        %v308 = vsub.f32 %v302, %v307
        %v309 = vmul.f32 %v308, %v288
        %v310 = vsel %vm279, %v309, 0.0
        %v311 = vadd.f32 %v304, %v310
        %s312 = scalar_lea.vmem %s104, 8 [#allocation1]
        %313 = vst [vmem:[%s312] sm:$0xff] %v311
        %vm314 = vcmask 56368
        %s315 = scalar_lea.vmem %s104, 6 [#allocation1]
        %v316 = vld [vmem:[%s315] ss:$0 sm:$0xff]
        %s317 = scalar_lea.vmem %s96, 6 [#allocation0]
        %v318 = vld [vmem:[%s317] ss:$0 sm:$0xff]
        %v319 = vmul.f32 %v316, %v316
        %320 = vadd.xlane.f32.xlu0 %v319
        %v321 = vpop.xlane.xlu0 %320
        %v322 = vsub.f32 %v318, %v321
        %v323 = vrsqrt.pop %v322
        %v324 = vld [vmem:[%s96] sm:$0xff]
        %v325 = vld [vmem:[%s104] sm:$0xff]
        %v326 = vmul.f32 %v325, %v316
        %327 = vadd.xlane.f32.xlu0 %v326
        %v328 = vpop.xlane.xlu0 %327
        %v329 = vsub.f32 %v324, %v328
        %v330 = vmul.f32 %v329, %v323
        %vm331 = vcmask 1047558
        %vm332 = vmand %vm314, %vm331
        %v333 = vsel %vm332, %v330, 0.0
        %v334 = vadd.f32 %v325, %v333
        %335 = vst [vmem:[%s104] sm:$0xff] %v334
        %s336 = scalar_lea.vmem %s96, 8 [#allocation0]
        %v337 = vld [vmem:[%s336] sm:$0xff]
        %s338 = scalar_lea.vmem %s104, 8 [#allocation1]
        %v339 = vld [vmem:[%s338] sm:$0xff]
        %v340 = vmul.f32 %v339, %v316
        %341 = vadd.xlane.f32.xlu0 %v340
        %v342 = vpop.xlane.xlu0 %341
        %v343 = vsub.f32 %v337, %v342
        %v344 = vmul.f32 %v343, %v323
        %v345 = vsel %vm314, %v344, 0.0
        %v346 = vadd.f32 %v339, %v345
        %s347 = scalar_lea.vmem %s104, 8 [#allocation1]
        %348 = vst [vmem:[%s347] sm:$0xff] %v346
        %vm349 = vcmask 64568
        %s350 = scalar_lea.vmem %s104, 7 [#allocation1]
        %v351 = vld [vmem:[%s350] ss:$0 sm:$0xff]
        %s352 = scalar_lea.vmem %s96, 7 [#allocation0]
        %v353 = vld [vmem:[%s352] ss:$0 sm:$0xff]
        %v354 = vmul.f32 %v351, %v351
        %355 = vadd.xlane.f32.xlu0 %v354
        %v356 = vpop.xlane.xlu0 %355
        %v357 = vsub.f32 %v353, %v356
        %v358 = vrsqrt.pop %v357
        %v359 = vld [vmem:[%s96] sm:$0xff]
        %v360 = vld [vmem:[%s104] sm:$0xff]
        %v361 = vmul.f32 %v360, %v351
        %362 = vadd.xlane.f32.xlu0 %v361
        %v363 = vpop.xlane.xlu0 %362
        %v364 = vsub.f32 %v359, %v363
        %v365 = vmul.f32 %v364, %v358
        %vm366 = vcmask 1047559
        %vm367 = vmand %vm349, %vm366
        %v368 = vsel %vm367, %v365, 0.0
        %v369 = vadd.f32 %v360, %v368
        %370 = vst [vmem:[%s104] sm:$0xff] %v369
        %s371 = scalar_lea.vmem %s96, 8 [#allocation0]
        %v372 = vld [vmem:[%s371] sm:$0xff]
        %s373 = scalar_lea.vmem %s104, 8 [#allocation1]
        %v374 = vld [vmem:[%s373] sm:$0xff]
        %v375 = vmul.f32 %v374, %v351
        %376 = vadd.xlane.f32.xlu0 %v375
        %v377 = vpop.xlane.xlu0 %376
        %v378 = vsub.f32 %v372, %v377
        %v379 = vmul.f32 %v378, %v358
        %v380 = vsel %vm349, %v379, 0.0
        %v381 = vadd.f32 %v374, %v380
        %s382 = scalar_lea.vmem %s104, 8 [#allocation1]
        %383 = vst [vmem:[%s382] sm:$0xff] %v381
        %vm384 = vcmask 72768
        %s385 = scalar_lea.vmem %s104, 8 [#allocation1]
        %v386 = vld [vmem:[%s385] ss:$0 sm:$0xff]
        %s387 = scalar_lea.vmem %s96, 8 [#allocation0]
        %v388 = vld [vmem:[%s387] ss:$0 sm:$0xff]
        %v389 = vmul.f32 %v386, %v386
        %390 = vadd.xlane.f32.xlu0 %v389
        %v391 = vpop.xlane.xlu0 %390
        %v392 = vsub.f32 %v388, %v391
        %v393 = vrsqrt.pop %v392
        %s394 = scalar_lea.vmem %s96, 8 [#allocation0]
        %v395 = vld [vmem:[%s394] sm:$0xff]
        %s396 = scalar_lea.vmem %s104, 8 [#allocation1]
        %v397 = vld [vmem:[%s396] sm:$0xff]
        %v398 = vmul.f32 %v397, %v386
        %399 = vadd.xlane.f32.xlu0 %v398
        %v400 = vpop.xlane.xlu0 %399
        %v401 = vsub.f32 %v395, %v400
        %v402 = vmul.f32 %v401, %v393
        %v403 = vsel %vm384, %v402, 0.0
        %v404 = vadd.f32 %v397, %v403
        %s405 = scalar_lea.vmem %s104, 8 [#allocation1]
        %406 = vst [vmem:[%s405] sm:$0xff] %v404
        %s407 = sand.u32 %s8, 1
        %s408 = sand.u32 %s8, 1
        %s409 = smul.addr %s408, 16
        %s410 = scalar_lea.vmem [#allocation1], %s409
        %s411 = sadd.s32 %s15, %s14
        %s412 = smul.addr %s13, 2
        %s413 = sadd.s32 %s411, %s412
        %s414 = smul.addr %s413, 8
        %s415 = scalar_lea.vmem %s1, %s414
        // Predicated region
        $region55: #{custom-call.13} parent=53 // pred_check
          _
        $region56: #{custom-call.13} parent=53 // pred_check_branch
          %417 = sbr.rel (0) target = $region58
        $region57: #{custom-call.13} parent=53 // pred_region
          // Predicated region
          $region59: #{custom-call.13} parent=57 // pred_check
            _
          $region60: #{custom-call.13} parent=57 // pred_check_branch
            %419 = sbr.rel (0) target = $region62
          $region61: #{custom-call.13} parent=57 // pred_region
            // Predicated region
            $region74: #{custom-call.13} parent=61 // pred_check
              _
            $region75: #{custom-call.13} parent=61 // pred_check_branch
              %436 = sbr.rel (0) target = $region77
            $region76: #{custom-call.13} parent=61 // pred_region
              loop: start=0, step=1, limit=1
              $region78: #{custom-call.13} parent=76 // loop_pre_header
                _
              $region79: #{custom-call.13} parent=76 // loop_header
                %s438 = sphi 0, %s442
                %p439 = scmp.ge.s32.totalorder %s438, 1
                %s443 = sphi %s410, %s410
                %s444 = sphi %s415, %s415
              $region80: #{custom-call.13} parent=76 // loop_header_branch
                %441 = sbr.rel (%p439) target = $region84
              $region81: #{custom-call.13} parent=76 // loop_body
                %v445 = vld [vmem:[%s443] sm:$0xff]
                %446 = vst [vmem:[%s444] sm:$0xff] %v445
                %v447 = vld [vmem:[%s443 + $0x8] sm:$0xff]
                %448 = vst [vmem:[%s444 + $0x8] sm:$0xff] %v447
              $region82: #{custom-call.13} parent=76 // loop_footer
                %s442 = sadd.s32 1, %s438
              $region83: #{custom-call.13} parent=76 // loop_footer_branch
                %437 = sbr.rel target = $region79
              $region84: #{custom-call.13} parent=76 // loop_exit
                _
            $region77: #{custom-call.13} parent=61 // pred_fallthru
              _
            // Predicated region
            $region85: #{custom-call.13} parent=61 // pred_check
              _
            $region86: #{custom-call.13} parent=61 // pred_check_branch
              %450 = sbr.rel target = $region88
            $region87: #{custom-call.13} parent=61 // pred_region
              _
            $region88: #{custom-call.13} parent=61 // pred_fallthru
              _
          $region62: #{custom-call.13} parent=57 // pred_fallthru
            _
          // Predicated region
          $region63: #{custom-call.13} parent=57 // pred_check
            _
          $region64: #{custom-call.13} parent=57 // pred_check_branch
            %421 = sbr.rel target = $region66
          $region65: #{custom-call.13} parent=57 // pred_region
            loop: start=0, step=1, limit=1
            $region67: #{custom-call.13} parent=65 // loop_pre_header
              _
            $region68: #{custom-call.13} parent=65 // loop_header
              %s424 = sphi 0, %s428
              %p425 = scmp.ge.s32.totalorder %s424, 1
              %s429 = sphi %s410, %s410
              %s430 = sphi %s415, %s415
            $region69: #{custom-call.13} parent=65 // loop_header_branch
              %427 = sbr.rel (%p425) target = $region73
            $region70: #{custom-call.13} parent=65 // loop_body
              %v431 = vld [vmem:[%s429] sm:$0xff]
              %432 = vst [vmem:[%s430] sm:$0xff] %v431
              %v433 = vld [vmem:[%s429 + $0x8] sm:$0xff]
              %434 = vst [vmem:[%s430 + $0x8] sm:$0xff] %v433
            $region71: #{custom-call.13} parent=65 // loop_footer
              %s428 = sadd.s32 1, %s424
            $region72: #{custom-call.13} parent=65 // loop_footer_branch
              %423 = sbr.rel target = $region68
            $region73: #{custom-call.13} parent=65 // loop_exit
              _
          $region66: #{custom-call.13} parent=57 // pred_fallthru
            _
        $region58: #{custom-call.13} parent=53 // pred_fallthru
          _
        %451 = vnop
      $region54: #{custom-call.13} parent=5 // pred_fallthru
        _
      %p452 = scmp.le.s32.totalorder 2, %s3
      // Predicated region
      $region89: #{custom-call.13} parent=5 // pred_check
        %p453 = pneg %p452
      $region90: #{custom-call.13} parent=5 // pred_check_branch
        %455 = sbr.rel (%p453) target = $region92
      $region91: #{custom-call.13} parent=5 // pred_region
        %s456 = ssub.s32 %s3, 2
        %s457 = sand.u32 %s9, 1
        %s458 = sand.u32 %s9, 1
        %s459 = smul.addr %s458, 16
        %s460 = scalar_lea.vmem [#allocation1], %s459
      $region92: #{custom-call.13} parent=5 // pred_fallthru
        _
    $region6: #{custom-call.13} parent=1 // loop_footer
      %s7 = sadd.s32 1, %s3
    $region7: #{custom-call.13} parent=1 // loop_footer_branch
      %2 = sbr.rel target = $region3
    $region8: #{custom-call.13} parent=1 // loop_exit
      _

</llo_original>
